<compile_context>
chip_gen: v7x
topology: tpu7x:2x2x1
jax: 0.10.0
libtpu: 0.0.40
codegen_flags: <defaults>
</compile_context>

<pallas_src>
import functools

import jax
import jax.numpy as jnp
from jax.experimental import pallas as pl
from jax.experimental.pallas import tpu as pltpu

EPS = 1e-3                       # BatchNorm3d eps in the PyTorch module
VMEM_LIMIT = 32 * 1024 * 1024    # scoped VMEM; raises the 16 MiB default on v5e


def _pick_tm(m):
    """Largest row tile dividing M, preferring >=2 grid steps (keeps both v7x TCs fed)."""
    cands = (1024, 512, 256, 128, 64, 32, 16, 8)
    for tm in cands:
        if m % tm == 0 and m // tm >= 2:
            return tm
    for tm in cands:
        if m % tm == 0:
            return tm
    # TODO(synk): masked remainder tiles for M not divisible by 8.
    raise ValueError(f"M={m} must be a multiple of 8")


# ---------------- K1: fused 1x1 conv (b0|b1a|b2a) + BN partial stats ----------------

def _fused1x1_kernel(x_ref, w_ref, y0_ref, y1_ref, y2_ref, st_ref, *, c0, c1):
    y = jnp.dot(x_ref[...], w_ref[...], preferred_element_type=jnp.float32)  # (TM, Ctot)
    y0_ref[...] = y[:, :c0]
    y1_ref[...] = y[:, c0:c0 + c1]
    y2_ref[...] = y[:, c0 + c1:]
    rows = y.shape[0]
    mean_t = jnp.sum(y, axis=0, keepdims=True) * (1.0 / rows)                # (1, C)
    m2_t = jnp.sum(jnp.square(y - mean_t), axis=0, keepdims=True)            # (1, C)
    st_ref[...] = jnp.concatenate([mean_t, m2_t], axis=0)[None]              # (1, 2, C)


def _fused_1x1_conv(x2d, w_cat, splits):
    m, k = x2d.shape
    c_tot = w_cat.shape[1]
    c0, c1, c3 = splits
    tm = _pick_tm(m)
    g = m // tm
    y0, y1, y2, stats = pl.pallas_call(
        functools.partial(_fused1x1_kernel, c0=c0, c1=c1),
        out_shape=(
            jax.ShapeDtypeStruct((m, c0), jnp.float32),
            jax.ShapeDtypeStruct((m, c1), jnp.float32),
            jax.ShapeDtypeStruct((m, c3), jnp.float32),
            jax.ShapeDtypeStruct((g, 2, c_tot), jnp.float32),
        ),
        grid_spec=pltpu.PrefetchScalarGridSpec(
            num_scalar_prefetch=0,
            grid=(g,),
            in_specs=[
                pl.BlockSpec((tm, k), lambda i: (i, 0)),
                pl.BlockSpec((k, c_tot), lambda i: (0, 0)),
            ],
            out_specs=[
                pl.BlockSpec((tm, c0), lambda i: (i, 0)),
                pl.BlockSpec((tm, c1), lambda i: (i, 0)),
                pl.BlockSpec((tm, c3), lambda i: (i, 0)),
                pl.BlockSpec((1, 2, c_tot), lambda i: (i, 0, 0)),
            ],
        ),
        compiler_params=pltpu.CompilerParams(
            dimension_semantics=("parallel",), vmem_limit_bytes=VMEM_LIMIT),
    )(x2d, w_cat)
    return y0, y1, y2, stats, tm


# ---------------- K2: BN (train stats) + ReLU apply --------------------------------

def _bn_relu_kernel(y_ref, s_ref, b_ref, o_ref):
    o_ref[...] = jnp.maximum(y_ref[...] * s_ref[...] + b_ref[...], 0.0)


def _bn_relu(y2d, scale, bias):
    m, c = y2d.shape
    tm = _pick_tm(m)
    return pl.pallas_call(
        _bn_relu_kernel,
        out_shape=jax.ShapeDtypeStruct((m, c), jnp.float32),
        grid_spec=pltpu.PrefetchScalarGridSpec(
            num_scalar_prefetch=0,
            grid=(m // tm,),
            in_specs=[
                pl.BlockSpec((tm, c), lambda i: (i, 0)),
                pl.BlockSpec((1, c), lambda i: (0, 0)),
                pl.BlockSpec((1, c), lambda i: (0, 0)),
            ],
            out_specs=pl.BlockSpec((tm, c), lambda i: (i, 0)),
        ),
        compiler_params=pltpu.CompilerParams(
            dimension_semantics=("parallel",), vmem_limit_bytes=VMEM_LIMIT),
    )(y2d, scale.reshape(1, c), bias.reshape(1, c))


# ---------------- K3: 3x3x3 conv as temporal-tap reduction (no im2col) -------------

def _conv3x3_kernel(xp_ref, w_ref, y_ref, st_ref, *, hh, ww):
    kt = pl.program_id(2)
    xp = xp_ref[0, 0]                                   # (H+2, W+2, Cin)
    cout = w_ref.shape[-1]
    acc = jnp.zeros((hh * ww, cout), jnp.float32)
    for s in range(9):                                  # 9 spatial taps, unrolled
        kh, kw = s // 3, s % 3
        lhs = xp[kh:kh + hh, kw:kw + ww, :].reshape(hh * ww, -1)
        acc = acc + jnp.dot(lhs, w_ref[0, s], preferred_element_type=jnp.float32)
    acc = acc.reshape(y_ref.shape)

    @pl.when(kt == 0)
    def _():
        y_ref[...] = acc

    @pl.when(kt > 0)
    def _():
        y_ref[...] = y_ref[...] + acc

    @pl.when(kt == pl.num_programs(2) - 1)
    def _():
        y = y_ref[...].reshape(hh * ww, cout)
        mean_t = jnp.sum(y, axis=0, keepdims=True) * (1.0 / (hh * ww))
        m2_t = jnp.sum(jnp.square(y - mean_t), axis=0, keepdims=True)
        st_ref[...] = jnp.concatenate([mean_t, m2_t], axis=0)[None, None]


def _conv3x3(xp, w3, n, t, hh, ww):
    cin = xp.shape[-1]
    cout = w3.shape[-1]
    return pl.pallas_call(
        functools.partial(_conv3x3_kernel, hh=hh, ww=ww),
        out_shape=(
            jax.ShapeDtypeStruct((n, t, hh, ww, cout), jnp.float32),
            jax.ShapeDtypeStruct((n, t, 2, cout), jnp.float32),
        ),
        grid_spec=pltpu.PrefetchScalarGridSpec(
            num_scalar_prefetch=0,
            grid=(n, t, 3),
            in_specs=[
                pl.BlockSpec((1, 1, hh + 2, ww + 2, cin),
                             lambda ni, ti, kt: (ni, ti + kt, 0, 0, 0)),
                pl.BlockSpec((1, 9, cin, cout),
                             lambda ni, ti, kt: (kt, 0, 0, 0)),
            ],
            out_specs=[
                pl.BlockSpec((1, 1, hh, ww, cout),
                             lambda ni, ti, kt: (ni, ti, 0, 0, 0)),
                pl.BlockSpec((1, 1, 2, cout),
                             lambda ni, ti, kt: (ni, ti, 0, 0)),
            ],
        ),
        compiler_params=pltpu.CompilerParams(
            dimension_semantics=("parallel", "parallel", "arbitrary"),
            vmem_limit_bytes=VMEM_LIMIT),
    )(xp, w3)


# ---------------- K4: fused 'same' max-pool + b3b 1x1 conv + stats -----------------

def _pool_conv_kernel(xp_ref, w_ref, y_ref, st_ref, pool_ref, *, hh, ww):
    kt = pl.program_id(2)
    xp = xp_ref[0, 0]                                   # (H+2, W+2, Cin), zero-padded x
    mx = xp[0:hh, 0:ww, :]
    for s in range(1, 9):
        kh, kw = s // 3, s % 3
        mx = jnp.maximum(mx, xp[kh:kh + hh, kw:kw + ww, :])

    @pl.when(kt == 0)
    def _():
        pool_ref[...] = mx

    @pl.when(kt > 0)
    def _():
        pool_ref[...] = jnp.maximum(pool_ref[...], mx)

    @pl.when(kt == pl.num_programs(2) - 1)
    def _():
        pooled = pool_ref[...].reshape(hh * ww, -1)
        y = jnp.dot(pooled, w_ref[...], preferred_element_type=jnp.float32)
        y_ref[...] = y.reshape(y_ref.shape)
        mean_t = jnp.sum(y, axis=0, keepdims=True) * (1.0 / (hh * ww))
        m2_t = jnp.sum(jnp.square(y - mean_t), axis=0, keepdims=True)
        st_ref[...] = jnp.concatenate([mean_t, m2_t], axis=0)[None, None]


def _maxpool_conv1x1(xp, w, n, t, hh, ww):
    cin = xp.shape[-1]
    cout = w.shape[-1]
    return pl.pallas_call(
        functools.partial(_pool_conv_kernel, hh=hh, ww=ww),
        out_shape=(
            jax.ShapeDtypeStruct((n, t, hh, ww, cout), jnp.float32),
            jax.ShapeDtypeStruct((n, t, 2, cout), jnp.float32),
        ),
        grid_spec=pltpu.PrefetchScalarGridSpec(
            num_scalar_prefetch=0,
            grid=(n, t, 3),
            in_specs=[
                pl.BlockSpec((1, 1, hh + 2, ww + 2, cin),
                             lambda ni, ti, kt: (ni, ti + kt, 0, 0, 0)),
                pl.BlockSpec((cin, cout), lambda ni, ti, kt: (0, 0)),
            ],
            out_specs=[
                pl.BlockSpec((1, 1, hh, ww, cout),
                             lambda ni, ti, kt: (ni, ti, 0, 0, 0)),
                pl.BlockSpec((1, 1, 2, cout),
                             lambda ni, ti, kt: (ni, ti, 0, 0)),
            ],
            scratch_shapes=[pltpu.VMEM((hh, ww, cin), jnp.float32)],
        ),
        compiler_params=pltpu.CompilerParams(
            dimension_semantics=("parallel", "parallel", "arbitrary"),
            vmem_limit_bytes=VMEM_LIMIT),
    )(xp, w)


# ---------------- K5: fused BN + ReLU + channel concat -----------------------------

def _concat_bn_relu_kernel(y0_ref, y1_ref, y2_ref, y3_ref, s_ref, b_ref, o_ref):
    y = jnp.concatenate(
        [y0_ref[...], y1_ref[...], y2_ref[...], y3_ref[...]], axis=-1)
    o_ref[...] = jnp.maximum(y * s_ref[...] + b_ref[...], 0.0)


def _concat_bn_relu(y0, y1, y2, y3, scale, bias):
    m = y0.shape[0]
    c_tot = int(scale.shape[0])
    tm = _pick_tm(m)
    return pl.pallas_call(
        _concat_bn_relu_kernel,
        out_shape=jax.ShapeDtypeStruct((m, c_tot), jnp.float32),
        grid_spec=pltpu.PrefetchScalarGridSpec(
            num_scalar_prefetch=0,
            grid=(m // tm,),
            in_specs=[
                pl.BlockSpec((tm, y0.shape[1]), lambda i: (i, 0)),
                pl.BlockSpec((tm, y1.shape[1]), lambda i: (i, 0)),
                pl.BlockSpec((tm, y2.shape[1]), lambda i: (i, 0)),
                pl.BlockSpec((tm, y3.shape[1]), lambda i: (i, 0)),
                pl.BlockSpec((1, c_tot), lambda i: (0, 0)),
                pl.BlockSpec((1, c_tot), lambda i: (0, 0)),
            ],
            out_specs=pl.BlockSpec((tm, c_tot), lambda i: (i, 0)),
        ),
        compiler_params=pltpu.CompilerParams(
            dimension_semantics=("parallel",), vmem_limit_bytes=VMEM_LIMIT),
    )(y0, y1, y2, y3, scale.reshape(1, c_tot), bias.reshape(1, c_tot))


# ---------------- glue: BN stat combine (Chan parallel formula) ---------------------

def _bn_scale_bias(stats, rows_per_tile, total_rows, gamma, beta):
    """Per-tile (mean, M2) partials -> train-mode (biased-var) BN scale / bias."""
    means = stats[:, 0, :]
    m2s = stats[:, 1, :]
    mean = jnp.mean(means, axis=0)
    m2 = jnp.sum(m2s, axis=0) + rows_per_tile * jnp.sum(
        jnp.square(means - mean[None, :]), axis=0)
    var = m2 / total_rows                                 # biased, as BN uses in training
    scale = gamma * jax.lax.rsqrt(var + EPS)
    bias = beta - mean * scale
    return scale, bias


# ---------------- Inception module forward ------------------------------------------

def inception_forward(x_ncdhw, params):
    """MemoryEfficientInceptionModule.forward. Input/output layout: NCDHW."""
    n, cin, t, h, w = x_ncdhw.shape
    m = n * t * h * w
    x = jnp.transpose(x_ncdhw, (0, 2, 3, 4, 1))           # NDHWC (channels-last)
    x2d = x.reshape(m, cin)

    w0, g0, be0 = params["b0"]
    w1a, g1a, be1a = params["b1a"]
    w1b, g1b, be1b = params["b1b"]
    w2a, g2a, be2a = params["b2a"]
    w2b, g2b, be2b = params["b2b"]
    w3b, g3b, be3b = params["b3b"]
    c0, c1, c3 = w0.shape[1], w1a.shape[1], w2a.shape[1]
    c2, c4, c5 = w1b.shape[-1], w2b.shape[-1], w3b.shape[1]

    # b0 | b1a | b2a read the same x -> one fused GEMM + fused BN partial stats.
    w_cat = jnp.concatenate([w0, w1a, w2a], axis=1)
    y0, y1a, y2a, st_f, tm = _fused_1x1_conv(x2d, w_cat, (c0, c1, c3))
    s_cat, i_cat = _bn_scale_bias(st_f, tm, m,
                                  jnp.concatenate([g0, g1a, g2a]),
                                  jnp.concatenate([be0, be1a, be2a]))
    s0, s1a, s2a = s_cat[:c0], s_cat[c0:c0 + c1], s_cat[c0 + c1:]
    i0, i1a, i2a = i_cat[:c0], i_cat[c0:c0 + c1], i_cat[c0 + c1:]

    # 3x3x3 branches: BN+ReLU the 1x1 output, zero 'same' pad, temporal-tap conv.
    # TODO(synk): fold this BN+ReLU and the zero pad into the 3x3 kernel via edge masks
    # to drop one write+read of each intermediate activation.
    def branch_3x3(y_a, s_a, i_a, w_b, g_b, be_b):
        a = _bn_relu(y_a, s_a, i_a)                               # (M, Ca)
        ca = a.shape[1]
        cb = w_b.shape[-1]
        ap = jnp.pad(a.reshape(n, t, h, w, ca),
                     ((0, 0), (1, 1), (1, 1), (1, 1), (0, 0)))    # zero 'same' padding
        yb, st_b = _conv3x3(ap, w_b.reshape(3, 9, ca, cb), n, t, h, w)
        s_b, i_b = _bn_scale_bias(st_b.reshape(n * t, 2, cb), h * w, m, g_b, be_b)
        return yb.reshape(m, cb), s_b, i_b

    y1, s1, i1 = branch_3x3(y1a, s1a, i1a, w1b, g1b, be1b)
    y2, s2, i2 = branch_3x3(y2a, s2a, i2a, w2b, g2b, be2b)

    # Pool branch: zero-pad x (like F.pad), fused max-pool + b3b 1x1 conv + stats.
    xp = jnp.pad(x, ((0, 0), (1, 1), (1, 1), (1, 1), (0, 0)))
    y3, st_3 = _maxpool_conv1x1(xp, w3b, n, t, h, w)
    s3, i3 = _bn_scale_bias(st_3.reshape(n * t, 2, c5), h * w, m, g3b, be3b)
    y3 = y3.reshape(m, c5)

    # Fused BN + ReLU + concat, channel order [b0, b1, b2, b3] (== torch.cat(dim=1)).
    scale_all = jnp.concatenate([s0, s1, s2, s3])
    bias_all = jnp.concatenate([i0, i1, i2, i3])
    out2d = _concat_bn_relu(y0, y1, y2, y3, scale_all, bias_all)

    out = out2d.reshape(n, t, h, w, c0 + c2 + c4 + c5)
    return jnp.transpose(out, (0, 4, 1, 2, 3))                    # back to NCDHW


def init_params(key, in_channels, out_channels):
    """Deterministic synthetic parameters (Conv3d has no bias; BN weight=1, bias=0)."""
    ks = jax.random.split(key, 6)

    def conv1x1(k, cin, cout):
        wt = jax.random.normal(k, (cin, cout), jnp.float32) * 0.1
        return (wt, jnp.ones((cout,), jnp.float32), jnp.zeros((cout,), jnp.float32))

    def conv3x3(k, cin, cout):
        wt = jax.random.normal(k, (3, 3, 3, cin, cout), jnp.float32) * 0.05
        return (wt, jnp.ones((cout,), jnp.float32), jnp.zeros((cout,), jnp.float32))

    return {
        "b0":  conv1x1(ks[0], in_channels, out_channels[0]),
        "b1a": conv1x1(ks[1], in_channels, out_channels[1]),
        "b1b": conv3x3(ks[2], out_channels[1], out_channels[2]),
        "b2a": conv1x1(ks[3], in_channels, out_channels[3]),
        "b2b": conv3x3(ks[4], out_channels[3], out_channels[4]),
        "b3b": conv1x1(ks[5], in_channels, out_channels[5]),
    }


if __name__ == "__main__":
    key = jax.random.PRNGKey(0)
    kx, kp = jax.random.split(key)

    # Small shapes: N=2, Cin=16, T=4, H=W=8  (M = N*T*H*W = 512)
    N, Cin, T, H, W = 2, 16, 4, 8, 8
    out_channels = [8, 8, 16, 8, 16, 8]   # [b0, b1a, b1b, b2a, b2b, b3b]

    x = jax.random.normal(kx, (N, Cin, T, H, W), jnp.float32)
    params = init_params(kp, Cin, out_channels)

    fwd = jax.jit(inception_forward)
    y = fwd(x, params)
    jax.block_until_ready(y)

    expected_c = out_channels[0] + out_channels[2] + out_channels[4] + out_channels[5]
    assert y.shape == (N, expected_c, T, H, W), y.shape
    assert y.dtype == jnp.float32
    assert bool(jnp.all(jnp.isfinite(y)))
    print("KERNEL_OK")
</pallas_src>

<mosaic_0001>
module attributes {stable_mosaic.version = 11 : i64} {
  func.func @_fused1x1_kernel(%arg0: i32, %arg1: memref<256x16xf32, #tpu.memory_space<vmem>>, %arg2: memref<16x24xf32, #tpu.memory_space<vmem>>, %arg3: memref<256x8xf32, #tpu.memory_space<vmem>>, %arg4: memref<256x8xf32, #tpu.memory_space<vmem>>, %arg5: memref<256x8xf32, #tpu.memory_space<vmem>>, %arg6: memref<1x2x24xf32, #tpu.memory_space<vmem>>) attributes {dimension_semantics = [#tpu.dimension_semantics<parallel>], iteration_bounds = array<i64: 2>, scalar_prefetch = 0 : i64, scratch_operands = 0 : i64, tpu.core_type = #tpu.core_type<tc>, window_params = [{transform_indices = @transform_0, window_bounds = array<i64: 256, 16>}, {pipeline_mode = #tpu.pipeline_mode<synchronous>, transform_indices = @transform_1, window_bounds = array<i64: 16, 24>}, {transform_indices = @transform_2, window_bounds = array<i64: 256, 8>}, {transform_indices = @transform_3, window_bounds = array<i64: 256, 8>}, {transform_indices = @transform_4, window_bounds = array<i64: 256, 8>}, {transform_indices = @transform_5, window_bounds = array<i64: 1, 2, 24>}]} {
    %c0 = arith.constant 0 : index
    %c0_0 = arith.constant 0 : index
    %0 = vector.load %arg1[%c0, %c0_0] : memref<256x16xf32, #tpu.memory_space<vmem>>, vector<256x16xf32>
    %c0_1 = arith.constant 0 : index
    %c0_2 = arith.constant 0 : index
    %1 = vector.load %arg2[%c0_1, %c0_2] : memref<16x24xf32, #tpu.memory_space<vmem>>, vector<16x24xf32>
    %cst = arith.constant dense<0.000000e+00> : vector<256x24xf32>
    %2 = tpu.matmul %0, %1, %cst {dimension_numbers = #tpu.dot_dimension_numbers<[1], [0], [0], [1], [0, 0, 1, 1], [], []>} : vector<256x16xf32>, vector<16x24xf32>, vector<256x24xf32> -> vector<256x24xf32>
    %3 = vector.extract_strided_slice %2 {offsets = [0, 0], sizes = [256, 8], strides = [1, 1]} : vector<256x24xf32> to vector<256x8xf32>
    %c0_3 = arith.constant 0 : index
    %c0_4 = arith.constant 0 : index
    %4 = vector.load %arg3[%c0_3, %c0_4] : memref<256x8xf32, #tpu.memory_space<vmem>>, vector<256x8xf32>
    tpu.vector_store %arg3[%c0_3, %c0_4], %3 {strides = array<i32>} : memref<256x8xf32, #tpu.memory_space<vmem>>, vector<256x8xf32>,
    %5 = vector.extract_strided_slice %2 {offsets = [0, 8], sizes = [256, 8], strides = [1, 1]} : vector<256x24xf32> to vector<256x8xf32>
    %c0_5 = arith.constant 0 : index
    %c0_6 = arith.constant 0 : index
    %6 = vector.load %arg4[%c0_5, %c0_6] : memref<256x8xf32, #tpu.memory_space<vmem>>, vector<256x8xf32>
    tpu.vector_store %arg4[%c0_5, %c0_6], %5 {strides = array<i32>} : memref<256x8xf32, #tpu.memory_space<vmem>>, vector<256x8xf32>,
    %7 = vector.extract_strided_slice %2 {offsets = [0, 16], sizes = [256, 8], strides = [1, 1]} : vector<256x24xf32> to vector<256x8xf32>
    %c0_7 = arith.constant 0 : index
    %c0_8 = arith.constant 0 : index
    %8 = vector.load %arg5[%c0_7, %c0_8] : memref<256x8xf32, #tpu.memory_space<vmem>>, vector<256x8xf32>
    tpu.vector_store %arg5[%c0_7, %c0_8], %7 {strides = array<i32>} : memref<256x8xf32, #tpu.memory_space<vmem>>, vector<256x8xf32>,
    %cst_9 = arith.constant dense<0.000000e+00> : vector<24xf32>
    %9 = vector.multi_reduction <add>, %2, %cst_9 [0] : vector<256x24xf32> to vector<24xf32>
    %10 = vector.shape_cast %9 : vector<24xf32> to vector<1x24xf32>
    %cst_10 = arith.constant 3.906250e-03 : f32
    %11 = vector.broadcast %cst_10 : f32 to vector<1x24xf32>
    %12 = arith.mulf %10, %11 : vector<1x24xf32>
    %13 = vector.broadcast %12 : vector<1x24xf32> to vector<256x24xf32>
    %14 = arith.subf %2, %13 : vector<256x24xf32>
    %15 = arith.mulf %14, %14 : vector<256x24xf32>
    %cst_11 = arith.constant dense<0.000000e+00> : vector<24xf32>
    %16 = vector.multi_reduction <add>, %15, %cst_11 [0] : vector<256x24xf32> to vector<24xf32>
    %17 = vector.shape_cast %16 : vector<24xf32> to vector<1x24xf32>
    %18 = tpu.concatenate %12, %17 in 0 : vector<1x24xf32>, vector<1x24xf32> -> vector<2x24xf32>
    %19 = vector.shape_cast %18 : vector<2x24xf32> to vector<1x2x24xf32>
    %c0_12 = arith.constant 0 : index
    %c0_13 = arith.constant 0 : index
    %c0_14 = arith.constant 0 : index
    %20 = vector.load %arg6[%c0_12, %c0_13, %c0_14] : memref<1x2x24xf32, #tpu.memory_space<vmem>>, vector<1x2x24xf32>
    tpu.vector_store %arg6[%c0_12, %c0_13, %c0_14], %19 {strides = array<i32>} : memref<1x2x24xf32, #tpu.memory_space<vmem>>, vector<1x2x24xf32>,
    return
  }
  func.func @transform_0(%arg0: i32) -> (i32, i32) {
    %c0_i32 = arith.constant 0 : i32
    %c0_i32_0 = arith.constant 0 : i32
    return %arg0, %c0_i32 : i32, i32
  }
  func.func @transform_1(%arg0: i32) -> (i32, i32) {
    %c0_i32 = arith.constant 0 : i32
    %c0_i32_0 = arith.constant 0 : i32
    %c0_i32_1 = arith.constant 0 : i32
    return %c0_i32, %c0_i32_0 : i32, i32
  }
  func.func @transform_2(%arg0: i32) -> (i32, i32) {
    %c0_i32 = arith.constant 0 : i32
    %c0_i32_0 = arith.constant 0 : i32
    return %arg0, %c0_i32 : i32, i32
  }
  func.func @transform_3(%arg0: i32) -> (i32, i32) {
    %c0_i32 = arith.constant 0 : i32
    %c0_i32_0 = arith.constant 0 : i32
    return %arg0, %c0_i32 : i32, i32
  }
  func.func @transform_4(%arg0: i32) -> (i32, i32) {
    %c0_i32 = arith.constant 0 : i32
    %c0_i32_0 = arith.constant 0 : i32
    return %arg0, %c0_i32 : i32, i32
  }
  func.func @transform_5(%arg0: i32) -> (i32, i32, i32) {
    %c0_i32 = arith.constant 0 : i32
    %c0_i32_0 = arith.constant 0 : i32
    %c0_i32_1 = arith.constant 0 : i32
    return %arg0, %c0_i32, %c0_i32_0 : i32, i32, i32
  }
}

module attributes {stable_mosaic.version = 11 : i64} {
  func.func @_bn_relu_kernel(%arg0: i32, %arg1: memref<256x8xf32, #tpu.memory_space<vmem>>, %arg2: memref<1x8xf32, #tpu.memory_space<vmem>>, %arg3: memref<1x8xf32, #tpu.memory_space<vmem>>, %arg4: memref<256x8xf32, #tpu.memory_space<vmem>>) attributes {dimension_semantics = [#tpu.dimension_semantics<parallel>], iteration_bounds = array<i64: 2>, scalar_prefetch = 0 : i64, scratch_operands = 0 : i64, tpu.core_type = #tpu.core_type<tc>, window_params = [{transform_indices = @transform_0, window_bounds = array<i64: 256, 8>}, {pipeline_mode = #tpu.pipeline_mode<synchronous>, transform_indices = @transform_1, window_bounds = array<i64: 1, 8>}, {pipeline_mode = #tpu.pipeline_mode<synchronous>, transform_indices = @transform_2, window_bounds = array<i64: 1, 8>}, {transform_indices = @transform_3, window_bounds = array<i64: 256, 8>}]} {
    %c0 = arith.constant 0 : index
    %c0_0 = arith.constant 0 : index
    %0 = vector.load %arg1[%c0, %c0_0] : memref<256x8xf32, #tpu.memory_space<vmem>>, vector<256x8xf32>
    %c0_1 = arith.constant 0 : index
    %c0_2 = arith.constant 0 : index
    %1 = vector.load %arg2[%c0_1, %c0_2] : memref<1x8xf32, #tpu.memory_space<vmem>>, vector<1x8xf32>
    %2 = vector.broadcast %1 : vector<1x8xf32> to vector<256x8xf32>
    %3 = arith.mulf %0, %2 : vector<256x8xf32>
    %c0_3 = arith.constant 0 : index
    %c0_4 = arith.constant 0 : index
    %4 = vector.load %arg3[%c0_3, %c0_4] : memref<1x8xf32, #tpu.memory_space<vmem>>, vector<1x8xf32>
    %5 = vector.broadcast %4 : vector<1x8xf32> to vector<256x8xf32>
    %6 = arith.addf %3, %5 : vector<256x8xf32>
    %cst = arith.constant 0.000000e+00 : f32
    %7 = vector.broadcast %cst : f32 to vector<256x8xf32>
    %8 = arith.maximumf %6, %7 : vector<256x8xf32>
    %c0_5 = arith.constant 0 : index
    %c0_6 = arith.constant 0 : index
    %9 = vector.load %arg4[%c0_5, %c0_6] : memref<256x8xf32, #tpu.memory_space<vmem>>, vector<256x8xf32>
    tpu.vector_store %arg4[%c0_5, %c0_6], %8 {strides = array<i32>} : memref<256x8xf32, #tpu.memory_space<vmem>>, vector<256x8xf32>,
    return
  }
  func.func @transform_0(%arg0: i32) -> (i32, i32) {
    %c0_i32 = arith.constant 0 : i32
    %c0_i32_0 = arith.constant 0 : i32
    return %arg0, %c0_i32 : i32, i32
  }
  func.func @transform_1(%arg0: i32) -> (i32, i32) {
    %c0_i32 = arith.constant 0 : i32
    %c0_i32_0 = arith.constant 0 : i32
    %c0_i32_1 = arith.constant 0 : i32
    return %c0_i32, %c0_i32_0 : i32, i32
  }
  func.func @transform_2(%arg0: i32) -> (i32, i32) {
    %c0_i32 = arith.constant 0 : i32
    %c0_i32_0 = arith.constant 0 : i32
    %c0_i32_1 = arith.constant 0 : i32
    return %c0_i32, %c0_i32_0 : i32, i32
  }
  func.func @transform_3(%arg0: i32) -> (i32, i32) {
    %c0_i32 = arith.constant 0 : i32
    %c0_i32_0 = arith.constant 0 : i32
    return %arg0, %c0_i32 : i32, i32
  }
}

module attributes {stable_mosaic.version = 11 : i64} {
  func.func @_conv3x3_kernel(%arg0: i32, %arg1: i32, %arg2: i32, %arg3: memref<1x1x10x10x8xf32, #tpu.memory_space<vmem>>, %arg4: memref<1x9x8x16xf32, #tpu.memory_space<vmem>>, %arg5: memref<1x1x8x8x16xf32, #tpu.memory_space<vmem>>, %arg6: memref<1x1x2x16xf32, #tpu.memory_space<vmem>>) attributes {dimension_semantics = [#tpu.dimension_semantics<parallel>, #tpu.dimension_semantics<parallel>, #tpu.dimension_semantics<arbitrary>], iteration_bounds = array<i64: 2, 4, 3>, scalar_prefetch = 0 : i64, scratch_operands = 0 : i64, tpu.core_type = #tpu.core_type<tc>, window_params = [{transform_indices = @transform_0, window_bounds = array<i64: 1, 1, 10, 10, 8>}, {transform_indices = @transform_1, window_bounds = array<i64: 1, 9, 8, 16>}, {transform_indices = @transform_2, window_bounds = array<i64: 1, 1, 8, 8, 16>}, {transform_indices = @transform_3, window_bounds = array<i64: 1, 1, 2, 16>}]} {
    %c0 = arith.constant 0 : index
    %c0_0 = arith.constant 0 : index
    %c0_1 = arith.constant 0 : index
    %c0_2 = arith.constant 0 : index
    %c0_3 = arith.constant 0 : index
    %0 = vector.load %arg3[%c0, %c0_0, %c0_1, %c0_2, %c0_3] : memref<1x1x10x10x8xf32, #tpu.memory_space<vmem>>, vector<1x1x10x10x8xf32>
    %1 = vector.shape_cast %0 : vector<1x1x10x10x8xf32> to vector<10x10x8xf32>
    %cst = arith.constant 0.000000e+00 : f32
    %2 = vector.broadcast %cst : f32 to vector<64x16xf32>
    %3 = vector.extract_strided_slice %1 {offsets = [0, 0, 0], sizes = [8, 8, 8], strides = [1, 1, 1]} : vector<10x10x8xf32> to vector<8x8x8xf32>
    %4 = vector.shape_cast %3 : vector<8x8x8xf32> to vector<64x8xf32>
    %c0_4 = arith.constant 0 : index
    %c0_5 = arith.constant 0 : index
    %c0_6 = arith.constant 0 : index
    %c0_7 = arith.constant 0 : index
    %5 = vector.load %arg4[%c0_4, %c0_5, %c0_6, %c0_7] : memref<1x9x8x16xf32, #tpu.memory_space<vmem>>, vector<1x1x8x16xf32>
    %6 = vector.shape_cast %5 : vector<1x1x8x16xf32> to vector<8x16xf32>
    %cst_8 = arith.constant dense<0.000000e+00> : vector<64x16xf32>
    %7 = tpu.matmul %4, %6, %cst_8 {dimension_numbers = #tpu.dot_dimension_numbers<[1], [0], [0], [1], [0, 0, 1, 1], [], []>} : vector<64x8xf32>, vector<8x16xf32>, vector<64x16xf32> -> vector<64x16xf32>
    %8 = arith.addf %2, %7 : vector<64x16xf32>
    %9 = vector.extract_strided_slice %1 {offsets = [0, 1, 0], sizes = [8, 8, 8], strides = [1, 1, 1]} : vector<10x10x8xf32> to vector<8x8x8xf32>
    %10 = vector.shape_cast %9 : vector<8x8x8xf32> to vector<64x8xf32>
    %c0_9 = arith.constant 0 : index
    %c1 = arith.constant 1 : index
    %c0_10 = arith.constant 0 : index
    %c0_11 = arith.constant 0 : index
    %11 = vector.load %arg4[%c0_9, %c1, %c0_10, %c0_11] : memref<1x9x8x16xf32, #tpu.memory_space<vmem>>, vector<1x1x8x16xf32>
    %12 = vector.shape_cast %11 : vector<1x1x8x16xf32> to vector<8x16xf32>
    %cst_12 = arith.constant dense<0.000000e+00> : vector<64x16xf32>
    %13 = tpu.matmul %10, %12, %cst_12 {dimension_numbers = #tpu.dot_dimension_numbers<[1], [0], [0], [1], [0, 0, 1, 1], [], []>} : vector<64x8xf32>, vector<8x16xf32>, vector<64x16xf32> -> vector<64x16xf32>
    %14 = arith.addf %8, %13 : vector<64x16xf32>
    %15 = vector.extract_strided_slice %1 {offsets = [0, 2, 0], sizes = [8, 8, 8], strides = [1, 1, 1]} : vector<10x10x8xf32> to vector<8x8x8xf32>
    %16 = vector.shape_cast %15 : vector<8x8x8xf32> to vector<64x8xf32>
    %c0_13 = arith.constant 0 : index
    %c2 = arith.constant 2 : index
    %c0_14 = arith.constant 0 : index
    %c0_15 = arith.constant 0 : index
    %17 = vector.load %arg4[%c0_13, %c2, %c0_14, %c0_15] : memref<1x9x8x16xf32, #tpu.memory_space<vmem>>, vector<1x1x8x16xf32>
    %18 = vector.shape_cast %17 : vector<1x1x8x16xf32> to vector<8x16xf32>
    %cst_16 = arith.constant dense<0.000000e+00> : vector<64x16xf32>
    %19 = tpu.matmul %16, %18, %cst_16 {dimension_numbers = #tpu.dot_dimension_numbers<[1], [0], [0], [1], [0, 0, 1, 1], [], []>} : vector<64x8xf32>, vector<8x16xf32>, vector<64x16xf32> -> vector<64x16xf32>
    %20 = arith.addf %14, %19 : vector<64x16xf32>
    %21 = vector.extract_strided_slice %1 {offsets = [1, 0, 0], sizes = [8, 8, 8], strides = [1, 1, 1]} : vector<10x10x8xf32> to vector<8x8x8xf32>
    %22 = vector.shape_cast %21 : vector<8x8x8xf32> to vector<64x8xf32>
    %c0_17 = arith.constant 0 : index
    %c3 = arith.constant 3 : index
    %c0_18 = arith.constant 0 : index
    %c0_19 = arith.constant 0 : index
    %23 = vector.load %arg4[%c0_17, %c3, %c0_18, %c0_19] : memref<1x9x8x16xf32, #tpu.memory_space<vmem>>, vector<1x1x8x16xf32>
    %24 = vector.shape_cast %23 : vector<1x1x8x16xf32> to vector<8x16xf32>
    %cst_20 = arith.constant dense<0.000000e+00> : vector<64x16xf32>
    %25 = tpu.matmul %22, %24, %cst_20 {dimension_numbers = #tpu.dot_dimension_numbers<[1], [0], [0], [1], [0, 0, 1, 1], [], []>} : vector<64x8xf32>, vector<8x16xf32>, vector<64x16xf32> -> vector<64x16xf32>
    %26 = arith.addf %20, %25 : vector<64x16xf32>
    %27 = vector.extract_strided_slice %1 {offsets = [1, 1, 0], sizes = [8, 8, 8], strides = [1, 1, 1]} : vector<10x10x8xf32> to vector<8x8x8xf32>
    %28 = vector.shape_cast %27 : vector<8x8x8xf32> to vector<64x8xf32>
    %c0_21 = arith.constant 0 : index
    %c4 = arith.constant 4 : index
    %c0_22 = arith.constant 0 : index
    %c0_23 = arith.constant 0 : index
    %29 = vector.load %arg4[%c0_21, %c4, %c0_22, %c0_23] : memref<1x9x8x16xf32, #tpu.memory_space<vmem>>, vector<1x1x8x16xf32>
    %30 = vector.shape_cast %29 : vector<1x1x8x16xf32> to vector<8x16xf32>
    %cst_24 = arith.constant dense<0.000000e+00> : vector<64x16xf32>
    %31 = tpu.matmul %28, %30, %cst_24 {dimension_numbers = #tpu.dot_dimension_numbers<[1], [0], [0], [1], [0, 0, 1, 1], [], []>} : vector<64x8xf32>, vector<8x16xf32>, vector<64x16xf32> -> vector<64x16xf32>
    %32 = arith.addf %26, %31 : vector<64x16xf32>
    %33 = vector.extract_strided_slice %1 {offsets = [1, 2, 0], sizes = [8, 8, 8], strides = [1, 1, 1]} : vector<10x10x8xf32> to vector<8x8x8xf32>
    %34 = vector.shape_cast %33 : vector<8x8x8xf32> to vector<64x8xf32>
    %c0_25 = arith.constant 0 : index
    %c5 = arith.constant 5 : index
    %c0_26 = arith.constant 0 : index
    %c0_27 = arith.constant 0 : index
    %35 = vector.load %arg4[%c0_25, %c5, %c0_26, %c0_27] : memref<1x9x8x16xf32, #tpu.memory_space<vmem>>, vector<1x1x8x16xf32>
    %36 = vector.shape_cast %35 : vector<1x1x8x16xf32> to vector<8x16xf32>
    %cst_28 = arith.constant dense<0.000000e+00> : vector<64x16xf32>
    %37 = tpu.matmul %34, %36, %cst_28 {dimension_numbers = #tpu.dot_dimension_numbers<[1], [0], [0], [1], [0, 0, 1, 1], [], []>} : vector<64x8xf32>, vector<8x16xf32>, vector<64x16xf32> -> vector<64x16xf32>
    %38 = arith.addf %32, %37 : vector<64x16xf32>
    %39 = vector.extract_strided_slice %1 {offsets = [2, 0, 0], sizes = [8, 8, 8], strides = [1, 1, 1]} : vector<10x10x8xf32> to vector<8x8x8xf32>
    %40 = vector.shape_cast %39 : vector<8x8x8xf32> to vector<64x8xf32>
    %c0_29 = arith.constant 0 : index
    %c6 = arith.constant 6 : index
    %c0_30 = arith.constant 0 : index
    %c0_31 = arith.constant 0 : index
    %41 = vector.load %arg4[%c0_29, %c6, %c0_30, %c0_31] : memref<1x9x8x16xf32, #tpu.memory_space<vmem>>, vector<1x1x8x16xf32>
    %42 = vector.shape_cast %41 : vector<1x1x8x16xf32> to vector<8x16xf32>
    %cst_32 = arith.constant dense<0.000000e+00> : vector<64x16xf32>
    %43 = tpu.matmul %40, %42, %cst_32 {dimension_numbers = #tpu.dot_dimension_numbers<[1], [0], [0], [1], [0, 0, 1, 1], [], []>} : vector<64x8xf32>, vector<8x16xf32>, vector<64x16xf32> -> vector<64x16xf32>
    %44 = arith.addf %38, %43 : vector<64x16xf32>
    %45 = vector.extract_strided_slice %1 {offsets = [2, 1, 0], sizes = [8, 8, 8], strides = [1, 1, 1]} : vector<10x10x8xf32> to vector<8x8x8xf32>
    %46 = vector.shape_cast %45 : vector<8x8x8xf32> to vector<64x8xf32>
    %c0_33 = arith.constant 0 : index
    %c7 = arith.constant 7 : index
    %c0_34 = arith.constant 0 : index
    %c0_35 = arith.constant 0 : index
    %47 = vector.load %arg4[%c0_33, %c7, %c0_34, %c0_35] : memref<1x9x8x16xf32, #tpu.memory_space<vmem>>, vector<1x1x8x16xf32>
    %48 = vector.shape_cast %47 : vector<1x1x8x16xf32> to vector<8x16xf32>
    %cst_36 = arith.constant dense<0.000000e+00> : vector<64x16xf32>
    %49 = tpu.matmul %46, %48, %cst_36 {dimension_numbers = #tpu.dot_dimension_numbers<[1], [0], [0], [1], [0, 0, 1, 1], [], []>} : vector<64x8xf32>, vector<8x16xf32>, vector<64x16xf32> -> vector<64x16xf32>
    %50 = arith.addf %44, %49 : vector<64x16xf32>
    %51 = vector.extract_strided_slice %1 {offsets = [2, 2, 0], sizes = [8, 8, 8], strides = [1, 1, 1]} : vector<10x10x8xf32> to vector<8x8x8xf32>
    %52 = vector.shape_cast %51 : vector<8x8x8xf32> to vector<64x8xf32>
    %c0_37 = arith.constant 0 : index
    %c8 = arith.constant 8 : index
    %c0_38 = arith.constant 0 : index
    %c0_39 = arith.constant 0 : index
    %53 = vector.load %arg4[%c0_37, %c8, %c0_38, %c0_39] : memref<1x9x8x16xf32, #tpu.memory_space<vmem>>, vector<1x1x8x16xf32>
    %54 = vector.shape_cast %53 : vector<1x1x8x16xf32> to vector<8x16xf32>
    %cst_40 = arith.constant dense<0.000000e+00> : vector<64x16xf32>
    %55 = tpu.matmul %52, %54, %cst_40 {dimension_numbers = #tpu.dot_dimension_numbers<[1], [0], [0], [1], [0, 0, 1, 1], [], []>} : vector<64x8xf32>, vector<8x16xf32>, vector<64x16xf32> -> vector<64x16xf32>
    %56 = arith.addf %50, %55 : vector<64x16xf32>
    %57 = vector.shape_cast %56 : vector<64x16xf32> to vector<1x1x8x8x16xf32>
    %c0_i32 = arith.constant 0 : i32
    %58 = arith.cmpi eq, %arg2, %c0_i32 : i32
    %59 = arith.extui %58 : i1 to i32
    %c0_i32_41 = arith.constant 0 : i32
    %60 = arith.cmpi ne, %59, %c0_i32_41 : i32
    scf.if %60 {
      %c0_45 = arith.constant 0 : index
      %c0_46 = arith.constant 0 : index
      %c0_47 = arith.constant 0 : index
      %c0_48 = arith.constant 0 : index
      %c0_49 = arith.constant 0 : index
      %67 = vector.load %arg5[%c0_45, %c0_46, %c0_47, %c0_48, %c0_49] : memref<1x1x8x8x16xf32, #tpu.memory_space<vmem>>, vector<1x1x8x8x16xf32>
      tpu.vector_store %arg5[%c0_45, %c0_46, %c0_47, %c0_48, %c0_49], %57 {strides = array<i32>} : memref<1x1x8x8x16xf32, #tpu.memory_space<vmem>>, vector<1x1x8x8x16xf32>,
    } else {
    }
    %c0_i32_42 = arith.constant 0 : i32
    %61 = arith.cmpi sgt, %arg2, %c0_i32_42 : i32
    %62 = arith.extui %61 : i1 to i32
    %c0_i32_43 = arith.constant 0 : i32
    %63 = arith.cmpi ne, %62, %c0_i32_43 : i32
    scf.if %63 {
      %c0_45 = arith.constant 0 : index
      %c0_46 = arith.constant 0 : index
      %c0_47 = arith.constant 0 : index
      %c0_48 = arith.constant 0 : index
      %c0_49 = arith.constant 0 : index
      %67 = vector.load %arg5[%c0_45, %c0_46, %c0_47, %c0_48, %c0_49] : memref<1x1x8x8x16xf32, #tpu.memory_space<vmem>>, vector<1x1x8x8x16xf32>
      %68 = arith.addf %67, %57 : vector<1x1x8x8x16xf32>
      %c0_50 = arith.constant 0 : index
      %c0_51 = arith.constant 0 : index
      %c0_52 = arith.constant 0 : index
      %c0_53 = arith.constant 0 : index
      %c0_54 = arith.constant 0 : index
      %69 = vector.load %arg5[%c0_50, %c0_51, %c0_52, %c0_53, %c0_54] : memref<1x1x8x8x16xf32, #tpu.memory_space<vmem>>, vector<1x1x8x8x16xf32>
      tpu.vector_store %arg5[%c0_50, %c0_51, %c0_52, %c0_53, %c0_54], %68 {strides = array<i32>} : memref<1x1x8x8x16xf32, #tpu.memory_space<vmem>>, vector<1x1x8x8x16xf32>,
    } else {
    }
    %c2_i32 = arith.constant 2 : i32
    %64 = arith.cmpi eq, %arg2, %c2_i32 : i32
    %65 = arith.extui %64 : i1 to i32
    %c0_i32_44 = arith.constant 0 : i32
    %66 = arith.cmpi ne, %65, %c0_i32_44 : i32
    scf.if %66 {
      %c0_45 = arith.constant 0 : index
      %c0_46 = arith.constant 0 : index
      %c0_47 = arith.constant 0 : index
      %c0_48 = arith.constant 0 : index
      %c0_49 = arith.constant 0 : index
      %67 = vector.load %arg5[%c0_45, %c0_46, %c0_47, %c0_48, %c0_49] : memref<1x1x8x8x16xf32, #tpu.memory_space<vmem>>, vector<1x1x8x8x16xf32>
      %68 = vector.shape_cast %67 : vector<1x1x8x8x16xf32> to vector<64x16xf32>
      %cst_50 = arith.constant dense<0.000000e+00> : vector<16xf32>
      %69 = vector.multi_reduction <add>, %68, %cst_50 [0] : vector<64x16xf32> to vector<16xf32>
      %70 = vector.shape_cast %69 : vector<16xf32> to vector<1x16xf32>
      %cst_51 = arith.constant 1.562500e-02 : f32
      %71 = vector.broadcast %cst_51 : f32 to vector<1x16xf32>
      %72 = arith.mulf %70, %71 : vector<1x16xf32>
      %73 = vector.broadcast %72 : vector<1x16xf32> to vector<64x16xf32>
      %74 = arith.subf %68, %73 : vector<64x16xf32>
      %75 = arith.mulf %74, %74 : vector<64x16xf32>
      %cst_52 = arith.constant dense<0.000000e+00> : vector<16xf32>
      %76 = vector.multi_reduction <add>, %75, %cst_52 [0] : vector<64x16xf32> to vector<16xf32>
      %77 = vector.shape_cast %76 : vector<16xf32> to vector<1x16xf32>
      %78 = tpu.concatenate %72, %77 in 0 : vector<1x16xf32>, vector<1x16xf32> -> vector<2x16xf32>
      %79 = vector.shape_cast %78 : vector<2x16xf32> to vector<1x1x2x16xf32>
      %c0_53 = arith.constant 0 : index
      %c0_54 = arith.constant 0 : index
      %c0_55 = arith.constant 0 : index
      %c0_56 = arith.constant 0 : index
      %80 = vector.load %arg6[%c0_53, %c0_54, %c0_55, %c0_56] : memref<1x1x2x16xf32, #tpu.memory_space<vmem>>, vector<1x1x2x16xf32>
      tpu.vector_store %arg6[%c0_53, %c0_54, %c0_55, %c0_56], %79 {strides = array<i32>} : memref<1x1x2x16xf32, #tpu.memory_space<vmem>>, vector<1x1x2x16xf32>,
    } else {
    }
    return
  }
  func.func @transform_0(%arg0: i32, %arg1: i32, %arg2: i32) -> (i32, i32, i32, i32, i32) {
    %0 = arith.addi %arg1, %arg2 : i32
    %c0_i32 = arith.constant 0 : i32
    %c0_i32_0 = arith.constant 0 : i32
    %c0_i32_1 = arith.constant 0 : i32
    %c0_i32_2 = arith.constant 0 : i32
    return %arg0, %0, %c0_i32, %c0_i32_0, %c0_i32_1 : i32, i32, i32, i32, i32
  }
  func.func @transform_1(%arg0: i32, %arg1: i32, %arg2: i32) -> (i32, i32, i32, i32) {
    %c0_i32 = arith.constant 0 : i32
    %c0_i32_0 = arith.constant 0 : i32
    %c0_i32_1 = arith.constant 0 : i32
    %c0_i32_2 = arith.constant 0 : i32
    return %arg2, %c0_i32, %c0_i32_0, %c0_i32_1 : i32, i32, i32, i32
  }
  func.func @transform_2(%arg0: i32, %arg1: i32, %arg2: i32) -> (i32, i32, i32, i32, i32) {
    %c0_i32 = arith.constant 0 : i32
    %c0_i32_0 = arith.constant 0 : i32
    %c0_i32_1 = arith.constant 0 : i32
    %c0_i32_2 = arith.constant 0 : i32
    return %arg0, %arg1, %c0_i32, %c0_i32_0, %c0_i32_1 : i32, i32, i32, i32, i32
  }
  func.func @transform_3(%arg0: i32, %arg1: i32, %arg2: i32) -> (i32, i32, i32, i32) {
    %c0_i32 = arith.constant 0 : i32
    %c0_i32_0 = arith.constant 0 : i32
    %c0_i32_1 = arith.constant 0 : i32
    return %arg0, %arg1, %c0_i32, %c0_i32_0 : i32, i32, i32, i32
  }
}

module attributes {stable_mosaic.version = 11 : i64} {
  func.func @_pool_conv_kernel(%arg0: i32, %arg1: i32, %arg2: i32, %arg3: memref<1x1x10x10x16xf32, #tpu.memory_space<vmem>>, %arg4: memref<16x8xf32, #tpu.memory_space<vmem>>, %arg5: memref<1x1x8x8x8xf32, #tpu.memory_space<vmem>>, %arg6: memref<1x1x2x8xf32, #tpu.memory_space<vmem>>, %arg7: memref<8x8x16xf32, #tpu.memory_space<vmem>>) attributes {dimension_semantics = [#tpu.dimension_semantics<parallel>, #tpu.dimension_semantics<parallel>, #tpu.dimension_semantics<arbitrary>], iteration_bounds = array<i64: 2, 4, 3>, scalar_prefetch = 0 : i64, scratch_operands = 1 : i64, tpu.core_type = #tpu.core_type<tc>, window_params = [{transform_indices = @transform_0, window_bounds = array<i64: 1, 1, 10, 10, 16>}, {pipeline_mode = #tpu.pipeline_mode<synchronous>, transform_indices = @transform_1, window_bounds = array<i64: 16, 8>}, {transform_indices = @transform_2, window_bounds = array<i64: 1, 1, 8, 8, 8>}, {transform_indices = @transform_3, window_bounds = array<i64: 1, 1, 2, 8>}]} {
    %c0 = arith.constant 0 : index
    %c0_0 = arith.constant 0 : index
    %c0_1 = arith.constant 0 : index
    %c0_2 = arith.constant 0 : index
    %c0_3 = arith.constant 0 : index
    %0 = vector.load %arg3[%c0, %c0_0, %c0_1, %c0_2, %c0_3] : memref<1x1x10x10x16xf32, #tpu.memory_space<vmem>>, vector<1x1x10x10x16xf32>
    %1 = vector.shape_cast %0 : vector<1x1x10x10x16xf32> to vector<10x10x16xf32>
    %2 = vector.extract_strided_slice %1 {offsets = [0, 0, 0], sizes = [8, 8, 16], strides = [1, 1, 1]} : vector<10x10x16xf32> to vector<8x8x16xf32>
    %3 = vector.extract_strided_slice %1 {offsets = [0, 1, 0], sizes = [8, 8, 16], strides = [1, 1, 1]} : vector<10x10x16xf32> to vector<8x8x16xf32>
    %4 = arith.maximumf %2, %3 : vector<8x8x16xf32>
    %5 = vector.extract_strided_slice %1 {offsets = [0, 2, 0], sizes = [8, 8, 16], strides = [1, 1, 1]} : vector<10x10x16xf32> to vector<8x8x16xf32>
    %6 = arith.maximumf %4, %5 : vector<8x8x16xf32>
    %7 = vector.extract_strided_slice %1 {offsets = [1, 0, 0], sizes = [8, 8, 16], strides = [1, 1, 1]} : vector<10x10x16xf32> to vector<8x8x16xf32>
    %8 = arith.maximumf %6, %7 : vector<8x8x16xf32>
    %9 = vector.extract_strided_slice %1 {offsets = [1, 1, 0], sizes = [8, 8, 16], strides = [1, 1, 1]} : vector<10x10x16xf32> to vector<8x8x16xf32>
    %10 = arith.maximumf %8, %9 : vector<8x8x16xf32>
    %11 = vector.extract_strided_slice %1 {offsets = [1, 2, 0], sizes = [8, 8, 16], strides = [1, 1, 1]} : vector<10x10x16xf32> to vector<8x8x16xf32>
    %12 = arith.maximumf %10, %11 : vector<8x8x16xf32>
    %13 = vector.extract_strided_slice %1 {offsets = [2, 0, 0], sizes = [8, 8, 16], strides = [1, 1, 1]} : vector<10x10x16xf32> to vector<8x8x16xf32>
    %14 = arith.maximumf %12, %13 : vector<8x8x16xf32>
    %15 = vector.extract_strided_slice %1 {offsets = [2, 1, 0], sizes = [8, 8, 16], strides = [1, 1, 1]} : vector<10x10x16xf32> to vector<8x8x16xf32>
    %16 = arith.maximumf %14, %15 : vector<8x8x16xf32>
    %17 = vector.extract_strided_slice %1 {offsets = [2, 2, 0], sizes = [8, 8, 16], strides = [1, 1, 1]} : vector<10x10x16xf32> to vector<8x8x16xf32>
    %18 = arith.maximumf %16, %17 : vector<8x8x16xf32>
    %c0_i32 = arith.constant 0 : i32
    %19 = arith.cmpi eq, %arg2, %c0_i32 : i32
    %20 = arith.extui %19 : i1 to i32
    %c0_i32_4 = arith.constant 0 : i32
    %21 = arith.cmpi ne, %20, %c0_i32_4 : i32
    scf.if %21 {
      %c0_8 = arith.constant 0 : index
      %c0_9 = arith.constant 0 : index
      %c0_10 = arith.constant 0 : index
      %28 = vector.load %arg7[%c0_8, %c0_9, %c0_10] : memref<8x8x16xf32, #tpu.memory_space<vmem>>, vector<8x8x16xf32>
      tpu.vector_store %arg7[%c0_8, %c0_9, %c0_10], %18 {strides = array<i32>} : memref<8x8x16xf32, #tpu.memory_space<vmem>>, vector<8x8x16xf32>,
    } else {
    }
    %c0_i32_5 = arith.constant 0 : i32
    %22 = arith.cmpi sgt, %arg2, %c0_i32_5 : i32
    %23 = arith.extui %22 : i1 to i32
    %c0_i32_6 = arith.constant 0 : i32
    %24 = arith.cmpi ne, %23, %c0_i32_6 : i32
    scf.if %24 {
      %c0_8 = arith.constant 0 : index
      %c0_9 = arith.constant 0 : index
      %c0_10 = arith.constant 0 : index
      %28 = vector.load %arg7[%c0_8, %c0_9, %c0_10] : memref<8x8x16xf32, #tpu.memory_space<vmem>>, vector<8x8x16xf32>
      %29 = arith.maximumf %28, %18 : vector<8x8x16xf32>
      %c0_11 = arith.constant 0 : index
      %c0_12 = arith.constant 0 : index
      %c0_13 = arith.constant 0 : index
      %30 = vector.load %arg7[%c0_11, %c0_12, %c0_13] : memref<8x8x16xf32, #tpu.memory_space<vmem>>, vector<8x8x16xf32>
      tpu.vector_store %arg7[%c0_11, %c0_12, %c0_13], %29 {strides = array<i32>} : memref<8x8x16xf32, #tpu.memory_space<vmem>>, vector<8x8x16xf32>,
    } else {
    }
    %c2_i32 = arith.constant 2 : i32
    %25 = arith.cmpi eq, %arg2, %c2_i32 : i32
    %26 = arith.extui %25 : i1 to i32
    %c0_i32_7 = arith.constant 0 : i32
    %27 = arith.cmpi ne, %26, %c0_i32_7 : i32
    scf.if %27 {
      %c0_8 = arith.constant 0 : index
      %c0_9 = arith.constant 0 : index
      %c0_10 = arith.constant 0 : index
      %28 = vector.load %arg7[%c0_8, %c0_9, %c0_10] : memref<8x8x16xf32, #tpu.memory_space<vmem>>, vector<8x8x16xf32>
      %29 = vector.shape_cast %28 : vector<8x8x16xf32> to vector<64x16xf32>
      %c0_11 = arith.constant 0 : index
      %c0_12 = arith.constant 0 : index
      %30 = vector.load %arg4[%c0_11, %c0_12] : memref<16x8xf32, #tpu.memory_space<vmem>>, vector<16x8xf32>
      %cst = arith.constant dense<0.000000e+00> : vector<64x8xf32>
      %31 = tpu.matmul %29, %30, %cst {dimension_numbers = #tpu.dot_dimension_numbers<[1], [0], [0], [1], [0, 0, 1, 1], [], []>} : vector<64x16xf32>, vector<16x8xf32>, vector<64x8xf32> -> vector<64x8xf32>
      %32 = vector.shape_cast %31 : vector<64x8xf32> to vector<1x1x8x8x8xf32>
      %c0_13 = arith.constant 0 : index
      %c0_14 = arith.constant 0 : index
      %c0_15 = arith.constant 0 : index
      %c0_16 = arith.constant 0 : index
      %c0_17 = arith.constant 0 : index
      %33 = vector.load %arg5[%c0_13, %c0_14, %c0_15, %c0_16, %c0_17] : memref<1x1x8x8x8xf32, #tpu.memory_space<vmem>>, vector<1x1x8x8x8xf32>
      tpu.vector_store %arg5[%c0_13, %c0_14, %c0_15, %c0_16, %c0_17], %32 {strides = array<i32>} : memref<1x1x8x8x8xf32, #tpu.memory_space<vmem>>, vector<1x1x8x8x8xf32>,
      %cst_18 = arith.constant dense<0.000000e+00> : vector<8xf32>
      %34 = vector.multi_reduction <add>, %31, %cst_18 [0] : vector<64x8xf32> to vector<8xf32>
      %35 = vector.shape_cast %34 : vector<8xf32> to vector<1x8xf32>
      %cst_19 = arith.constant 1.562500e-02 : f32
      %36 = vector.broadcast %cst_19 : f32 to vector<1x8xf32>
      %37 = arith.mulf %35, %36 : vector<1x8xf32>
      %38 = vector.broadcast %37 : vector<1x8xf32> to vector<64x8xf32>
      %39 = arith.subf %31, %38 : vector<64x8xf32>
      %40 = arith.mulf %39, %39 : vector<64x8xf32>
      %cst_20 = arith.constant dense<0.000000e+00> : vector<8xf32>
      %41 = vector.multi_reduction <add>, %40, %cst_20 [0] : vector<64x8xf32> to vector<8xf32>
      %42 = vector.shape_cast %41 : vector<8xf32> to vector<1x8xf32>
      %43 = tpu.concatenate %37, %42 in 0 : vector<1x8xf32>, vector<1x8xf32> -> vector<2x8xf32>
      %44 = vector.shape_cast %43 : vector<2x8xf32> to vector<1x1x2x8xf32>
      %c0_21 = arith.constant 0 : index
      %c0_22 = arith.constant 0 : index
      %c0_23 = arith.constant 0 : index
      %c0_24 = arith.constant 0 : index
      %45 = vector.load %arg6[%c0_21, %c0_22, %c0_23, %c0_24] : memref<1x1x2x8xf32, #tpu.memory_space<vmem>>, vector<1x1x2x8xf32>
      tpu.vector_store %arg6[%c0_21, %c0_22, %c0_23, %c0_24], %44 {strides = array<i32>} : memref<1x1x2x8xf32, #tpu.memory_space<vmem>>, vector<1x1x2x8xf32>,
    } else {
    }
    return
  }
  func.func @transform_0(%arg0: i32, %arg1: i32, %arg2: i32) -> (i32, i32, i32, i32, i32) {
    %0 = arith.addi %arg1, %arg2 : i32
    %c0_i32 = arith.constant 0 : i32
    %c0_i32_0 = arith.constant 0 : i32
    %c0_i32_1 = arith.constant 0 : i32
    %c0_i32_2 = arith.constant 0 : i32
    return %arg0, %0, %c0_i32, %c0_i32_0, %c0_i32_1 : i32, i32, i32, i32, i32
  }
  func.func @transform_1(%arg0: i32, %arg1: i32, %arg2: i32) -> (i32, i32) {
    %c0_i32 = arith.constant 0 : i32
    %c0_i32_0 = arith.constant 0 : i32
    %c0_i32_1 = arith.constant 0 : i32
    return %c0_i32, %c0_i32_0 : i32, i32
  }
  func.func @transform_2(%arg0: i32, %arg1: i32, %arg2: i32) -> (i32, i32, i32, i32, i32) {
    %c0_i32 = arith.constant 0 : i32
    %c0_i32_0 = arith.constant 0 : i32
    %c0_i32_1 = arith.constant 0 : i32
    %c0_i32_2 = arith.constant 0 : i32
    return %arg0, %arg1, %c0_i32, %c0_i32_0, %c0_i32_1 : i32, i32, i32, i32, i32
  }
  func.func @transform_3(%arg0: i32, %arg1: i32, %arg2: i32) -> (i32, i32, i32, i32) {
    %c0_i32 = arith.constant 0 : i32
    %c0_i32_0 = arith.constant 0 : i32
    %c0_i32_1 = arith.constant 0 : i32
    return %arg0, %arg1, %c0_i32, %c0_i32_0 : i32, i32, i32, i32
  }
}

module attributes {stable_mosaic.version = 11 : i64} {
  func.func @_concat_bn_relu_kernel(%arg0: i32, %arg1: memref<256x8xf32, #tpu.memory_space<vmem>>, %arg2: memref<256x16xf32, #tpu.memory_space<vmem>>, %arg3: memref<256x16xf32, #tpu.memory_space<vmem>>, %arg4: memref<256x8xf32, #tpu.memory_space<vmem>>, %arg5: memref<1x48xf32, #tpu.memory_space<vmem>>, %arg6: memref<1x48xf32, #tpu.memory_space<vmem>>, %arg7: memref<256x48xf32, #tpu.memory_space<vmem>>) attributes {dimension_semantics = [#tpu.dimension_semantics<parallel>], iteration_bounds = array<i64: 2>, scalar_prefetch = 0 : i64, scratch_operands = 0 : i64, tpu.core_type = #tpu.core_type<tc>, window_params = [{transform_indices = @transform_0, window_bounds = array<i64: 256, 8>}, {transform_indices = @transform_1, window_bounds = array<i64: 256, 16>}, {transform_indices = @transform_2, window_bounds = array<i64: 256, 16>}, {transform_indices = @transform_3, window_bounds = array<i64: 256, 8>}, {pipeline_mode = #tpu.pipeline_mode<synchronous>, transform_indices = @transform_4, window_bounds = array<i64: 1, 48>}, {pipeline_mode = #tpu.pipeline_mode<synchronous>, transform_indices = @transform_5, window_bounds = array<i64: 1, 48>}, {transform_indices = @transform_6, window_bounds = array<i64: 256, 48>}]} {
    %c0 = arith.constant 0 : index
    %c0_0 = arith.constant 0 : index
    %0 = vector.load %arg1[%c0, %c0_0] : memref<256x8xf32, #tpu.memory_space<vmem>>, vector<256x8xf32>
    %c0_1 = arith.constant 0 : index
    %c0_2 = arith.constant 0 : index
    %1 = vector.load %arg2[%c0_1, %c0_2] : memref<256x16xf32, #tpu.memory_space<vmem>>, vector<256x16xf32>
    %c0_3 = arith.constant 0 : index
    %c0_4 = arith.constant 0 : index
    %2 = vector.load %arg3[%c0_3, %c0_4] : memref<256x16xf32, #tpu.memory_space<vmem>>, vector<256x16xf32>
    %c0_5 = arith.constant 0 : index
    %c0_6 = arith.constant 0 : index
    %3 = vector.load %arg4[%c0_5, %c0_6] : memref<256x8xf32, #tpu.memory_space<vmem>>, vector<256x8xf32>
    %4 = tpu.concatenate %0, %1, %2, %3 in 1 : vector<256x8xf32>, vector<256x16xf32>, vector<256x16xf32>, vector<256x8xf32> -> vector<256x48xf32>
    %c0_7 = arith.constant 0 : index
    %c0_8 = arith.constant 0 : index
    %5 = vector.load %arg5[%c0_7, %c0_8] : memref<1x48xf32, #tpu.memory_space<vmem>>, vector<1x48xf32>
    %6 = vector.broadcast %5 : vector<1x48xf32> to vector<256x48xf32>
    %7 = arith.mulf %4, %6 : vector<256x48xf32>
    %c0_9 = arith.constant 0 : index
    %c0_10 = arith.constant 0 : index
    %8 = vector.load %arg6[%c0_9, %c0_10] : memref<1x48xf32, #tpu.memory_space<vmem>>, vector<1x48xf32>
    %9 = vector.broadcast %8 : vector<1x48xf32> to vector<256x48xf32>
    %10 = arith.addf %7, %9 : vector<256x48xf32>
    %cst = arith.constant 0.000000e+00 : f32
    %11 = vector.broadcast %cst : f32 to vector<256x48xf32>
    %12 = arith.maximumf %10, %11 : vector<256x48xf32>
    %c0_11 = arith.constant 0 : index
    %c0_12 = arith.constant 0 : index
    %13 = vector.load %arg7[%c0_11, %c0_12] : memref<256x48xf32, #tpu.memory_space<vmem>>, vector<256x48xf32>
    tpu.vector_store %arg7[%c0_11, %c0_12], %12 {strides = array<i32>} : memref<256x48xf32, #tpu.memory_space<vmem>>, vector<256x48xf32>,
    return
  }
  func.func @transform_0(%arg0: i32) -> (i32, i32) {
    %c0_i32 = arith.constant 0 : i32
    %c0_i32_0 = arith.constant 0 : i32
    return %arg0, %c0_i32 : i32, i32
  }
  func.func @transform_1(%arg0: i32) -> (i32, i32) {
    %c0_i32 = arith.constant 0 : i32
    %c0_i32_0 = arith.constant 0 : i32
    return %arg0, %c0_i32 : i32, i32
  }
  func.func @transform_2(%arg0: i32) -> (i32, i32) {
    %c0_i32 = arith.constant 0 : i32
    %c0_i32_0 = arith.constant 0 : i32
    return %arg0, %c0_i32 : i32, i32
  }
  func.func @transform_3(%arg0: i32) -> (i32, i32) {
    %c0_i32 = arith.constant 0 : i32
    %c0_i32_0 = arith.constant 0 : i32
    return %arg0, %c0_i32 : i32, i32
  }
  func.func @transform_4(%arg0: i32) -> (i32, i32) {
    %c0_i32 = arith.constant 0 : i32
    %c0_i32_0 = arith.constant 0 : i32
    %c0_i32_1 = arith.constant 0 : i32
    return %c0_i32, %c0_i32_0 : i32, i32
  }
  func.func @transform_5(%arg0: i32) -> (i32, i32) {
    %c0_i32 = arith.constant 0 : i32
    %c0_i32_0 = arith.constant 0 : i32
    %c0_i32_1 = arith.constant 0 : i32
    return %c0_i32, %c0_i32_0 : i32, i32
  }
  func.func @transform_6(%arg0: i32) -> (i32, i32) {
    %c0_i32 = arith.constant 0 : i32
    %c0_i32_0 = arith.constant 0 : i32
    return %arg0, %c0_i32 : i32, i32
  }
}

</mosaic_0001>

<llo_original>
// kernel: inception_forward.8
$region0: #{inception_forward.8}
  #allocation0 [shape = 'u32[]', space=smem, size = 0x4, offset = 0x4, fixed_abs, tag = 'smem constant byte address 0x4 - core index']
  #allocation1 [shape = 'u32[144,128]{1,0:T(1,128)}', space=vmem, size = 0x12000, scoped, tag = 'internal scratch']
  %s0 = inlined_call_operand.vmem [shape: f32[512,8], index: 0, kind: input, shape index: {}]
  %s1 = inlined_call_operand.vmem [shape: f32[1,8], index: 1, kind: input, shape index: {}]
  %s2 = inlined_call_operand.vmem [shape: f32[1,8], index: 2, kind: input, shape index: {}]
  %s3 = inlined_call_operand.vmem [shape: f32[512,8], index: 3, kind: output, shape index: {}]
  %s4 = sld [smem:[#allocation0]]
  $region45: #{inception_forward.8} parent=0
    _
  %s6 = ssub.s32 1, %s4
  %s7 = scalar_select 0, %s6, %s4
  loop: start=0, step=1, limit=4
  $region2: #{inception_forward.8} parent=0 // loop_pre_header
    _
  $region3: #{inception_forward.8} parent=0 // loop_header
    %s9 = sphi 0, %s13
    %p10 = scmp.ge.s32.totalorder %s9, 4
    %s19 = sphi 0, %s21
    %s22 = sphi 0, %s19
    %s23 = sphi 0, %s22
    %s39 = sphi 0, %s23
    %s43 = sphi 0, %s43
    %s45 = sphi 0, %s43
    %s46 = sphi 0, %s45
    %s60 = sphi 0, %s46
    %s64 = sphi 0, %s64
    %s66 = sphi 0, %s64
    %s67 = sphi 0, %s66
    %s81 = sphi 0, %s67
    %s87 = sphi 0, %s89
    %s90 = sphi 0, %s87
    %s91 = sphi 0, %s90
    %s107 = sphi 0, %s91
  $region4: #{inception_forward.8} parent=0 // loop_header_branch
    %12 = sbr.rel (%p10) target = $region8
  $region5: #{inception_forward.8} parent=0 // loop_body
    %s14 = ssub.s32 %s9, 1
    %s15 = ssub.s32 %s9, 2
    %s16 = sadd.s32 %s9, 1
    %s17 = ssub.s32 %s9, %s16
    %p18 = scmp.eq.s32.totalorder %s17, 0
    %s20 = sadd.s32 %s19, 1
    %s21 = scalar_select %p18, %s19, %s20
    %p24 = pneg %p18
    %p25 = scmp.eq.s32.totalorder %s9, 1
    %p26 = por %p24, %p25
    %p27 = scmp.ne.s32.totalorder %s19, %s22
    %p28 = scmp.eq.s32.totalorder %s9, 0
    %p29 = por %p27, %p28
    %p30 = scmp.ne.s32.totalorder %s19, %s22
    %p31 = scmp.eq.s32.totalorder %s14, 1
    %p32 = por %p30, %p31
    %p33 = scmp.ne.s32.totalorder %s22, %s23
    %p34 = scmp.eq.s32.totalorder %s14, 0
    %p35 = por %p33, %p34
    %p36 = scmp.ne.s32.totalorder %s22, %s23
    %p37 = scmp.eq.s32.totalorder %s15, 1
    %p38 = por %p36, %p37
    %p40 = scmp.ne.s32.totalorder %s23, %s39
    %p41 = scmp.eq.s32.totalorder %s15, 0
    %p42 = por %p40, %p41
    %s44 = sadd.s32 %s43, 1
    %p47 = scmp.eq.s32.totalorder %s9, 1
    %p48 = scmp.ne.s32.totalorder %s43, %s45
    %p49 = scmp.eq.s32.totalorder %s9, 0
    %p50 = por %p48, %p49
    %p51 = scmp.ne.s32.totalorder %s43, %s45
    %p52 = scmp.eq.s32.totalorder %s14, 1
    %p53 = por %p51, %p52
    %p54 = scmp.ne.s32.totalorder %s45, %s46
    %p55 = scmp.eq.s32.totalorder %s14, 0
    %p56 = por %p54, %p55
    %p57 = scmp.ne.s32.totalorder %s45, %s46
    %p58 = scmp.eq.s32.totalorder %s15, 1
    %p59 = por %p57, %p58
    %p61 = scmp.ne.s32.totalorder %s46, %s60
    %p62 = scmp.eq.s32.totalorder %s15, 0
    %p63 = por %p61, %p62
    %s65 = sadd.s32 %s64, 1
    %p68 = scmp.eq.s32.totalorder %s9, 1
    %p69 = scmp.ne.s32.totalorder %s64, %s66
    %p70 = scmp.eq.s32.totalorder %s9, 0
    %p71 = por %p69, %p70
    %p72 = scmp.ne.s32.totalorder %s64, %s66
    %p73 = scmp.eq.s32.totalorder %s14, 1
    %p74 = por %p72, %p73
    %p75 = scmp.ne.s32.totalorder %s66, %s67
    %p76 = scmp.eq.s32.totalorder %s14, 0
    %p77 = por %p75, %p76
    %p78 = scmp.ne.s32.totalorder %s66, %s67
    %p79 = scmp.eq.s32.totalorder %s15, 1
    %p80 = por %p78, %p79
    %p82 = scmp.ne.s32.totalorder %s67, %s81
    %p83 = scmp.eq.s32.totalorder %s15, 0
    %p84 = por %p82, %p83
    %s85 = ssub.s32 %s9, %s16
    %p86 = scmp.eq.s32.totalorder %s85, 0
    %s88 = sadd.s32 %s87, 1
    %s89 = scalar_select %p86, %s87, %s88
    %p92 = pneg %p86
    %p93 = scmp.eq.s32.totalorder %s9, 1
    %p94 = por %p92, %p93
    %p95 = scmp.ne.s32.totalorder %s87, %s90
    %p96 = scmp.eq.s32.totalorder %s9, 0
    %p97 = por %p95, %p96
    %p98 = scmp.ne.s32.totalorder %s87, %s90
    %p99 = scmp.eq.s32.totalorder %s14, 1
    %p100 = por %p98, %p99
    %p101 = scmp.ne.s32.totalorder %s90, %s91
    %p102 = scmp.eq.s32.totalorder %s14, 0
    %p103 = por %p101, %p102
    %p104 = scmp.ne.s32.totalorder %s90, %s91
    %p105 = scmp.eq.s32.totalorder %s15, 1
    %p106 = por %p104, %p105
    %p108 = scmp.ne.s32.totalorder %s91, %s107
    %p109 = scmp.eq.s32.totalorder %s15, 0
    %p110 = por %p108, %p109
    %p111 = scmp.le.s32.totalorder 1, %s9
    %p112 = scmp.lt.s32.totalorder %s9, 3
    %p113 = pnand %p111, %p112
    %p114 = pneg %p113
    // Predicated region
    $region9: #{inception_forward.8} parent=5 // pred_check
      _
    $region10: #{inception_forward.8} parent=5 // pred_check_branch
      %116 = sbr.rel (%p113) target = $region12
    $region11: #{inception_forward.8} parent=5 // pred_region
      %s117 = ssub.s32 %s9, 1
      // Predicated region
      $region13: #{inception_forward.8} parent=11 // pred_check
        %p118 = pneg %p56
      $region14: #{inception_forward.8} parent=11 // pred_check_branch
        %120 = sbr.rel (%p118) target = $region16
      $region15: #{inception_forward.8} parent=11 // pred_region
        _
      $region16: #{inception_forward.8} parent=11 // pred_fallthru
        _
      // Predicated region
      $region17: #{inception_forward.8} parent=11 // pred_check
        %p121 = pneg %p77
      $region18: #{inception_forward.8} parent=11 // pred_check_branch
        %123 = sbr.rel (%p121) target = $region20
      $region19: #{inception_forward.8} parent=11 // pred_region
        _
      $region20: #{inception_forward.8} parent=11 // pred_fallthru
        _
    $region12: #{inception_forward.8} parent=5 // pred_fallthru
      _
    %p124 = scmp.lt.s32.totalorder %s9, 2
    // Predicated region
    $region21: #{inception_forward.8} parent=5 // pred_check
      %p125 = pneg %p124
    $region22: #{inception_forward.8} parent=5 // pred_check_branch
      %127 = sbr.rel (%p125) target = $region24
    $region23: #{inception_forward.8} parent=5 // pred_region
      // Predicated region
      $region25: #{inception_forward.8} parent=23 // pred_check
        %p128 = pneg %p29
      $region26: #{inception_forward.8} parent=23 // pred_check_branch
        %130 = sbr.rel (%p128) target = $region28
      $region27: #{inception_forward.8} parent=23 // pred_region
        %s131 = smul.u32 32, %s9
        %p132 = scmp.lt.s32.totalorder %s131, 63
        %s133 = scalar_select %p132, %s131, 63
        %s134 = smul.addr %s133, 8
        %s135 = scalar_lea.vmem %s0, %s134
        %s136 = smul.u32 32, %s9
      $region28: #{inception_forward.8} parent=23 // pred_fallthru
        _
    $region24: #{inception_forward.8} parent=5 // pred_fallthru
      _
    %p137 = scmp.le.s32.totalorder 1, %s9
    %p138 = scmp.lt.s32.totalorder %s9, 3
    %p139 = pnand %p137, %p138
    %p140 = pneg %p139
    // Predicated region
    $region29: #{inception_forward.8} parent=5 // pred_check
      _
    $region30: #{inception_forward.8} parent=5 // pred_check_branch
      %142 = sbr.rel (%p139) target = $region32
    $region31: #{inception_forward.8} parent=5 // pred_region
      %s143 = ssub.s32 %s9, 1
      %s144 = smul.u32 32, %s14
      %p145 = scmp.lt.s32.totalorder %s144, 63
      %s146 = scalar_select %p145, %s144, 63
      %s147 = smul.addr %s146, 8
      %s148 = scalar_lea.vmem %s0, %s147
      %p149 = pneg %p35
      %p150 = pneg %p32
      %p151 = pneg %p56
      %p152 = pneg %p53
      %p153 = pneg %p77
      %p154 = pneg %p74
      %p155 = pneg %p103
      %p156 = pneg %p100
      %s157 = smul.u32 32, %s14
      %p158 = scmp.lt.s32.totalorder %s157, 63
      %s159 = scalar_select %p158, %s157, 63
      %s160 = smul.addr %s159, 8
      %s161 = scalar_lea.vmem %s3, %s160
      %s162 = smul.u32 32, %s14
      %p163 = scmp.lt.s32.totalorder %s162, 63
      %s164 = scalar_select %p163, %s162, 63
      %s165 = smul.addr %s164, 8
      %s166 = scalar_lea.vmem %s0, %s165
      %s167 = smul.u32 32, %s14
      %s168 = smul.u32 32, %s14
      %p169 = scmp.lt.s32.totalorder %s168, 63
      %s170 = scalar_select %p169, %s168, 63
      %s171 = smul.addr %s170, 8
      %s172 = scalar_lea.vmem %s3, %s171
      %s173 = smul.u32 32, %s14
      %v174 = vld [vmem:[%s166] sm:$0xff]
      %v175 = vld [vmem:[%s166 + $0x8] sm:$0xff]
      %v176 = vld [vmem:[%s166 + $0x10] sm:$0xff]
      %v177 = vld [vmem:[%s166 + $0x18] sm:$0xff]
      %v178 = vld [vmem:[%s166 + $0x20] sm:$0xff]
      %v179 = vld [vmem:[%s166 + $0x28] sm:$0xff]
      %v180 = vld [vmem:[%s166 + $0x30] sm:$0xff]
      %v181 = vld [vmem:[%s166 + $0x38] sm:$0xff]
      %v182 = vld [vmem:[%s166 + $0x40] sm:$0xff]
      %v183 = vld [vmem:[%s166 + $0x48] sm:$0xff]
      %v184 = vld [vmem:[%s166 + $0x50] sm:$0xff]
      %v185 = vld [vmem:[%s166 + $0x58] sm:$0xff]
      %v186 = vld [vmem:[%s166 + $0x60] sm:$0xff]
      %v187 = vld [vmem:[%s166 + $0x68] sm:$0xff]
      %v188 = vld [vmem:[%s166 + $0x70] sm:$0xff]
      %v189 = vld [vmem:[%s166 + $0x78] sm:$0xff]
      %v190 = vld [vmem:[%s166 + $0x80] sm:$0xff]
      %v191 = vld [vmem:[%s166 + $0x88] sm:$0xff]
      %v192 = vld [vmem:[%s166 + $0x90] sm:$0xff]
      %v193 = vld [vmem:[%s166 + $0x98] sm:$0xff]
      %v194 = vld [vmem:[%s166 + $0xa0] sm:$0xff]
      %v195 = vld [vmem:[%s166 + $0xa8] sm:$0xff]
      %v196 = vld [vmem:[%s166 + $0xb0] sm:$0xff]
      %v197 = vld [vmem:[%s166 + $0xb8] sm:$0xff]
      %v198 = vld [vmem:[%s166 + $0xc0] sm:$0xff]
      %v199 = vld [vmem:[%s166 + $0xc8] sm:$0xff]
      %v200 = vld [vmem:[%s166 + $0xd0] sm:$0xff]
      %v201 = vld [vmem:[%s166 + $0xd8] sm:$0xff]
      %v202 = vld [vmem:[%s166 + $0xe0] sm:$0xff]
      %v203 = vld [vmem:[%s166 + $0xe8] sm:$0xff]
      %v204 = vld [vmem:[%s166 + $0xf0] sm:$0xff]
      %v205 = vld [vmem:[%s166 + $0xf8] sm:$0xff]
      %v206 = vld [vmem:[%s1] sm:$0x1]
      %v208 = vlaneseq
      %v209 = vshrl.u32 %v208, 7
      %v210 = vsub.s32 0, %v209
      %v211 = vrot.slane %v206, %v210
      %v213 = vmul.f32 %v174, %v211
      %v214 = vmul.f32 %v175, %v211
      %v215 = vmul.f32 %v176, %v211
      %v216 = vmul.f32 %v177, %v211
      %v217 = vmul.f32 %v178, %v211
      %v218 = vmul.f32 %v179, %v211
      %v219 = vmul.f32 %v180, %v211
      %v220 = vmul.f32 %v181, %v211
      %v221 = vmul.f32 %v182, %v211
      %v222 = vmul.f32 %v183, %v211
      %v223 = vmul.f32 %v184, %v211
      %v224 = vmul.f32 %v185, %v211
      %v225 = vmul.f32 %v186, %v211
      %v226 = vmul.f32 %v187, %v211
      %v227 = vmul.f32 %v188, %v211
      %v228 = vmul.f32 %v189, %v211
      %v229 = vmul.f32 %v190, %v211
      %v230 = vmul.f32 %v191, %v211
      %v231 = vmul.f32 %v192, %v211
      %v232 = vmul.f32 %v193, %v211
      %v233 = vmul.f32 %v194, %v211
      %v234 = vmul.f32 %v195, %v211
      %v235 = vmul.f32 %v196, %v211
      %v236 = vmul.f32 %v197, %v211
      %v237 = vmul.f32 %v198, %v211
      %v238 = vmul.f32 %v199, %v211
      %v239 = vmul.f32 %v200, %v211
      %v240 = vmul.f32 %v201, %v211
      %v241 = vmul.f32 %v202, %v211
      %v242 = vmul.f32 %v203, %v211
      %v243 = vmul.f32 %v204, %v211
      %v244 = vmul.f32 %v205, %v211
      %v245 = vld [vmem:[%s2] sm:$0x1]
      %v247 = vlaneseq
      %v248 = vshrl.u32 %v247, 7
      %v249 = vsub.s32 0, %v248
      %v250 = vrot.slane %v245, %v249
      %v252 = vadd.f32 %v213, %v250
      %v253 = vadd.f32 %v214, %v250
      %v254 = vadd.f32 %v215, %v250
      %v255 = vadd.f32 %v216, %v250
      %v256 = vadd.f32 %v217, %v250
      %v257 = vadd.f32 %v218, %v250
      %v258 = vadd.f32 %v219, %v250
      %v259 = vadd.f32 %v220, %v250
      %v260 = vadd.f32 %v221, %v250
      %v261 = vadd.f32 %v222, %v250
      %v262 = vadd.f32 %v223, %v250
      %v263 = vadd.f32 %v224, %v250
      %v264 = vadd.f32 %v225, %v250
      %v265 = vadd.f32 %v226, %v250
      %v266 = vadd.f32 %v227, %v250
      %v267 = vadd.f32 %v228, %v250
      %v268 = vadd.f32 %v229, %v250
      %v269 = vadd.f32 %v230, %v250
      %v270 = vadd.f32 %v231, %v250
      %v271 = vadd.f32 %v232, %v250
      %v272 = vadd.f32 %v233, %v250
      %v273 = vadd.f32 %v234, %v250
      %v274 = vadd.f32 %v235, %v250
      %v275 = vadd.f32 %v236, %v250
      %v276 = vadd.f32 %v237, %v250
      %v277 = vadd.f32 %v238, %v250
      %v278 = vadd.f32 %v239, %v250
      %v279 = vadd.f32 %v240, %v250
      %v280 = vadd.f32 %v241, %v250
      %v281 = vadd.f32 %v242, %v250
      %v282 = vadd.f32 %v243, %v250
      %v283 = vadd.f32 %v244, %v250
      %v284 = vmax.f32 %v252, 0.0
      %v285 = vmax.f32 %v253, 0.0
      %v286 = vmax.f32 %v254, 0.0
      %v287 = vmax.f32 %v255, 0.0
      %v288 = vmax.f32 %v256, 0.0
      %v289 = vmax.f32 %v257, 0.0
      %v290 = vmax.f32 %v258, 0.0
      %v291 = vmax.f32 %v259, 0.0
      %v292 = vmax.f32 %v260, 0.0
      %v293 = vmax.f32 %v261, 0.0
      %v294 = vmax.f32 %v262, 0.0
      %v295 = vmax.f32 %v263, 0.0
      %v296 = vmax.f32 %v264, 0.0
      %v297 = vmax.f32 %v265, 0.0
      %v298 = vmax.f32 %v266, 0.0
      %v299 = vmax.f32 %v267, 0.0
      %v300 = vmax.f32 %v268, 0.0
      %v301 = vmax.f32 %v269, 0.0
      %v302 = vmax.f32 %v270, 0.0
      %v303 = vmax.f32 %v271, 0.0
      %v304 = vmax.f32 %v272, 0.0
      %v305 = vmax.f32 %v273, 0.0
      %v306 = vmax.f32 %v274, 0.0
      %v307 = vmax.f32 %v275, 0.0
      %v308 = vmax.f32 %v276, 0.0
      %v309 = vmax.f32 %v277, 0.0
      %v310 = vmax.f32 %v278, 0.0
      %v311 = vmax.f32 %v279, 0.0
      %v312 = vmax.f32 %v280, 0.0
      %v313 = vmax.f32 %v281, 0.0
      %v314 = vmax.f32 %v282, 0.0
      %v315 = vmax.f32 %v283, 0.0
      %vm316 = vcmask 64512
      %317 = vst.msk [vmem:[%s172] sm:$0xff] %vm316, %v284
      %318 = vst.msk [vmem:[%s172 + $0x8] sm:$0xff] %vm316, %v285
      %319 = vst.msk [vmem:[%s172 + $0x10] sm:$0xff] %vm316, %v286
      %320 = vst.msk [vmem:[%s172 + $0x18] sm:$0xff] %vm316, %v287
      %321 = vst.msk [vmem:[%s172 + $0x20] sm:$0xff] %vm316, %v288
      %322 = vst.msk [vmem:[%s172 + $0x28] sm:$0xff] %vm316, %v289
      %323 = vst.msk [vmem:[%s172 + $0x30] sm:$0xff] %vm316, %v290
      %324 = vst.msk [vmem:[%s172 + $0x38] sm:$0xff] %vm316, %v291
      %325 = vst.msk [vmem:[%s172 + $0x40] sm:$0xff] %vm316, %v292
      %326 = vst.msk [vmem:[%s172 + $0x48] sm:$0xff] %vm316, %v293
      %327 = vst.msk [vmem:[%s172 + $0x50] sm:$0xff] %vm316, %v294
      %328 = vst.msk [vmem:[%s172 + $0x58] sm:$0xff] %vm316, %v295
      %329 = vst.msk [vmem:[%s172 + $0x60] sm:$0xff] %vm316, %v296
      %330 = vst.msk [vmem:[%s172 + $0x68] sm:$0xff] %vm316, %v297
      %331 = vst.msk [vmem:[%s172 + $0x70] sm:$0xff] %vm316, %v298
      %332 = vst.msk [vmem:[%s172 + $0x78] sm:$0xff] %vm316, %v299
      %333 = vst.msk [vmem:[%s172 + $0x80] sm:$0xff] %vm316, %v300
      %334 = vst.msk [vmem:[%s172 + $0x88] sm:$0xff] %vm316, %v301
      %335 = vst.msk [vmem:[%s172 + $0x90] sm:$0xff] %vm316, %v302
      %336 = vst.msk [vmem:[%s172 + $0x98] sm:$0xff] %vm316, %v303
      %337 = vst.msk [vmem:[%s172 + $0xa0] sm:$0xff] %vm316, %v304
      %338 = vst.msk [vmem:[%s172 + $0xa8] sm:$0xff] %vm316, %v305
      %339 = vst.msk [vmem:[%s172 + $0xb0] sm:$0xff] %vm316, %v306
      %340 = vst.msk [vmem:[%s172 + $0xb8] sm:$0xff] %vm316, %v307
      %341 = vst.msk [vmem:[%s172 + $0xc0] sm:$0xff] %vm316, %v308
      %342 = vst.msk [vmem:[%s172 + $0xc8] sm:$0xff] %vm316, %v309
      %343 = vst.msk [vmem:[%s172 + $0xd0] sm:$0xff] %vm316, %v310
      %344 = vst.msk [vmem:[%s172 + $0xd8] sm:$0xff] %vm316, %v311
      %345 = vst.msk [vmem:[%s172 + $0xe0] sm:$0xff] %vm316, %v312
      %346 = vst.msk [vmem:[%s172 + $0xe8] sm:$0xff] %vm316, %v313
      %347 = vst.msk [vmem:[%s172 + $0xf0] sm:$0xff] %vm316, %v314
      %348 = vst.msk [vmem:[%s172 + $0xf8] sm:$0xff] %vm316, %v315
      %s349 = smul.u32 32, %s14
      %p350 = scmp.lt.s32.totalorder %s349, 63
      %s351 = scalar_select %p350, %s349, 63
      %s352 = smul.addr %s351, 8
      %s353 = scalar_lea.vmem %s3, %s352
      // Predicated region
      $region33: #{inception_forward.8} parent=31 // pred_check
        %p354 = pneg %p100
      $region34: #{inception_forward.8} parent=31 // pred_check_branch
        %356 = sbr.rel (%p354) target = $region36
      $region35: #{inception_forward.8} parent=31 // pred_region
        %s357 = smul.u32 32, %s14
      $region36: #{inception_forward.8} parent=31 // pred_fallthru
        _
    $region32: #{inception_forward.8} parent=5 // pred_fallthru
      _
    %p358 = scmp.le.s32.totalorder 2, %s9
    // Predicated region
    $region37: #{inception_forward.8} parent=5 // pred_check
      %p359 = pneg %p358
    $region38: #{inception_forward.8} parent=5 // pred_check_branch
      %361 = sbr.rel (%p359) target = $region40
    $region39: #{inception_forward.8} parent=5 // pred_region
      %s362 = ssub.s32 %s9, 2
      // Predicated region
      $region41: #{inception_forward.8} parent=39 // pred_check
        %p363 = pneg %p106
      $region42: #{inception_forward.8} parent=39 // pred_check_branch
        %365 = sbr.rel (%p363) target = $region44
      $region43: #{inception_forward.8} parent=39 // pred_region
        %s366 = smul.u32 32, %s15
        %p367 = scmp.lt.s32.totalorder %s366, 63
        %s368 = scalar_select %p367, %s366, 63
        %s369 = smul.addr %s368, 8
        %s370 = scalar_lea.vmem %s3, %s369
      $region44: #{inception_forward.8} parent=39 // pred_fallthru
        _
    $region40: #{inception_forward.8} parent=5 // pred_fallthru
      _
  $region6: #{inception_forward.8} parent=0 // loop_footer
    %s13 = sadd.s32 1, %s9
  $region7: #{inception_forward.8} parent=0 // loop_footer_branch
    %8 = sbr.rel target = $region3
  $region8: #{inception_forward.8} parent=0 // loop_exit
    _

// kernel: inception_forward.7
$region0: #{inception_forward.7}
  #allocation0 [shape = 'u32[]', space=smem, size = 0x4, offset = 0x4, fixed_abs, tag = 'smem constant byte address 0x4 - core index']
  #allocation1 [shape = 'u32[144,128]{1,0:T(1,128)}', space=vmem, size = 0x12000, scoped, tag = 'internal scratch']
  %s0 = inlined_call_operand.hbm [shape: f32[512,16], index: 0, kind: input, shape index: {}]
  %s1 = inlined_call_operand.vmem [shape: f32[16,24], index: 1, kind: input, shape index: {}]
  %s2 = inlined_call_operand.vmem [shape: f32[512,8], index: 2, kind: output, shape index: {0}]
  %s3 = inlined_call_operand.vmem [shape: f32[512,8], index: 3, kind: output, shape index: {1}]
  %s4 = inlined_call_operand.vmem [shape: f32[512,8], index: 4, kind: output, shape index: {2}]
  %s5 = inlined_call_operand.vmem [shape: f32[2,2,24], index: 5, kind: output, shape index: {3}]
  %6 = xla_tuple %s2, %s3, %s4, %s5
  %s7 = sld [smem:[#allocation0]]
  $region69: #{inception_forward.7} parent=0
    _
  %s9 = ssub.s32 1, %s7
  %s10 = scalar_select 0, %s9, %s7
  $region1: #{inception_forward.7} parent=0
    #allocation2 [shape = 'u8[262144]{0}', space=vmem, size = 0x40000, scoped, tag = 'input window, operand 0']
    #allocation3 [shape = 's32[2]{0}', space=sflag, size = 0x8, scoped, tag = 'scoped memory for inception_forward.7']
    %11 = vsyncpa [#allocation3], 0
    %s12 = scalar_lea.sflag [#allocation3], 1
    %13 = vsyncpa %s12, 0
    loop: start=0, step=1, limit=4
    $region2: #{inception_forward.7} parent=1 // loop_pre_header
      _
    $region3: #{inception_forward.7} parent=1 // loop_header
      %s15 = sphi 0, %s19
      %p16 = scmp.ge.s32.totalorder %s15, 4
      %s25 = sphi 0, %s27
      %s28 = sphi 0, %s25
      %s29 = sphi 0, %s28
      %s45 = sphi 0, %s29
      %s49 = sphi 0, %s49
      %s51 = sphi 0, %s49
      %s52 = sphi 0, %s51
      %s66 = sphi 0, %s52
      %s72 = sphi 0, %s74
      %s75 = sphi 0, %s72
      %s76 = sphi 0, %s75
      %s92 = sphi 0, %s76
      %s98 = sphi 0, %s100
      %s101 = sphi 0, %s98
      %s102 = sphi 0, %s101
      %s118 = sphi 0, %s102
      %s124 = sphi 0, %s126
      %s127 = sphi 0, %s124
      %s128 = sphi 0, %s127
      %s144 = sphi 0, %s128
      %s150 = sphi 0, %s152
      %s153 = sphi 0, %s150
      %s154 = sphi 0, %s153
      %s170 = sphi 0, %s154
    $region4: #{inception_forward.7} parent=1 // loop_header_branch
      %18 = sbr.rel (%p16) target = $region8
    $region5: #{inception_forward.7} parent=1 // loop_body
      %s20 = ssub.s32 %s15, 1
      %s21 = ssub.s32 %s15, 2
      %s22 = sadd.s32 %s15, 1
      %s23 = ssub.s32 %s15, %s22
      %p24 = scmp.eq.s32.totalorder %s23, 0
      %s26 = sadd.s32 %s25, 1
      %s27 = scalar_select %p24, %s25, %s26
      %p30 = pneg %p24
      %p31 = scmp.eq.s32.totalorder %s15, 1
      %p32 = por %p30, %p31
      %p33 = scmp.ne.s32.totalorder %s25, %s28
      %p34 = scmp.eq.s32.totalorder %s15, 0
      %p35 = por %p33, %p34
      %p36 = scmp.ne.s32.totalorder %s25, %s28
      %p37 = scmp.eq.s32.totalorder %s20, 1
      %p38 = por %p36, %p37
      %p39 = scmp.ne.s32.totalorder %s28, %s29
      %p40 = scmp.eq.s32.totalorder %s20, 0
      %p41 = por %p39, %p40
      %p42 = scmp.ne.s32.totalorder %s28, %s29
      %p43 = scmp.eq.s32.totalorder %s21, 1
      %p44 = por %p42, %p43
      %p46 = scmp.ne.s32.totalorder %s29, %s45
      %p47 = scmp.eq.s32.totalorder %s21, 0
      %p48 = por %p46, %p47
      %s50 = sadd.s32 %s49, 1
      %p53 = scmp.eq.s32.totalorder %s15, 1
      %p54 = scmp.ne.s32.totalorder %s49, %s51
      %p55 = scmp.eq.s32.totalorder %s15, 0
      %p56 = por %p54, %p55
      %p57 = scmp.ne.s32.totalorder %s49, %s51
      %p58 = scmp.eq.s32.totalorder %s20, 1
      %p59 = por %p57, %p58
      %p60 = scmp.ne.s32.totalorder %s51, %s52
      %p61 = scmp.eq.s32.totalorder %s20, 0
      %p62 = por %p60, %p61
      %p63 = scmp.ne.s32.totalorder %s51, %s52
      %p64 = scmp.eq.s32.totalorder %s21, 1
      %p65 = por %p63, %p64
      %p67 = scmp.ne.s32.totalorder %s52, %s66
      %p68 = scmp.eq.s32.totalorder %s21, 0
      %p69 = por %p67, %p68
      %s70 = ssub.s32 %s15, %s22
      %p71 = scmp.eq.s32.totalorder %s70, 0
      %s73 = sadd.s32 %s72, 1
      %s74 = scalar_select %p71, %s72, %s73
      %p77 = pneg %p71
      %p78 = scmp.eq.s32.totalorder %s15, 1
      %p79 = por %p77, %p78
      %p80 = scmp.ne.s32.totalorder %s72, %s75
      %p81 = scmp.eq.s32.totalorder %s15, 0
      %p82 = por %p80, %p81
      %p83 = scmp.ne.s32.totalorder %s72, %s75
      %p84 = scmp.eq.s32.totalorder %s20, 1
      %p85 = por %p83, %p84
      %p86 = scmp.ne.s32.totalorder %s75, %s76
      %p87 = scmp.eq.s32.totalorder %s20, 0
      %p88 = por %p86, %p87
      %p89 = scmp.ne.s32.totalorder %s75, %s76
      %p90 = scmp.eq.s32.totalorder %s21, 1
      %p91 = por %p89, %p90
      %p93 = scmp.ne.s32.totalorder %s76, %s92
      %p94 = scmp.eq.s32.totalorder %s21, 0
      %p95 = por %p93, %p94
      %s96 = ssub.s32 %s15, %s22
      %p97 = scmp.eq.s32.totalorder %s96, 0
      %s99 = sadd.s32 %s98, 1
      %s100 = scalar_select %p97, %s98, %s99
      %p103 = pneg %p97
      %p104 = scmp.eq.s32.totalorder %s15, 1
      %p105 = por %p103, %p104
      %p106 = scmp.ne.s32.totalorder %s98, %s101
      %p107 = scmp.eq.s32.totalorder %s15, 0
      %p108 = por %p106, %p107
      %p109 = scmp.ne.s32.totalorder %s98, %s101
      %p110 = scmp.eq.s32.totalorder %s20, 1
      %p111 = por %p109, %p110
      %p112 = scmp.ne.s32.totalorder %s101, %s102
      %p113 = scmp.eq.s32.totalorder %s20, 0
      %p114 = por %p112, %p113
      %p115 = scmp.ne.s32.totalorder %s101, %s102
      %p116 = scmp.eq.s32.totalorder %s21, 1
      %p117 = por %p115, %p116
      %p119 = scmp.ne.s32.totalorder %s102, %s118
      %p120 = scmp.eq.s32.totalorder %s21, 0
      %p121 = por %p119, %p120
      %s122 = ssub.s32 %s15, %s22
      %p123 = scmp.eq.s32.totalorder %s122, 0
      %s125 = sadd.s32 %s124, 1
      %s126 = scalar_select %p123, %s124, %s125
      %p129 = pneg %p123
      %p130 = scmp.eq.s32.totalorder %s15, 1
      %p131 = por %p129, %p130
      %p132 = scmp.ne.s32.totalorder %s124, %s127
      %p133 = scmp.eq.s32.totalorder %s15, 0
      %p134 = por %p132, %p133
      %p135 = scmp.ne.s32.totalorder %s124, %s127
      %p136 = scmp.eq.s32.totalorder %s20, 1
      %p137 = por %p135, %p136
      %p138 = scmp.ne.s32.totalorder %s127, %s128
      %p139 = scmp.eq.s32.totalorder %s20, 0
      %p140 = por %p138, %p139
      %p141 = scmp.ne.s32.totalorder %s127, %s128
      %p142 = scmp.eq.s32.totalorder %s21, 1
      %p143 = por %p141, %p142
      %p145 = scmp.ne.s32.totalorder %s128, %s144
      %p146 = scmp.eq.s32.totalorder %s21, 0
      %p147 = por %p145, %p146
      %s148 = ssub.s32 %s15, %s22
      %p149 = scmp.eq.s32.totalorder %s148, 0
      %s151 = sadd.s32 %s150, 1
      %s152 = scalar_select %p149, %s150, %s151
      %p155 = pneg %p149
      %p156 = scmp.eq.s32.totalorder %s15, 1
      %p157 = por %p155, %p156
      %p158 = scmp.ne.s32.totalorder %s150, %s153
      %p159 = scmp.eq.s32.totalorder %s15, 0
      %p160 = por %p158, %p159
      %p161 = scmp.ne.s32.totalorder %s150, %s153
      %p162 = scmp.eq.s32.totalorder %s20, 1
      %p163 = por %p161, %p162
      %p164 = scmp.ne.s32.totalorder %s153, %s154
      %p165 = scmp.eq.s32.totalorder %s20, 0
      %p166 = por %p164, %p165
      %p167 = scmp.ne.s32.totalorder %s153, %s154
      %p168 = scmp.eq.s32.totalorder %s21, 1
      %p169 = por %p167, %p168
      %p171 = scmp.ne.s32.totalorder %s154, %s170
      %p172 = scmp.eq.s32.totalorder %s21, 0
      %p173 = por %p171, %p172
      %p174 = scmp.le.s32.totalorder 1, %s15
      %p175 = scmp.lt.s32.totalorder %s15, 3
      %p176 = pnand %p174, %p175
      %p177 = pneg %p176
      // Predicated region
      $region9: #{inception_forward.7} parent=5 // pred_check
        _
      $region10: #{inception_forward.7} parent=5 // pred_check_branch
        %179 = sbr.rel (%p176) target = $region12
      $region11: #{inception_forward.7} parent=5 // pred_region
        %s180 = ssub.s32 %s15, 1
        // Predicated region
        $region13: #{inception_forward.7} parent=11 // pred_check
          %p181 = pneg %p62
        $region14: #{inception_forward.7} parent=11 // pred_check_branch
          %183 = sbr.rel (%p181) target = $region16
        $region15: #{inception_forward.7} parent=11 // pred_region
          _
        $region16: #{inception_forward.7} parent=11 // pred_fallthru
          _
      $region12: #{inception_forward.7} parent=5 // pred_fallthru
        _
      %p184 = scmp.lt.s32.totalorder %s15, 2
      // Predicated region
      $region17: #{inception_forward.7} parent=5 // pred_check
        %p185 = pneg %p184
      $region18: #{inception_forward.7} parent=5 // pred_check_branch
        %187 = sbr.rel (%p185) target = $region20
      $region19: #{inception_forward.7} parent=5 // pred_region
        // Predicated region
        $region21: #{inception_forward.7} parent=19 // pred_check
          %p188 = pneg %p35
        $region22: #{inception_forward.7} parent=19 // pred_check_branch
          %190 = sbr.rel (%p188) target = $region24
        $region23: #{inception_forward.7} parent=19 // pred_region
          %s191 = sand.u32 %s25, 1
          %s192 = scalar_lea.sflag [#allocation3], %s191
          %s193 = sand.u32 %s25, 1
          %s194 = smul.addr %s193, 256
          %s195 = scalar_lea.vmem [#allocation2], %s194
          %s196 = smul.u32 32, %s15
          %s198 = ssub.s32 4096, 4096
          %199 = vsyncadd %s192, %s198
          %s200 = smul.addr %s196, 128
          %s201 = scalar_lea.hbm %s0, %s200
          %s202 = sshll.u32 %s195, 4
          %s203 = int_to_ptr.vmem [resolvable:$true] %s202
          %208 = dma.hbm_to_vmem [thread:$0]  %s201, 4096, %s203, %s192, 128, 128, 8
        $region24: #{inception_forward.7} parent=19 // pred_fallthru
          _
      $region20: #{inception_forward.7} parent=5 // pred_fallthru
        _
      %p209 = scmp.le.s32.totalorder 1, %s15
      %p210 = scmp.lt.s32.totalorder %s15, 3
      %p211 = pnand %p209, %p210
      %p212 = pneg %p211
      // Predicated region
      $region25: #{inception_forward.7} parent=5 // pred_check
        _
      $region26: #{inception_forward.7} parent=5 // pred_check_branch
        %214 = sbr.rel (%p211) target = $region28
      $region27: #{inception_forward.7} parent=5 // pred_region
        %s215 = ssub.s32 %s15, 1
        %s216 = sand.u32 %s28, 1
        %s217 = scalar_lea.sflag [#allocation3], %s216
        %s218 = sand.u32 %s28, 1
        %s219 = smul.addr %s218, 256
        %s220 = scalar_lea.vmem [#allocation2], %s219
        // Predicated region
        $region29: #{inception_forward.7} parent=27 // pred_check
          %p221 = pneg %p41
        $region30: #{inception_forward.7} parent=27 // pred_check_branch
          %223 = sbr.rel (%p221) target = $region32
        $region31: #{inception_forward.7} parent=27 // pred_region
          %224 = dma.done %s217, 4096
        $region32: #{inception_forward.7} parent=27 // pred_fallthru
          _
        %s225 = sand.u32 %s28, 1
        %s226 = scalar_lea.sflag [#allocation3], %s225
        %s227 = sand.u32 %s28, 1
        %s228 = smul.addr %s227, 256
        %s229 = scalar_lea.vmem [#allocation2], %s228
        %p230 = pneg %p41
        %p231 = pneg %p38
        %p232 = pneg %p62
        %p233 = pneg %p59
        %p234 = pneg %p88
        %p235 = pneg %p85
        %s236 = smul.u32 32, %s20
        %p237 = scmp.lt.s32.totalorder %s236, 63
        %s238 = scalar_select %p237, %s236, 63
        %s239 = smul.addr %s238, 8
        %s240 = scalar_lea.vmem %s2, %s239
        %p241 = pneg %p114
        %p242 = pneg %p111
        %s243 = smul.u32 32, %s20
        %p244 = scmp.lt.s32.totalorder %s243, 63
        %s245 = scalar_select %p244, %s243, 63
        %s246 = smul.addr %s245, 8
        %s247 = scalar_lea.vmem %s3, %s246
        %p248 = pneg %p140
        %p249 = pneg %p137
        %s250 = smul.u32 32, %s20
        %p251 = scmp.lt.s32.totalorder %s250, 63
        %s252 = scalar_select %p251, %s250, 63
        %s253 = smul.addr %s252, 8
        %s254 = scalar_lea.vmem %s4, %s253
        %p255 = pneg %p166
        %p256 = pneg %p163
        %p257 = scmp.lt.s32.totalorder %s20, 1
        %s258 = scalar_select %p257, %s20, 1
        %s259 = smul.addr %s258, 2
        %s260 = scalar_lea.vmem %s5, %s259
        %s261 = smul.u32 32, %s20
        %s262 = smul.u32 32, %s20
        %p263 = scmp.lt.s32.totalorder %s262, 63
        %s264 = scalar_select %p263, %s262, 63
        %s265 = smul.addr %s264, 8
        %s266 = scalar_lea.vmem %s2, %s265
        %s267 = smul.u32 32, %s20
        %s268 = smul.u32 32, %s20
        %p269 = scmp.lt.s32.totalorder %s268, 63
        %s270 = scalar_select %p269, %s268, 63
        %s271 = smul.addr %s270, 8
        %s272 = scalar_lea.vmem %s3, %s271
        %s273 = smul.u32 32, %s20
        %s274 = smul.u32 32, %s20
        %p275 = scmp.lt.s32.totalorder %s274, 63
        %s276 = scalar_select %p275, %s274, 63
        %s277 = smul.addr %s276, 8
        %s278 = scalar_lea.vmem %s4, %s277
        %s279 = smul.u32 32, %s20
        %p280 = scmp.lt.s32.totalorder %s20, 1
        %s281 = scalar_select %p280, %s20, 1
        %s282 = smul.addr %s281, 2
        %s283 = scalar_lea.vmem %s5, %s282
        %v284 = vld [vmem:[%s220] sm:$0xff]
        %v285 = vld [vmem:[%s220 + $0x8] sm:$0xff]
        %v286 = vld [vmem:[%s220 + $0x10] sm:$0xff]
        %v287 = vld [vmem:[%s220 + $0x18] sm:$0xff]
        %v288 = vld [vmem:[%s220 + $0x20] sm:$0xff]
        %v289 = vld [vmem:[%s220 + $0x28] sm:$0xff]
        %v290 = vld [vmem:[%s220 + $0x30] sm:$0xff]
        %v291 = vld [vmem:[%s220 + $0x38] sm:$0xff]
        %v292 = vld [vmem:[%s220 + $0x40] sm:$0xff]
        %v293 = vld [vmem:[%s220 + $0x48] sm:$0xff]
        %v294 = vld [vmem:[%s220 + $0x50] sm:$0xff]
        %v295 = vld [vmem:[%s220 + $0x58] sm:$0xff]
        %v296 = vld [vmem:[%s220 + $0x60] sm:$0xff]
        %v297 = vld [vmem:[%s220 + $0x68] sm:$0xff]
        %v298 = vld [vmem:[%s220 + $0x70] sm:$0xff]
        %v299 = vld [vmem:[%s220 + $0x78] sm:$0xff]
        %v300 = vld [vmem:[%s220 + $0x80] sm:$0xff]
        %v301 = vld [vmem:[%s220 + $0x88] sm:$0xff]
        %v302 = vld [vmem:[%s220 + $0x90] sm:$0xff]
        %v303 = vld [vmem:[%s220 + $0x98] sm:$0xff]
        %v304 = vld [vmem:[%s220 + $0xa0] sm:$0xff]
        %v305 = vld [vmem:[%s220 + $0xa8] sm:$0xff]
        %v306 = vld [vmem:[%s220 + $0xb0] sm:$0xff]
        %v307 = vld [vmem:[%s220 + $0xb8] sm:$0xff]
        %v308 = vld [vmem:[%s220 + $0xc0] sm:$0xff]
        %v309 = vld [vmem:[%s220 + $0xc8] sm:$0xff]
        %v310 = vld [vmem:[%s220 + $0xd0] sm:$0xff]
        %v311 = vld [vmem:[%s220 + $0xd8] sm:$0xff]
        %v312 = vld [vmem:[%s220 + $0xe0] sm:$0xff]
        %v313 = vld [vmem:[%s220 + $0xe8] sm:$0xff]
        %v314 = vld [vmem:[%s220 + $0xf0] sm:$0xff]
        %v315 = vld [vmem:[%s220 + $0xf8] sm:$0xff]
        %v316 = vld [vmem:[%s1] sm:$0xff]
        %v317 = vld [vmem:[%s1 + $0x8] sm:$0xff]
        %vm318 = vcmask 130048
        %v320 = vsel %vm318, %v284, 0
        %v323 = vsel %vm318, %v285, 0
        %v326 = vsel %vm318, %v286, 0
        %v329 = vsel %vm318, %v287, 0
        %v332 = vsel %vm318, %v288, 0
        %v335 = vsel %vm318, %v289, 0
        %v338 = vsel %vm318, %v290, 0
        %v341 = vsel %vm318, %v291, 0
        %v344 = vsel %vm318, %v292, 0
        %v347 = vsel %vm318, %v293, 0
        %v350 = vsel %vm318, %v294, 0
        %v353 = vsel %vm318, %v295, 0
        %v356 = vsel %vm318, %v296, 0
        %v359 = vsel %vm318, %v297, 0
        %v362 = vsel %vm318, %v298, 0
        %v365 = vsel %vm318, %v299, 0
        %v368 = vsel %vm318, %v300, 0
        %v371 = vsel %vm318, %v301, 0
        %v374 = vsel %vm318, %v302, 0
        %v377 = vsel %vm318, %v303, 0
        %v380 = vsel %vm318, %v304, 0
        %v383 = vsel %vm318, %v305, 0
        %v386 = vsel %vm318, %v306, 0
        %v389 = vsel %vm318, %v307, 0
        %v392 = vsel %vm318, %v308, 0
        %v395 = vsel %vm318, %v309, 0
        %v398 = vsel %vm318, %v310, 0
        %v401 = vsel %vm318, %v311, 0
        %v404 = vsel %vm318, %v312, 0
        %v407 = vsel %vm318, %v313, 0
        %v410 = vsel %vm318, %v314, 0
        %v413 = vsel %vm318, %v315, 0
        %415 = vmatprep.subr.mxu0 0.0
        %416 = vmatpush1.msra.mxu0 %v316
        %417 = vmatprep.subr.mxu0 0.0
        %418 = vmatpush1.msra.mxu0 %v317
        %419 = vmatprep.subr.mxu0 0.0
        %420 = vmatpush1.msra.mxu0 0.0
        %421 = vmatprep.subr.mxu0 0.0
        %422 = vmatpush1.msra.mxu0 0.0
        %423 = vmatprep.subr.mxu0 0.0
        %424 = vmatpush1.msra.mxu0 0.0
        %425 = vmatprep.subr.mxu0 0.0
        %426 = vmatpush1.msra.mxu0 0.0
        %427 = vmatprep.subr.mxu0 0.0
        %428 = vmatpush1.msra.mxu0 0.0
        %429 = vmatprep.subr.mxu0 0.0
        %430 = vmatpush1.msra.mxu0 0.0
        %431 = vmatprep.subr.mxu0 0.0
        %432 = vmatpush1.msra.mxu0 0.0
        %433 = vmatprep.subr.mxu0 0.0
        %434 = vmatpush1.msra.mxu0 0.0
        %435 = vmatprep.subr.mxu0 0.0
        %436 = vmatpush1.msra.mxu0 0.0
        %437 = vmatprep.subr.mxu0 0.0
        %438 = vmatpush1.msra.mxu0 0.0
        %439 = vmatprep.subr.mxu0 0.0
        %440 = vmatpush1.msra.mxu0 0.0
        %441 = vmatprep.subr.mxu0 0.0
        %442 = vmatpush1.msra.mxu0 0.0
        %443 = vmatprep.subr.mxu0 0.0
        %444 = vmatpush1.msra.mxu0 0.0
        %445 = vmatprep.subr.mxu0 0.0
        %446 = vmatpush1.msra.mxu0 0.0
        %447 = vmatprep.subr.mxu0 0.0
        %448 = vmatpush1.msra.mxu0 0.0
        %449 = vmatprep.subr.mxu0 0.0
        %450 = vmatpush1.msra.mxu0 0.0
        %451 = vmatprep.subr.mxu0 0.0
        %452 = vmatpush1.msra.mxu0 0.0
        %453 = vmatprep.subr.mxu0 0.0
        %454 = vmatpush1.msra.mxu0 0.0
        %455 = vmatprep.subr.mxu0 0.0
        %456 = vmatpush1.msra.mxu0 0.0
        %457 = vmatprep.subr.mxu0 0.0
        %458 = vmatpush1.msra.mxu0 0.0
        %459 = vmatprep.subr.mxu0 0.0
        %460 = vmatpush1.msra.mxu0 0.0
        %461 = vmatprep.subr.mxu0 0.0
        %462 = vmatpush1.msra.mxu0 0.0
        %463 = vmatprep.subr.mxu0 0.0
        %464 = vmatpush1.msra.mxu0 0.0
        %465 = vmatprep.subr.mxu0 0.0
        %466 = vmatpush1.msra.mxu0 0.0
        %467 = vmatprep.subr.mxu0 0.0
        %468 = vmatpush1.msra.mxu0 0.0
        %469 = vmatprep.subr.mxu0 0.0
        %470 = vmatpush1.msra.mxu0 0.0
        %471 = vmatprep.subr.mxu0 0.0
        %472 = vmatpush1.msra.mxu0 0.0
        %473 = vmatprep.subr.mxu0 0.0
        %474 = vmatpush1.msra.mxu0 0.0
        %475 = vmatprep.subr.mxu0 0.0
        %476 = vmatpush1.msra.mxu0 0.0
        %477 = vmatprep.subr.mxu0 0.0
        %478 = vmatpush1.msra.mxu0 0.0
        %479 = vmatprep.mubr.f32.mxu0 0.0
        %480 = vmatmul.mubr.f32.gmra.mrb[0].mxu0 %v320
        %v481 = vpop.f32.mrb[0].mxu0
        %v482 = vadd.f32 0.0, %v481
        %v483 = vpop.f32.mrb[0].mxu0
        %484 = vmatprep.mubr.f32.mxu0 0.0
        %485 = vmatmul.mubr.f32.gmra.mrb[0].mxu0 %v323
        %v486 = vpop.f32.mrb[0].mxu0
        %v487 = vadd.f32 0.0, %v486
        %v488 = vpop.f32.mrb[0].mxu0
        %489 = vmatprep.mubr.f32.mxu0 0.0
        %490 = vmatmul.mubr.f32.gmra.mrb[0].mxu0 %v326
        %v491 = vpop.f32.mrb[0].mxu0
        %v492 = vadd.f32 0.0, %v491
        %v493 = vpop.f32.mrb[0].mxu0
        %494 = vmatprep.mubr.f32.mxu0 0.0
        %495 = vmatmul.mubr.f32.gmra.mrb[0].mxu0 %v329
        %v496 = vpop.f32.mrb[0].mxu0
        %v497 = vadd.f32 0.0, %v496
        %v498 = vpop.f32.mrb[0].mxu0
        %499 = vmatprep.mubr.f32.mxu0 0.0
        %500 = vmatmul.mubr.f32.gmra.mrb[0].mxu0 %v332
        %v501 = vpop.f32.mrb[0].mxu0
        %v502 = vadd.f32 0.0, %v501
        %v503 = vpop.f32.mrb[0].mxu0
        %504 = vmatprep.mubr.f32.mxu0 0.0
        %505 = vmatmul.mubr.f32.gmra.mrb[0].mxu0 %v335
        %v506 = vpop.f32.mrb[0].mxu0
        %v507 = vadd.f32 0.0, %v506
        %v508 = vpop.f32.mrb[0].mxu0
        %509 = vmatprep.mubr.f32.mxu0 0.0
        %510 = vmatmul.mubr.f32.gmra.mrb[0].mxu0 %v338
        %v511 = vpop.f32.mrb[0].mxu0
        %v512 = vadd.f32 0.0, %v511
        %v513 = vpop.f32.mrb[0].mxu0
        %514 = vmatprep.mubr.f32.mxu0 0.0
        %515 = vmatmul.mubr.f32.gmra.mrb[0].mxu0 %v341
        %v516 = vpop.f32.mrb[0].mxu0
        %v517 = vadd.f32 0.0, %v516
        %v518 = vpop.f32.mrb[0].mxu0
        %519 = vmatprep.mubr.f32.mxu0 0.0
        %520 = vmatmul.mubr.f32.gmra.mrb[0].mxu0 %v344
        %v521 = vpop.f32.mrb[0].mxu0
        %v522 = vadd.f32 0.0, %v521
        %v523 = vpop.f32.mrb[0].mxu0
        %524 = vmatprep.mubr.f32.mxu0 0.0
        %525 = vmatmul.mubr.f32.gmra.mrb[0].mxu0 %v347
        %v526 = vpop.f32.mrb[0].mxu0
        %v527 = vadd.f32 0.0, %v526
        %v528 = vpop.f32.mrb[0].mxu0
        %529 = vmatprep.mubr.f32.mxu0 0.0
        %530 = vmatmul.mubr.f32.gmra.mrb[0].mxu0 %v350
        %v531 = vpop.f32.mrb[0].mxu0
        %v532 = vadd.f32 0.0, %v531
        %v533 = vpop.f32.mrb[0].mxu0
        %534 = vmatprep.mubr.f32.mxu0 0.0
        %535 = vmatmul.mubr.f32.gmra.mrb[0].mxu0 %v353
        %v536 = vpop.f32.mrb[0].mxu0
        %v537 = vadd.f32 0.0, %v536
        %v538 = vpop.f32.mrb[0].mxu0
        %539 = vmatprep.mubr.f32.mxu0 0.0
        %540 = vmatmul.mubr.f32.gmra.mrb[0].mxu0 %v356
        %v541 = vpop.f32.mrb[0].mxu0
        %v542 = vadd.f32 0.0, %v541
        %v543 = vpop.f32.mrb[0].mxu0
        %544 = vmatprep.mubr.f32.mxu0 0.0
        %545 = vmatmul.mubr.f32.gmra.mrb[0].mxu0 %v359
        %v546 = vpop.f32.mrb[0].mxu0
        %v547 = vadd.f32 0.0, %v546
        %v548 = vpop.f32.mrb[0].mxu0
        %549 = vmatprep.mubr.f32.mxu0 0.0
        %550 = vmatmul.mubr.f32.gmra.mrb[0].mxu0 %v362
        %v551 = vpop.f32.mrb[0].mxu0
        %v552 = vadd.f32 0.0, %v551
        %v553 = vpop.f32.mrb[0].mxu0
        %554 = vmatprep.mubr.f32.mxu0 0.0
        %555 = vmatmul.mubr.f32.gmra.mrb[0].mxu0 %v365
        %v556 = vpop.f32.mrb[0].mxu0
        %v557 = vadd.f32 0.0, %v556
        %v558 = vpop.f32.mrb[0].mxu0
        %559 = vmatprep.mubr.f32.mxu0 0.0
        %560 = vmatmul.mubr.f32.gmra.mrb[0].mxu0 %v368
        %v561 = vpop.f32.mrb[0].mxu0
        %v562 = vadd.f32 0.0, %v561
        %v563 = vpop.f32.mrb[0].mxu0
        %564 = vmatprep.mubr.f32.mxu0 0.0
        %565 = vmatmul.mubr.f32.gmra.mrb[0].mxu0 %v371
        %v566 = vpop.f32.mrb[0].mxu0
        %v567 = vadd.f32 0.0, %v566
        %v568 = vpop.f32.mrb[0].mxu0
        %569 = vmatprep.mubr.f32.mxu0 0.0
        %570 = vmatmul.mubr.f32.gmra.mrb[0].mxu0 %v374
        %v571 = vpop.f32.mrb[0].mxu0
        %v572 = vadd.f32 0.0, %v571
        %v573 = vpop.f32.mrb[0].mxu0
        %574 = vmatprep.mubr.f32.mxu0 0.0
        %575 = vmatmul.mubr.f32.gmra.mrb[0].mxu0 %v377
        %v576 = vpop.f32.mrb[0].mxu0
        %v577 = vadd.f32 0.0, %v576
        %v578 = vpop.f32.mrb[0].mxu0
        %579 = vmatprep.mubr.f32.mxu0 0.0
        %580 = vmatmul.mubr.f32.gmra.mrb[0].mxu0 %v380
        %v581 = vpop.f32.mrb[0].mxu0
        %v582 = vadd.f32 0.0, %v581
        %v583 = vpop.f32.mrb[0].mxu0
        %584 = vmatprep.mubr.f32.mxu0 0.0
        %585 = vmatmul.mubr.f32.gmra.mrb[0].mxu0 %v383
        %v586 = vpop.f32.mrb[0].mxu0
        %v587 = vadd.f32 0.0, %v586
        %v588 = vpop.f32.mrb[0].mxu0
        %589 = vmatprep.mubr.f32.mxu0 0.0
        %590 = vmatmul.mubr.f32.gmra.mrb[0].mxu0 %v386
        %v591 = vpop.f32.mrb[0].mxu0
        %v592 = vadd.f32 0.0, %v591
        %v593 = vpop.f32.mrb[0].mxu0
        %594 = vmatprep.mubr.f32.mxu0 0.0
        %595 = vmatmul.mubr.f32.gmra.mrb[0].mxu0 %v389
        %v596 = vpop.f32.mrb[0].mxu0
        %v597 = vadd.f32 0.0, %v596
        %v598 = vpop.f32.mrb[0].mxu0
        %599 = vmatprep.mubr.f32.mxu0 0.0
        %600 = vmatmul.mubr.f32.gmra.mrb[0].mxu0 %v392
        %v601 = vpop.f32.mrb[0].mxu0
        %v602 = vadd.f32 0.0, %v601
        %v603 = vpop.f32.mrb[0].mxu0
        %604 = vmatprep.mubr.f32.mxu0 0.0
        %605 = vmatmul.mubr.f32.gmra.mrb[0].mxu0 %v395
        %v606 = vpop.f32.mrb[0].mxu0
        %v607 = vadd.f32 0.0, %v606
        %v608 = vpop.f32.mrb[0].mxu0
        %609 = vmatprep.mubr.f32.mxu0 0.0
        %610 = vmatmul.mubr.f32.gmra.mrb[0].mxu0 %v398
        %v611 = vpop.f32.mrb[0].mxu0
        %v612 = vadd.f32 0.0, %v611
        %v613 = vpop.f32.mrb[0].mxu0
        %614 = vmatprep.mubr.f32.mxu0 0.0
        %615 = vmatmul.mubr.f32.gmra.mrb[0].mxu0 %v401
        %v616 = vpop.f32.mrb[0].mxu0
        %v617 = vadd.f32 0.0, %v616
        %v618 = vpop.f32.mrb[0].mxu0
        %619 = vmatprep.mubr.f32.mxu0 0.0
        %620 = vmatmul.mubr.f32.gmra.mrb[0].mxu0 %v404
        %v621 = vpop.f32.mrb[0].mxu0
        %v622 = vadd.f32 0.0, %v621
        %v623 = vpop.f32.mrb[0].mxu0
        %624 = vmatprep.mubr.f32.mxu0 0.0
        %625 = vmatmul.mubr.f32.gmra.mrb[0].mxu0 %v407
        %v626 = vpop.f32.mrb[0].mxu0
        %v627 = vadd.f32 0.0, %v626
        %v628 = vpop.f32.mrb[0].mxu0
        %629 = vmatprep.mubr.f32.mxu0 0.0
        %630 = vmatmul.mubr.f32.gmra.mrb[0].mxu0 %v410
        %v631 = vpop.f32.mrb[0].mxu0
        %v632 = vadd.f32 0.0, %v631
        %v633 = vpop.f32.mrb[0].mxu0
        %634 = vmatprep.mubr.f32.mxu0 0.0
        %635 = vmatmul.mubr.f32.gmra.mrb[0].mxu0 %v413
        %v636 = vpop.f32.mrb[0].mxu0
        %v637 = vadd.f32 0.0, %v636
        %v638 = vpop.f32.mrb[0].mxu0
        %639 = vdwg.mxu0
        %vm640 = vcmask 64512
        %641 = vst.msk [vmem:[%s266] sm:$0xff] %vm640, %v482
        %642 = vst.msk [vmem:[%s266 + $0x8] sm:$0xff] %vm640, %v487
        %643 = vst.msk [vmem:[%s266 + $0x10] sm:$0xff] %vm640, %v492
        %644 = vst.msk [vmem:[%s266 + $0x18] sm:$0xff] %vm640, %v497
        %645 = vst.msk [vmem:[%s266 + $0x20] sm:$0xff] %vm640, %v502
        %646 = vst.msk [vmem:[%s266 + $0x28] sm:$0xff] %vm640, %v507
        %647 = vst.msk [vmem:[%s266 + $0x30] sm:$0xff] %vm640, %v512
        %648 = vst.msk [vmem:[%s266 + $0x38] sm:$0xff] %vm640, %v517
        %649 = vst.msk [vmem:[%s266 + $0x40] sm:$0xff] %vm640, %v522
        %650 = vst.msk [vmem:[%s266 + $0x48] sm:$0xff] %vm640, %v527
        %651 = vst.msk [vmem:[%s266 + $0x50] sm:$0xff] %vm640, %v532
        %652 = vst.msk [vmem:[%s266 + $0x58] sm:$0xff] %vm640, %v537
        %653 = vst.msk [vmem:[%s266 + $0x60] sm:$0xff] %vm640, %v542
        %654 = vst.msk [vmem:[%s266 + $0x68] sm:$0xff] %vm640, %v547
        %655 = vst.msk [vmem:[%s266 + $0x70] sm:$0xff] %vm640, %v552
        %656 = vst.msk [vmem:[%s266 + $0x78] sm:$0xff] %vm640, %v557
        %657 = vst.msk [vmem:[%s266 + $0x80] sm:$0xff] %vm640, %v562
        %658 = vst.msk [vmem:[%s266 + $0x88] sm:$0xff] %vm640, %v567
        %659 = vst.msk [vmem:[%s266 + $0x90] sm:$0xff] %vm640, %v572
        %660 = vst.msk [vmem:[%s266 + $0x98] sm:$0xff] %vm640, %v577
        %661 = vst.msk [vmem:[%s266 + $0xa0] sm:$0xff] %vm640, %v582
        %662 = vst.msk [vmem:[%s266 + $0xa8] sm:$0xff] %vm640, %v587
        %663 = vst.msk [vmem:[%s266 + $0xb0] sm:$0xff] %vm640, %v592
        %664 = vst.msk [vmem:[%s266 + $0xb8] sm:$0xff] %vm640, %v597
        %665 = vst.msk [vmem:[%s266 + $0xc0] sm:$0xff] %vm640, %v602
        %666 = vst.msk [vmem:[%s266 + $0xc8] sm:$0xff] %vm640, %v607
        %667 = vst.msk [vmem:[%s266 + $0xd0] sm:$0xff] %vm640, %v612
        %668 = vst.msk [vmem:[%s266 + $0xd8] sm:$0xff] %vm640, %v617
        %669 = vst.msk [vmem:[%s266 + $0xe0] sm:$0xff] %vm640, %v622
        %670 = vst.msk [vmem:[%s266 + $0xe8] sm:$0xff] %vm640, %v627
        %671 = vst.msk [vmem:[%s266 + $0xf0] sm:$0xff] %vm640, %v632
        %672 = vst.msk [vmem:[%s266 + $0xf8] sm:$0xff] %vm640, %v637
        %705 = vrot.lane.b32.xlu0 %v482, 120
        %v706 = vpop.permute.xlu0 %705
        %707 = vrot.lane.b32.xlu0 %v487, 120
        %v708 = vpop.permute.xlu0 %707
        %709 = vrot.lane.b32.xlu0 %v492, 120
        %v710 = vpop.permute.xlu0 %709
        %711 = vrot.lane.b32.xlu0 %v497, 120
        %v712 = vpop.permute.xlu0 %711
        %713 = vrot.lane.b32.xlu0 %v502, 120
        %v714 = vpop.permute.xlu0 %713
        %715 = vrot.lane.b32.xlu0 %v507, 120
        %v716 = vpop.permute.xlu0 %715
        %717 = vrot.lane.b32.xlu0 %v512, 120
        %v718 = vpop.permute.xlu0 %717
        %719 = vrot.lane.b32.xlu0 %v517, 120
        %v720 = vpop.permute.xlu0 %719
        %721 = vrot.lane.b32.xlu0 %v522, 120
        %v722 = vpop.permute.xlu0 %721
        %723 = vrot.lane.b32.xlu0 %v527, 120
        %v724 = vpop.permute.xlu0 %723
        %725 = vrot.lane.b32.xlu0 %v532, 120
        %v726 = vpop.permute.xlu0 %725
        %727 = vrot.lane.b32.xlu0 %v537, 120
        %v728 = vpop.permute.xlu0 %727
        %729 = vrot.lane.b32.xlu0 %v542, 120
        %v730 = vpop.permute.xlu0 %729
        %731 = vrot.lane.b32.xlu0 %v547, 120
        %v732 = vpop.permute.xlu0 %731
        %733 = vrot.lane.b32.xlu0 %v552, 120
        %v734 = vpop.permute.xlu0 %733
        %735 = vrot.lane.b32.xlu0 %v557, 120
        %v736 = vpop.permute.xlu0 %735
        %737 = vrot.lane.b32.xlu0 %v562, 120
        %v738 = vpop.permute.xlu0 %737
        %739 = vrot.lane.b32.xlu0 %v567, 120
        %v740 = vpop.permute.xlu0 %739
        %741 = vrot.lane.b32.xlu0 %v572, 120
        %v742 = vpop.permute.xlu0 %741
        %743 = vrot.lane.b32.xlu0 %v577, 120
        %v744 = vpop.permute.xlu0 %743
        %745 = vrot.lane.b32.xlu0 %v582, 120
        %v746 = vpop.permute.xlu0 %745
        %747 = vrot.lane.b32.xlu0 %v587, 120
        %v748 = vpop.permute.xlu0 %747
        %749 = vrot.lane.b32.xlu0 %v592, 120
        %v750 = vpop.permute.xlu0 %749
        %751 = vrot.lane.b32.xlu0 %v597, 120
        %v752 = vpop.permute.xlu0 %751
        %753 = vrot.lane.b32.xlu0 %v602, 120
        %v754 = vpop.permute.xlu0 %753
        %755 = vrot.lane.b32.xlu0 %v607, 120
        %v756 = vpop.permute.xlu0 %755
        %757 = vrot.lane.b32.xlu0 %v612, 120
        %v758 = vpop.permute.xlu0 %757
        %759 = vrot.lane.b32.xlu0 %v617, 120
        %v760 = vpop.permute.xlu0 %759
        %761 = vrot.lane.b32.xlu0 %v622, 120
        %v762 = vpop.permute.xlu0 %761
        %763 = vrot.lane.b32.xlu0 %v627, 120
        %v764 = vpop.permute.xlu0 %763
        %765 = vrot.lane.b32.xlu0 %v632, 120
        %v766 = vpop.permute.xlu0 %765
        %767 = vrot.lane.b32.xlu0 %v637, 120
        %v768 = vpop.permute.xlu0 %767
        %801 = vst.msk [vmem:[%s272] sm:$0xff] %vm640, %v706
        %802 = vst.msk [vmem:[%s272 + $0x8] sm:$0xff] %vm640, %v708
        %803 = vst.msk [vmem:[%s272 + $0x10] sm:$0xff] %vm640, %v710
        %804 = vst.msk [vmem:[%s272 + $0x18] sm:$0xff] %vm640, %v712
        %805 = vst.msk [vmem:[%s272 + $0x20] sm:$0xff] %vm640, %v714
        %806 = vst.msk [vmem:[%s272 + $0x28] sm:$0xff] %vm640, %v716
        %807 = vst.msk [vmem:[%s272 + $0x30] sm:$0xff] %vm640, %v718
        %808 = vst.msk [vmem:[%s272 + $0x38] sm:$0xff] %vm640, %v720
        %809 = vst.msk [vmem:[%s272 + $0x40] sm:$0xff] %vm640, %v722
        %810 = vst.msk [vmem:[%s272 + $0x48] sm:$0xff] %vm640, %v724
        %811 = vst.msk [vmem:[%s272 + $0x50] sm:$0xff] %vm640, %v726
        %812 = vst.msk [vmem:[%s272 + $0x58] sm:$0xff] %vm640, %v728
        %813 = vst.msk [vmem:[%s272 + $0x60] sm:$0xff] %vm640, %v730
        %814 = vst.msk [vmem:[%s272 + $0x68] sm:$0xff] %vm640, %v732
        %815 = vst.msk [vmem:[%s272 + $0x70] sm:$0xff] %vm640, %v734
        %816 = vst.msk [vmem:[%s272 + $0x78] sm:$0xff] %vm640, %v736
        %817 = vst.msk [vmem:[%s272 + $0x80] sm:$0xff] %vm640, %v738
        %818 = vst.msk [vmem:[%s272 + $0x88] sm:$0xff] %vm640, %v740
        %819 = vst.msk [vmem:[%s272 + $0x90] sm:$0xff] %vm640, %v742
        %820 = vst.msk [vmem:[%s272 + $0x98] sm:$0xff] %vm640, %v744
        %821 = vst.msk [vmem:[%s272 + $0xa0] sm:$0xff] %vm640, %v746
        %822 = vst.msk [vmem:[%s272 + $0xa8] sm:$0xff] %vm640, %v748
        %823 = vst.msk [vmem:[%s272 + $0xb0] sm:$0xff] %vm640, %v750
        %824 = vst.msk [vmem:[%s272 + $0xb8] sm:$0xff] %vm640, %v752
        %825 = vst.msk [vmem:[%s272 + $0xc0] sm:$0xff] %vm640, %v754
        %826 = vst.msk [vmem:[%s272 + $0xc8] sm:$0xff] %vm640, %v756
        %827 = vst.msk [vmem:[%s272 + $0xd0] sm:$0xff] %vm640, %v758
        %828 = vst.msk [vmem:[%s272 + $0xd8] sm:$0xff] %vm640, %v760
        %829 = vst.msk [vmem:[%s272 + $0xe0] sm:$0xff] %vm640, %v762
        %830 = vst.msk [vmem:[%s272 + $0xe8] sm:$0xff] %vm640, %v764
        %831 = vst.msk [vmem:[%s272 + $0xf0] sm:$0xff] %vm640, %v766
        %832 = vst.msk [vmem:[%s272 + $0xf8] sm:$0xff] %vm640, %v768
        %833 = vrot.lane.b32.xlu0 %v482, 112
        %v834 = vpop.permute.xlu0 %833
        %835 = vrot.lane.b32.xlu0 %v487, 112
        %v836 = vpop.permute.xlu0 %835
        %837 = vrot.lane.b32.xlu0 %v492, 112
        %v838 = vpop.permute.xlu0 %837
        %839 = vrot.lane.b32.xlu0 %v497, 112
        %v840 = vpop.permute.xlu0 %839
        %841 = vrot.lane.b32.xlu0 %v502, 112
        %v842 = vpop.permute.xlu0 %841
        %843 = vrot.lane.b32.xlu0 %v507, 112
        %v844 = vpop.permute.xlu0 %843
        %845 = vrot.lane.b32.xlu0 %v512, 112
        %v846 = vpop.permute.xlu0 %845
        %847 = vrot.lane.b32.xlu0 %v517, 112
        %v848 = vpop.permute.xlu0 %847
        %849 = vrot.lane.b32.xlu0 %v522, 112
        %v850 = vpop.permute.xlu0 %849
        %851 = vrot.lane.b32.xlu0 %v527, 112
        %v852 = vpop.permute.xlu0 %851
        %853 = vrot.lane.b32.xlu0 %v532, 112
        %v854 = vpop.permute.xlu0 %853
        %855 = vrot.lane.b32.xlu0 %v537, 112
        %v856 = vpop.permute.xlu0 %855
        %857 = vrot.lane.b32.xlu0 %v542, 112
        %v858 = vpop.permute.xlu0 %857
        %859 = vrot.lane.b32.xlu0 %v547, 112
        %v860 = vpop.permute.xlu0 %859
        %861 = vrot.lane.b32.xlu0 %v552, 112
        %v862 = vpop.permute.xlu0 %861
        %863 = vrot.lane.b32.xlu0 %v557, 112
        %v864 = vpop.permute.xlu0 %863
        %865 = vrot.lane.b32.xlu0 %v562, 112
        %v866 = vpop.permute.xlu0 %865
        %867 = vrot.lane.b32.xlu0 %v567, 112
        %v868 = vpop.permute.xlu0 %867
        %869 = vrot.lane.b32.xlu0 %v572, 112
        %v870 = vpop.permute.xlu0 %869
        %871 = vrot.lane.b32.xlu0 %v577, 112
        %v872 = vpop.permute.xlu0 %871
        %873 = vrot.lane.b32.xlu0 %v582, 112
        %v874 = vpop.permute.xlu0 %873
        %875 = vrot.lane.b32.xlu0 %v587, 112
        %v876 = vpop.permute.xlu0 %875
        %877 = vrot.lane.b32.xlu0 %v592, 112
        %v878 = vpop.permute.xlu0 %877
        %879 = vrot.lane.b32.xlu0 %v597, 112
        %v880 = vpop.permute.xlu0 %879
        %881 = vrot.lane.b32.xlu0 %v602, 112
        %v882 = vpop.permute.xlu0 %881
        %883 = vrot.lane.b32.xlu0 %v607, 112
        %v884 = vpop.permute.xlu0 %883
        %885 = vrot.lane.b32.xlu0 %v612, 112
        %v886 = vpop.permute.xlu0 %885
        %887 = vrot.lane.b32.xlu0 %v617, 112
        %v888 = vpop.permute.xlu0 %887
        %889 = vrot.lane.b32.xlu0 %v622, 112
        %v890 = vpop.permute.xlu0 %889
        %891 = vrot.lane.b32.xlu0 %v627, 112
        %v892 = vpop.permute.xlu0 %891
        %893 = vrot.lane.b32.xlu0 %v632, 112
        %v894 = vpop.permute.xlu0 %893
        %895 = vrot.lane.b32.xlu0 %v637, 112
        %v896 = vpop.permute.xlu0 %895
        %929 = vst.msk [vmem:[%s278] sm:$0xff] %vm640, %v834
        %930 = vst.msk [vmem:[%s278 + $0x8] sm:$0xff] %vm640, %v836
        %931 = vst.msk [vmem:[%s278 + $0x10] sm:$0xff] %vm640, %v838
        %932 = vst.msk [vmem:[%s278 + $0x18] sm:$0xff] %vm640, %v840
        %933 = vst.msk [vmem:[%s278 + $0x20] sm:$0xff] %vm640, %v842
        %934 = vst.msk [vmem:[%s278 + $0x28] sm:$0xff] %vm640, %v844
        %935 = vst.msk [vmem:[%s278 + $0x30] sm:$0xff] %vm640, %v846
        %936 = vst.msk [vmem:[%s278 + $0x38] sm:$0xff] %vm640, %v848
        %937 = vst.msk [vmem:[%s278 + $0x40] sm:$0xff] %vm640, %v850
        %938 = vst.msk [vmem:[%s278 + $0x48] sm:$0xff] %vm640, %v852
        %939 = vst.msk [vmem:[%s278 + $0x50] sm:$0xff] %vm640, %v854
        %940 = vst.msk [vmem:[%s278 + $0x58] sm:$0xff] %vm640, %v856
        %941 = vst.msk [vmem:[%s278 + $0x60] sm:$0xff] %vm640, %v858
        %942 = vst.msk [vmem:[%s278 + $0x68] sm:$0xff] %vm640, %v860
        %943 = vst.msk [vmem:[%s278 + $0x70] sm:$0xff] %vm640, %v862
        %944 = vst.msk [vmem:[%s278 + $0x78] sm:$0xff] %vm640, %v864
        %945 = vst.msk [vmem:[%s278 + $0x80] sm:$0xff] %vm640, %v866
        %946 = vst.msk [vmem:[%s278 + $0x88] sm:$0xff] %vm640, %v868
        %947 = vst.msk [vmem:[%s278 + $0x90] sm:$0xff] %vm640, %v870
        %948 = vst.msk [vmem:[%s278 + $0x98] sm:$0xff] %vm640, %v872
        %949 = vst.msk [vmem:[%s278 + $0xa0] sm:$0xff] %vm640, %v874
        %950 = vst.msk [vmem:[%s278 + $0xa8] sm:$0xff] %vm640, %v876
        %951 = vst.msk [vmem:[%s278 + $0xb0] sm:$0xff] %vm640, %v878
        %952 = vst.msk [vmem:[%s278 + $0xb8] sm:$0xff] %vm640, %v880
        %953 = vst.msk [vmem:[%s278 + $0xc0] sm:$0xff] %vm640, %v882
        %954 = vst.msk [vmem:[%s278 + $0xc8] sm:$0xff] %vm640, %v884
        %955 = vst.msk [vmem:[%s278 + $0xd0] sm:$0xff] %vm640, %v886
        %956 = vst.msk [vmem:[%s278 + $0xd8] sm:$0xff] %vm640, %v888
        %957 = vst.msk [vmem:[%s278 + $0xe0] sm:$0xff] %vm640, %v890
        %958 = vst.msk [vmem:[%s278 + $0xe8] sm:$0xff] %vm640, %v892
        %959 = vst.msk [vmem:[%s278 + $0xf0] sm:$0xff] %vm640, %v894
        %960 = vst.msk [vmem:[%s278 + $0xf8] sm:$0xff] %vm640, %v896
        %vm961 = vcmask 195584
        %v962 = vsel %vm961, %v482, 0.0
        %v963 = vsel %vm961, %v487, 0.0
        %v964 = vadd.f32 %v962, %v963
        %v965 = vsel %vm961, %v492, 0.0
        %v966 = vadd.f32 %v964, %v965
        %v967 = vsel %vm961, %v497, 0.0
        %v968 = vadd.f32 %v966, %v967
        %v969 = vsel %vm961, %v502, 0.0
        %v970 = vadd.f32 %v968, %v969
        %v971 = vsel %vm961, %v507, 0.0
        %v972 = vadd.f32 %v970, %v971
        %v973 = vsel %vm961, %v512, 0.0
        %v974 = vadd.f32 %v972, %v973
        %v975 = vsel %vm961, %v517, 0.0
        %v976 = vadd.f32 %v974, %v975
        %v977 = vsel %vm961, %v522, 0.0
        %v978 = vadd.f32 %v976, %v977
        %v979 = vsel %vm961, %v527, 0.0
        %v980 = vadd.f32 %v978, %v979
        %v981 = vsel %vm961, %v532, 0.0
        %v982 = vadd.f32 %v980, %v981
        %v983 = vsel %vm961, %v537, 0.0
        %v984 = vadd.f32 %v982, %v983
        %v985 = vsel %vm961, %v542, 0.0
        %v986 = vadd.f32 %v984, %v985
        %v987 = vsel %vm961, %v547, 0.0
        %v988 = vadd.f32 %v986, %v987
        %v989 = vsel %vm961, %v552, 0.0
        %v990 = vadd.f32 %v988, %v989
        %v991 = vsel %vm961, %v557, 0.0
        %v992 = vadd.f32 %v990, %v991
        %v993 = vsel %vm961, %v562, 0.0
        %v994 = vadd.f32 %v992, %v993
        %v995 = vsel %vm961, %v567, 0.0
        %v996 = vadd.f32 %v994, %v995
        %v997 = vsel %vm961, %v572, 0.0
        %v998 = vadd.f32 %v996, %v997
        %v999 = vsel %vm961, %v577, 0.0
        %v1000 = vadd.f32 %v998, %v999
        %v1001 = vsel %vm961, %v582, 0.0
        %v1002 = vadd.f32 %v1000, %v1001
        %v1003 = vsel %vm961, %v587, 0.0
        %v1004 = vadd.f32 %v1002, %v1003
        %v1005 = vsel %vm961, %v592, 0.0
        %v1006 = vadd.f32 %v1004, %v1005
        %v1007 = vsel %vm961, %v597, 0.0
        %v1008 = vadd.f32 %v1006, %v1007
        %v1009 = vsel %vm961, %v602, 0.0
        %v1010 = vadd.f32 %v1008, %v1009
        %v1011 = vsel %vm961, %v607, 0.0
        %v1012 = vadd.f32 %v1010, %v1011
        %v1013 = vsel %vm961, %v612, 0.0
        %v1014 = vadd.f32 %v1012, %v1013
        %v1015 = vsel %vm961, %v617, 0.0
        %v1016 = vadd.f32 %v1014, %v1015
        %v1017 = vsel %vm961, %v622, 0.0
        %v1018 = vadd.f32 %v1016, %v1017
        %v1019 = vsel %vm961, %v627, 0.0
        %v1020 = vadd.f32 %v1018, %v1019
        %v1021 = vsel %vm961, %v632, 0.0
        %v1022 = vadd.f32 %v1020, %v1021
        %v1023 = vsel %vm961, %v637, 0.0
        %v1024 = vadd.f32 %v1022, %v1023
        %v1025 = vrot.slane %v1024, 4
        %v1026 = vadd.f32 %v1024, %v1025
        %v1027 = vrot.slane %v1026, 2
        %v1028 = vadd.f32 %v1026, %v1027
        %v1029 = vrot.slane %v1028, 1
        %v1030 = vadd.f32 %v1028, %v1029
        %v1031 = vmul.f32 %v1030, 0.00390625
        %v1032 = vsub.f32 %v482, %v1031
        %v1033 = vsub.f32 %v487, %v1031
        %v1034 = vsub.f32 %v492, %v1031
        %v1035 = vsub.f32 %v497, %v1031
        %v1036 = vsub.f32 %v502, %v1031
        %v1037 = vsub.f32 %v507, %v1031
        %v1038 = vsub.f32 %v512, %v1031
        %v1039 = vsub.f32 %v517, %v1031
        %v1040 = vsub.f32 %v522, %v1031
        %v1041 = vsub.f32 %v527, %v1031
        %v1042 = vsub.f32 %v532, %v1031
        %v1043 = vsub.f32 %v537, %v1031
        %v1044 = vsub.f32 %v542, %v1031
        %v1045 = vsub.f32 %v547, %v1031
        %v1046 = vsub.f32 %v552, %v1031
        %v1047 = vsub.f32 %v557, %v1031
        %v1048 = vsub.f32 %v562, %v1031
        %v1049 = vsub.f32 %v567, %v1031
        %v1050 = vsub.f32 %v572, %v1031
        %v1051 = vsub.f32 %v577, %v1031
        %v1052 = vsub.f32 %v582, %v1031
        %v1053 = vsub.f32 %v587, %v1031
        %v1054 = vsub.f32 %v592, %v1031
        %v1055 = vsub.f32 %v597, %v1031
        %v1056 = vsub.f32 %v602, %v1031
        %v1057 = vsub.f32 %v607, %v1031
        %v1058 = vsub.f32 %v612, %v1031
        %v1059 = vsub.f32 %v617, %v1031
        %v1060 = vsub.f32 %v622, %v1031
        %v1061 = vsub.f32 %v627, %v1031
        %v1062 = vsub.f32 %v632, %v1031
        %v1063 = vsub.f32 %v637, %v1031
        %v1064 = vmul.f32 %v1032, %v1032
        %v1065 = vmul.f32 %v1033, %v1033
        %v1066 = vmul.f32 %v1034, %v1034
        %v1067 = vmul.f32 %v1035, %v1035
        %v1068 = vmul.f32 %v1036, %v1036
        %v1069 = vmul.f32 %v1037, %v1037
        %v1070 = vmul.f32 %v1038, %v1038
        %v1071 = vmul.f32 %v1039, %v1039
        %v1072 = vmul.f32 %v1040, %v1040
        %v1073 = vmul.f32 %v1041, %v1041
        %v1074 = vmul.f32 %v1042, %v1042
        %v1075 = vmul.f32 %v1043, %v1043
        %v1076 = vmul.f32 %v1044, %v1044
        %v1077 = vmul.f32 %v1045, %v1045
        %v1078 = vmul.f32 %v1046, %v1046
        %v1079 = vmul.f32 %v1047, %v1047
        %v1080 = vmul.f32 %v1048, %v1048
        %v1081 = vmul.f32 %v1049, %v1049
        %v1082 = vmul.f32 %v1050, %v1050
        %v1083 = vmul.f32 %v1051, %v1051
        %v1084 = vmul.f32 %v1052, %v1052
        %v1085 = vmul.f32 %v1053, %v1053
        %v1086 = vmul.f32 %v1054, %v1054
        %v1087 = vmul.f32 %v1055, %v1055
        %v1088 = vmul.f32 %v1056, %v1056
        %v1089 = vmul.f32 %v1057, %v1057
        %v1090 = vmul.f32 %v1058, %v1058
        %v1091 = vmul.f32 %v1059, %v1059
        %v1092 = vmul.f32 %v1060, %v1060
        %v1093 = vmul.f32 %v1061, %v1061
        %v1094 = vmul.f32 %v1062, %v1062
        %v1095 = vmul.f32 %v1063, %v1063
        %v1096 = vsel %vm961, %v1064, 0.0
        %v1097 = vsel %vm961, %v1065, 0.0
        %v1098 = vadd.f32 %v1096, %v1097
        %v1099 = vsel %vm961, %v1066, 0.0
        %v1100 = vadd.f32 %v1098, %v1099
        %v1101 = vsel %vm961, %v1067, 0.0
        %v1102 = vadd.f32 %v1100, %v1101
        %v1103 = vsel %vm961, %v1068, 0.0
        %v1104 = vadd.f32 %v1102, %v1103
        %v1105 = vsel %vm961, %v1069, 0.0
        %v1106 = vadd.f32 %v1104, %v1105
        %v1107 = vsel %vm961, %v1070, 0.0
        %v1108 = vadd.f32 %v1106, %v1107
        %v1109 = vsel %vm961, %v1071, 0.0
        %v1110 = vadd.f32 %v1108, %v1109
        %v1111 = vsel %vm961, %v1072, 0.0
        %v1112 = vadd.f32 %v1110, %v1111
        %v1113 = vsel %vm961, %v1073, 0.0
        %v1114 = vadd.f32 %v1112, %v1113
        %v1115 = vsel %vm961, %v1074, 0.0
        %v1116 = vadd.f32 %v1114, %v1115
        %v1117 = vsel %vm961, %v1075, 0.0
        %v1118 = vadd.f32 %v1116, %v1117
        %v1119 = vsel %vm961, %v1076, 0.0
        %v1120 = vadd.f32 %v1118, %v1119
        %v1121 = vsel %vm961, %v1077, 0.0
        %v1122 = vadd.f32 %v1120, %v1121
        %v1123 = vsel %vm961, %v1078, 0.0
        %v1124 = vadd.f32 %v1122, %v1123
        %v1125 = vsel %vm961, %v1079, 0.0
        %v1126 = vadd.f32 %v1124, %v1125
        %v1127 = vsel %vm961, %v1080, 0.0
        %v1128 = vadd.f32 %v1126, %v1127
        %v1129 = vsel %vm961, %v1081, 0.0
        %v1130 = vadd.f32 %v1128, %v1129
        %v1131 = vsel %vm961, %v1082, 0.0
        %v1132 = vadd.f32 %v1130, %v1131
        %v1133 = vsel %vm961, %v1083, 0.0
        %v1134 = vadd.f32 %v1132, %v1133
        %v1135 = vsel %vm961, %v1084, 0.0
        %v1136 = vadd.f32 %v1134, %v1135
        %v1137 = vsel %vm961, %v1085, 0.0
        %v1138 = vadd.f32 %v1136, %v1137
        %v1139 = vsel %vm961, %v1086, 0.0
        %v1140 = vadd.f32 %v1138, %v1139
        %v1141 = vsel %vm961, %v1087, 0.0
        %v1142 = vadd.f32 %v1140, %v1141
        %v1143 = vsel %vm961, %v1088, 0.0
        %v1144 = vadd.f32 %v1142, %v1143
        %v1145 = vsel %vm961, %v1089, 0.0
        %v1146 = vadd.f32 %v1144, %v1145
        %v1147 = vsel %vm961, %v1090, 0.0
        %v1148 = vadd.f32 %v1146, %v1147
        %v1149 = vsel %vm961, %v1091, 0.0
        %v1150 = vadd.f32 %v1148, %v1149
        %v1151 = vsel %vm961, %v1092, 0.0
        %v1152 = vadd.f32 %v1150, %v1151
        %v1153 = vsel %vm961, %v1093, 0.0
        %v1154 = vadd.f32 %v1152, %v1153
        %v1155 = vsel %vm961, %v1094, 0.0
        %v1156 = vadd.f32 %v1154, %v1155
        %v1157 = vsel %vm961, %v1095, 0.0
        %v1158 = vadd.f32 %v1156, %v1157
        %v1159 = vrot.slane %v1158, 4
        %v1160 = vadd.f32 %v1158, %v1159
        %v1161 = vrot.slane %v1160, 2
        %v1162 = vadd.f32 %v1160, %v1161
        %v1163 = vrot.slane %v1162, 1
        %v1164 = vadd.f32 %v1162, %v1163
        %vm1165 = vcmask 1040384
        %v1166 = vsel %vm1165, %v1031, %v1164
        %vm1167 = vcmask 189440
        %1168 = vst.msk [vmem:[%s283] sm:$0x3] %vm1167, %v1166
        %s1169 = smul.u32 32, %s20
        %p1170 = scmp.lt.s32.totalorder %s1169, 63
        %s1171 = scalar_select %p1170, %s1169, 63
        %s1172 = smul.addr %s1171, 8
        %s1173 = scalar_lea.vmem %s2, %s1172
        %s1174 = smul.u32 32, %s20
        %p1175 = scmp.lt.s32.totalorder %s1174, 63
        %s1176 = scalar_select %p1175, %s1174, 63
        %s1177 = smul.addr %s1176, 8
        %s1178 = scalar_lea.vmem %s3, %s1177
        %s1179 = smul.u32 32, %s20
        %p1180 = scmp.lt.s32.totalorder %s1179, 63
        %s1181 = scalar_select %p1180, %s1179, 63
        %s1182 = smul.addr %s1181, 8
        %s1183 = scalar_lea.vmem %s4, %s1182
        %p1184 = scmp.lt.s32.totalorder %s20, 1
        %s1185 = scalar_select %p1184, %s20, 1
        %s1186 = smul.addr %s1185, 2
        %s1187 = scalar_lea.vmem %s5, %s1186
        // Predicated region
        $region33: #{inception_forward.7} parent=27 // pred_check
          %p1188 = pneg %p85
        $region34: #{inception_forward.7} parent=27 // pred_check_branch
          %1190 = sbr.rel (%p1188) target = $region36
        $region35: #{inception_forward.7} parent=27 // pred_region
          %s1191 = smul.u32 32, %s20
        $region36: #{inception_forward.7} parent=27 // pred_fallthru
          _
        // Predicated region
        $region37: #{inception_forward.7} parent=27 // pred_check
          %p1192 = pneg %p111
        $region38: #{inception_forward.7} parent=27 // pred_check_branch
          %1194 = sbr.rel (%p1192) target = $region40
        $region39: #{inception_forward.7} parent=27 // pred_region
          %s1195 = smul.u32 32, %s20
        $region40: #{inception_forward.7} parent=27 // pred_fallthru
          _
        // Predicated region
        $region41: #{inception_forward.7} parent=27 // pred_check
          %p1196 = pneg %p137
        $region42: #{inception_forward.7} parent=27 // pred_check_branch
          %1198 = sbr.rel (%p1196) target = $region44
        $region43: #{inception_forward.7} parent=27 // pred_region
          %s1199 = smul.u32 32, %s20
        $region44: #{inception_forward.7} parent=27 // pred_fallthru
          _
        // Predicated region
        $region45: #{inception_forward.7} parent=27 // pred_check
          %p1200 = pneg %p163
        $region46: #{inception_forward.7} parent=27 // pred_check_branch
          %1202 = sbr.rel (%p1200) target = $region48
        $region47: #{inception_forward.7} parent=27 // pred_region
          _
        $region48: #{inception_forward.7} parent=27 // pred_fallthru
          _
      $region28: #{inception_forward.7} parent=5 // pred_fallthru
        _
      %p1203 = scmp.le.s32.totalorder 2, %s15
      // Predicated region
      $region49: #{inception_forward.7} parent=5 // pred_check
        %p1204 = pneg %p1203
      $region50: #{inception_forward.7} parent=5 // pred_check_branch
        %1206 = sbr.rel (%p1204) target = $region52
      $region51: #{inception_forward.7} parent=5 // pred_region
        %s1207 = ssub.s32 %s15, 2
        // Predicated region
        $region53: #{inception_forward.7} parent=51 // pred_check
          %p1208 = pneg %p91
        $region54: #{inception_forward.7} parent=51 // pred_check_branch
          %1210 = sbr.rel (%p1208) target = $region56
        $region55: #{inception_forward.7} parent=51 // pred_region
          %s1211 = smul.u32 32, %s21
          %p1212 = scmp.lt.s32.totalorder %s1211, 63
          %s1213 = scalar_select %p1212, %s1211, 63
          %s1214 = smul.addr %s1213, 8
          %s1215 = scalar_lea.vmem %s2, %s1214
        $region56: #{inception_forward.7} parent=51 // pred_fallthru
          _
        // Predicated region
        $region57: #{inception_forward.7} parent=51 // pred_check
          %p1216 = pneg %p117
        $region58: #{inception_forward.7} parent=51 // pred_check_branch
          %1218 = sbr.rel (%p1216) target = $region60
        $region59: #{inception_forward.7} parent=51 // pred_region
          %s1219 = smul.u32 32, %s21
          %p1220 = scmp.lt.s32.totalorder %s1219, 63
          %s1221 = scalar_select %p1220, %s1219, 63
          %s1222 = smul.addr %s1221, 8
          %s1223 = scalar_lea.vmem %s3, %s1222
        $region60: #{inception_forward.7} parent=51 // pred_fallthru
          _
        // Predicated region
        $region61: #{inception_forward.7} parent=51 // pred_check
          %p1224 = pneg %p143
        $region62: #{inception_forward.7} parent=51 // pred_check_branch
          %1226 = sbr.rel (%p1224) target = $region64
        $region63: #{inception_forward.7} parent=51 // pred_region
          %s1227 = smul.u32 32, %s21
          %p1228 = scmp.lt.s32.totalorder %s1227, 63
          %s1229 = scalar_select %p1228, %s1227, 63
          %s1230 = smul.addr %s1229, 8
          %s1231 = scalar_lea.vmem %s4, %s1230
        $region64: #{inception_forward.7} parent=51 // pred_fallthru
          _
        // Predicated region
        $region65: #{inception_forward.7} parent=51 // pred_check
          %p1232 = pneg %p169
        $region66: #{inception_forward.7} parent=51 // pred_check_branch
          %1234 = sbr.rel (%p1232) target = $region68
        $region67: #{inception_forward.7} parent=51 // pred_region
          %p1235 = scmp.lt.s32.totalorder %s21, 1
          %s1236 = scalar_select %p1235, %s21, 1
          %s1237 = smul.addr %s1236, 2
          %s1238 = scalar_lea.vmem %s5, %s1237
        $region68: #{inception_forward.7} parent=51 // pred_fallthru
          _
      $region52: #{inception_forward.7} parent=5 // pred_fallthru
        _
    $region6: #{inception_forward.7} parent=1 // loop_footer
      %s19 = sadd.s32 1, %s15
    $region7: #{inception_forward.7} parent=1 // loop_footer_branch
      %14 = sbr.rel target = $region3
    $region8: #{inception_forward.7} parent=1 // loop_exit
      _
    %1239 = vsyncpa [#allocation3], 1
    %s1240 = scalar_lea.sflag [#allocation3], 1
    %1241 = vsyncpa %s1240, 1

// kernel: inception_forward.11
$region0: #{inception_forward.11}
  #allocation0 [shape = 'u32[]', space=smem, size = 0x4, offset = 0x4, fixed_abs, tag = 'smem constant byte address 0x4 - core index']
  #allocation1 [shape = 'u32[144,128]{1,0:T(1,128)}', space=vmem, size = 0x12000, scoped, tag = 'internal scratch']
  %s0 = inlined_call_operand.vmem [shape: f32[2,6,10,10,8], index: 0, kind: input, shape index: {}]
  %s1 = inlined_call_operand.vmem [shape: f32[3,9,8,16], index: 1, kind: input, shape index: {}]
  %s2 = inlined_call_operand.vmem [shape: f32[2,4,8,8,16], index: 2, kind: output, shape index: {0}]
  %s3 = inlined_call_operand.vmem [shape: f32[2,4,2,16], index: 3, kind: output, shape index: {1}]
  %4 = xla_tuple %s2, %s3
  %s5 = sld [smem:[#allocation0]]
  $region61: #{inception_forward.11} parent=0
    _
  %s7 = ssub.s32 1, %s5
  %s8 = scalar_select 0, %s7, %s5
  loop: start=0, step=1, limit=26
  $region2: #{inception_forward.11} parent=0 // loop_pre_header
    _
  $region3: #{inception_forward.11} parent=0 // loop_header
    %s10 = sphi 0, %s14
    %p11 = scmp.ge.s32.totalorder %s10, 26
    %s17 = sphi 0, %s36
    %s18 = sphi 0, %s32
    %s19 = sphi 0, %s28
    %s20 = sphi 0, %s17
    %s21 = sphi 0, %s18
    %s22 = sphi 0, %s19
    %s23 = sphi 0, %s20
    %s24 = sphi 0, %s21
    %s25 = sphi 0, %s22
    %s43 = sphi 0, %s45
    %s46 = sphi 0, %s43
    %s47 = sphi 0, %s46
    %s63 = sphi 0, %s47
    %s69 = sphi 0, %s71
    %s72 = sphi 0, %s69
    %s73 = sphi 0, %s72
    %s89 = sphi 0, %s73
    %s97 = sphi 0, %s99
    %s100 = sphi 0, %s97
    %s101 = sphi 0, %s100
    %s117 = sphi 0, %s101
    %s125 = sphi 0, %s127
    %s128 = sphi 0, %s125
    %s129 = sphi 0, %s128
    %s145 = sphi 0, %s129
  $region4: #{inception_forward.11} parent=0 // loop_header_branch
    %13 = sbr.rel (%p11) target = $region8
  $region5: #{inception_forward.11} parent=0 // loop_body
    %s15 = ssub.s32 %s10, 1
    %s16 = ssub.s32 %s10, 2
    %s26 = sadd.s32 1, %s19
    %p27 = scmp.ge.s32.totalorder %s26, 3
    %s28 = scalar_select %p27, 0, %s26
    %s29 = sadd.s32 1, %s18
    %s30 = scalar_select %p27, %s29, %s18
    %p31 = scmp.ge.s32.totalorder %s30, 4
    %s32 = scalar_select %p31, 0, %s30
    %s33 = sadd.s32 1, %s17
    %s34 = scalar_select %p31, %s33, %s17
    %p35 = scmp.ge.s32.totalorder %s34, 2
    %s36 = scalar_select %p35, 0, %s34
    %s37 = sadd.s32 %s18, %s19
    %s38 = sadd.s32 %s32, %s28
    %s39 = ssub.s32 %s17, %s36
    %s40 = ssub.s32 %s37, %s38
    %s41 = sor.u32 %s39, %s40
    %p42 = scmp.eq.s32.totalorder %s41, 0
    %s44 = sadd.s32 %s43, 1
    %s45 = scalar_select %p42, %s43, %s44
    %p48 = pneg %p42
    %p49 = scmp.eq.s32.totalorder %s10, 23
    %p50 = por %p48, %p49
    %p51 = scmp.ne.s32.totalorder %s43, %s46
    %p52 = scmp.eq.s32.totalorder %s10, 0
    %p53 = por %p51, %p52
    %p54 = scmp.ne.s32.totalorder %s43, %s46
    %p55 = scmp.eq.s32.totalorder %s15, 23
    %p56 = por %p54, %p55
    %p57 = scmp.ne.s32.totalorder %s46, %s47
    %p58 = scmp.eq.s32.totalorder %s15, 0
    %p59 = por %p57, %p58
    %p60 = scmp.ne.s32.totalorder %s46, %s47
    %p61 = scmp.eq.s32.totalorder %s16, 23
    %p62 = por %p60, %p61
    %p64 = scmp.ne.s32.totalorder %s47, %s63
    %p65 = scmp.eq.s32.totalorder %s16, 0
    %p66 = por %p64, %p65
    %s67 = ssub.s32 %s19, %s28
    %p68 = scmp.eq.s32.totalorder %s67, 0
    %s70 = sadd.s32 %s69, 1
    %s71 = scalar_select %p68, %s69, %s70
    %p74 = pneg %p68
    %p75 = scmp.eq.s32.totalorder %s10, 23
    %p76 = por %p74, %p75
    %p77 = scmp.ne.s32.totalorder %s69, %s72
    %p78 = scmp.eq.s32.totalorder %s10, 0
    %p79 = por %p77, %p78
    %p80 = scmp.ne.s32.totalorder %s69, %s72
    %p81 = scmp.eq.s32.totalorder %s15, 23
    %p82 = por %p80, %p81
    %p83 = scmp.ne.s32.totalorder %s72, %s73
    %p84 = scmp.eq.s32.totalorder %s15, 0
    %p85 = por %p83, %p84
    %p86 = scmp.ne.s32.totalorder %s72, %s73
    %p87 = scmp.eq.s32.totalorder %s16, 23
    %p88 = por %p86, %p87
    %p90 = scmp.ne.s32.totalorder %s73, %s89
    %p91 = scmp.eq.s32.totalorder %s16, 0
    %p92 = por %p90, %p91
    %s93 = ssub.s32 %s17, %s36
    %s94 = ssub.s32 %s18, %s32
    %s95 = sor.u32 %s93, %s94
    %p96 = scmp.eq.s32.totalorder %s95, 0
    %s98 = sadd.s32 %s97, 1
    %s99 = scalar_select %p96, %s97, %s98
    %p102 = pneg %p96
    %p103 = scmp.eq.s32.totalorder %s10, 23
    %p104 = por %p102, %p103
    %p105 = scmp.ne.s32.totalorder %s97, %s100
    %p106 = scmp.eq.s32.totalorder %s10, 0
    %p107 = por %p105, %p106
    %p108 = scmp.ne.s32.totalorder %s97, %s100
    %p109 = scmp.eq.s32.totalorder %s15, 23
    %p110 = por %p108, %p109
    %p111 = scmp.ne.s32.totalorder %s100, %s101
    %p112 = scmp.eq.s32.totalorder %s15, 0
    %p113 = por %p111, %p112
    %p114 = scmp.ne.s32.totalorder %s100, %s101
    %p115 = scmp.eq.s32.totalorder %s16, 23
    %p116 = por %p114, %p115
    %p118 = scmp.ne.s32.totalorder %s101, %s117
    %p119 = scmp.eq.s32.totalorder %s16, 0
    %p120 = por %p118, %p119
    %s121 = ssub.s32 %s17, %s36
    %s122 = ssub.s32 %s18, %s32
    %s123 = sor.u32 %s121, %s122
    %p124 = scmp.eq.s32.totalorder %s123, 0
    %s126 = sadd.s32 %s125, 1
    %s127 = scalar_select %p124, %s125, %s126
    %p130 = pneg %p124
    %p131 = scmp.eq.s32.totalorder %s10, 23
    %p132 = por %p130, %p131
    %p133 = scmp.ne.s32.totalorder %s125, %s128
    %p134 = scmp.eq.s32.totalorder %s10, 0
    %p135 = por %p133, %p134
    %p136 = scmp.ne.s32.totalorder %s125, %s128
    %p137 = scmp.eq.s32.totalorder %s15, 23
    %p138 = por %p136, %p137
    %p139 = scmp.ne.s32.totalorder %s128, %s129
    %p140 = scmp.eq.s32.totalorder %s15, 0
    %p141 = por %p139, %p140
    %p142 = scmp.ne.s32.totalorder %s128, %s129
    %p143 = scmp.eq.s32.totalorder %s16, 23
    %p144 = por %p142, %p143
    %p146 = scmp.ne.s32.totalorder %s129, %s145
    %p147 = scmp.eq.s32.totalorder %s16, 0
    %p148 = por %p146, %p147
    %p149 = scmp.le.s32.totalorder 1, %s10
    %p150 = scmp.lt.s32.totalorder %s10, 25
    %p151 = pnand %p149, %p150
    %p152 = pneg %p151
    // Predicated region
    $region9: #{inception_forward.11} parent=5 // pred_check
      _
    $region10: #{inception_forward.11} parent=5 // pred_check_branch
      %154 = sbr.rel (%p151) target = $region12
    $region11: #{inception_forward.11} parent=5 // pred_region
      %s155 = ssub.s32 %s10, 1
    $region12: #{inception_forward.11} parent=5 // pred_fallthru
      _
    %p156 = scmp.lt.s32.totalorder %s10, 24
    // Predicated region
    $region13: #{inception_forward.11} parent=5 // pred_check
      %p157 = pneg %p156
    $region14: #{inception_forward.11} parent=5 // pred_check_branch
      %159 = sbr.rel (%p157) target = $region16
    $region15: #{inception_forward.11} parent=5 // pred_region
      // Predicated region
      $region17: #{inception_forward.11} parent=15 // pred_check
        %p160 = pneg %p53
      $region18: #{inception_forward.11} parent=15 // pred_check_branch
        %162 = sbr.rel (%p160) target = $region20
      $region19: #{inception_forward.11} parent=15 // pred_region
        %s163 = sadd.s32 %s18, %s19
        %p164 = scmp.lt.s32.totalorder %s17, 1
        %s165 = scalar_select %p164, %s17, 1
        %p166 = scmp.lt.s32.totalorder %s163, 5
        %s167 = scalar_select %p166, %s163, 5
        %s168 = smul.addr %s167, 20
        %s169 = smul.addr %s165, 120
        %s170 = sadd.s32 %s168, %s169
        %s171 = smul.addr %s170, 8
        %s172 = scalar_lea.vmem %s0, %s171
        %s173 = sadd.s32 %s18, %s19
      $region20: #{inception_forward.11} parent=15 // pred_fallthru
        _
      // Predicated region
      $region21: #{inception_forward.11} parent=15 // pred_check
        %p174 = pneg %p79
      $region22: #{inception_forward.11} parent=15 // pred_check_branch
        %176 = sbr.rel (%p174) target = $region24
      $region23: #{inception_forward.11} parent=15 // pred_region
        %p177 = scmp.lt.s32.totalorder %s19, 2
        %s178 = scalar_select %p177, %s19, 2
        %s179 = smul.addr %s178, 9
        %s180 = smul.addr %s179, 8
        %s181 = scalar_lea.vmem %s1, %s180
      $region24: #{inception_forward.11} parent=15 // pred_fallthru
        _
    $region16: #{inception_forward.11} parent=5 // pred_fallthru
      _
    %p182 = scmp.le.s32.totalorder 1, %s10
    %p183 = scmp.lt.s32.totalorder %s10, 25
    %p184 = pnand %p182, %p183
    %p185 = pneg %p184
    // Predicated region
    $region25: #{inception_forward.11} parent=5 // pred_check
      _
    $region26: #{inception_forward.11} parent=5 // pred_check_branch
      %187 = sbr.rel (%p184) target = $region28
    $region27: #{inception_forward.11} parent=5 // pred_region
      %s188 = ssub.s32 %s10, 1
      %s189 = sadd.s32 %s21, %s22
      %p190 = scmp.lt.s32.totalorder %s20, 1
      %s191 = scalar_select %p190, %s20, 1
      %p192 = scmp.lt.s32.totalorder %s189, 5
      %s193 = scalar_select %p192, %s189, 5
      %s194 = smul.addr %s193, 20
      %s195 = smul.addr %s191, 120
      %s196 = sadd.s32 %s194, %s195
      %s197 = smul.addr %s196, 8
      %s198 = scalar_lea.vmem %s0, %s197
      %p199 = pneg %p59
      %p200 = pneg %p56
      %p201 = scmp.lt.s32.totalorder %s22, 2
      %s202 = scalar_select %p201, %s22, 2
      %s203 = smul.addr %s202, 9
      %s204 = smul.addr %s203, 8
      %s205 = scalar_lea.vmem %s1, %s204
      %p206 = pneg %p85
      %p207 = pneg %p82
      %p208 = pneg %p113
      %p209 = pneg %p110
      %p210 = scmp.lt.s32.totalorder %s20, 1
      %s211 = scalar_select %p210, %s20, 1
      %p212 = scmp.lt.s32.totalorder %s21, 3
      %s213 = scalar_select %p212, %s21, 3
      %s214 = smul.addr %s213, 8
      %s215 = smul.addr %s211, 32
      %s216 = sadd.s32 %s214, %s215
      %s217 = smul.addr %s216, 8
      %s218 = scalar_lea.vmem %s2, %s217
      %p219 = pneg %p141
      %p220 = pneg %p138
      %p221 = scmp.lt.s32.totalorder %s20, 1
      %s222 = scalar_select %p221, %s20, 1
      %p223 = scmp.lt.s32.totalorder %s21, 3
      %s224 = scalar_select %p223, %s21, 3
      %s225 = smul.addr %s222, 4
      %s226 = sadd.s32 %s224, %s225
      %s227 = smul.addr %s226, 2
      %s228 = scalar_lea.vmem %s3, %s227
      %s229 = sadd.s32 %s21, %s22
      %p230 = scmp.lt.s32.totalorder %s20, 1
      %s231 = scalar_select %p230, %s20, 1
      %p232 = scmp.lt.s32.totalorder %s229, 5
      %s233 = scalar_select %p232, %s229, 5
      %s234 = smul.addr %s233, 20
      %s235 = smul.addr %s231, 120
      %s236 = sadd.s32 %s234, %s235
      %s237 = smul.addr %s236, 8
      %s238 = scalar_lea.vmem %s0, %s237
      %s239 = sadd.s32 %s21, %s22
      %p240 = scmp.lt.s32.totalorder %s22, 2
      %s241 = scalar_select %p240, %s22, 2
      %s242 = smul.addr %s241, 9
      %s243 = smul.addr %s242, 8
      %s244 = scalar_lea.vmem %s1, %s243
      %p245 = scmp.lt.s32.totalorder %s20, 1
      %s246 = scalar_select %p245, %s20, 1
      %p247 = scmp.lt.s32.totalorder %s21, 3
      %s248 = scalar_select %p247, %s21, 3
      %s249 = smul.addr %s248, 8
      %s250 = smul.addr %s246, 32
      %s251 = sadd.s32 %s249, %s250
      %s252 = smul.addr %s251, 8
      %s253 = scalar_lea.vmem %s2, %s252
      %p254 = scmp.lt.s32.totalorder %s20, 1
      %s255 = scalar_select %p254, %s20, 1
      %p256 = scmp.lt.s32.totalorder %s21, 3
      %s257 = scalar_select %p256, %s21, 3
      %s258 = smul.addr %s255, 4
      %s259 = sadd.s32 %s257, %s258
      %s260 = smul.addr %s259, 2
      %s261 = scalar_lea.vmem %s3, %s260
      %v262 = vld [vmem:[%s238] sm:$0xff]
      %v263 = vld [vmem:[%s238 + $0x8] sm:$0x3]
      %v264 = vld [vmem:[%s238 + $0x10] sm:$0xff]
      %v265 = vld [vmem:[%s238 + $0x18] sm:$0x3]
      %v266 = vld [vmem:[%s238 + $0x20] sm:$0xff]
      %v267 = vld [vmem:[%s238 + $0x28] sm:$0x3]
      %v268 = vld [vmem:[%s238 + $0x30] sm:$0xff]
      %v269 = vld [vmem:[%s238 + $0x38] sm:$0x3]
      %v270 = vld [vmem:[%s238 + $0x40] sm:$0xff]
      %v271 = vld [vmem:[%s238 + $0x48] sm:$0x3]
      %v272 = vld [vmem:[%s238 + $0x50] sm:$0xff]
      %v273 = vld [vmem:[%s238 + $0x58] sm:$0x3]
      %v274 = vld [vmem:[%s238 + $0x60] sm:$0xff]
      %v275 = vld [vmem:[%s238 + $0x68] sm:$0x3]
      %v276 = vld [vmem:[%s238 + $0x70] sm:$0xff]
      %v277 = vld [vmem:[%s238 + $0x78] sm:$0x3]
      %v278 = vld [vmem:[%s238 + $0x80] sm:$0xff]
      %v279 = vld [vmem:[%s238 + $0x88] sm:$0x3]
      %v280 = vld [vmem:[%s238 + $0x90] sm:$0xff]
      %v281 = vld [vmem:[%s238 + $0x98] sm:$0x3]
      %v282 = vld [vmem:[%s244] sm:$0xff]
      %vm299 = vcmask 1046528
      %v300 = vrot.slane %v262, 1
      %v301 = vrot.slane %v263, 1
      %v302 = vsel %vm299, %v300, %v301
      %v303 = vrot.slane %v264, 1
      %v304 = vrot.slane %v265, 1
      %v305 = vsel %vm299, %v303, %v304
      %v306 = vrot.slane %v266, 1
      %v307 = vrot.slane %v267, 1
      %v308 = vsel %vm299, %v306, %v307
      %v309 = vrot.slane %v268, 1
      %v310 = vrot.slane %v269, 1
      %v311 = vsel %vm299, %v309, %v310
      %v312 = vrot.slane %v270, 1
      %v313 = vrot.slane %v271, 1
      %v314 = vsel %vm299, %v312, %v313
      %v315 = vrot.slane %v272, 1
      %v316 = vrot.slane %v273, 1
      %v317 = vsel %vm299, %v315, %v316
      %v318 = vrot.slane %v274, 1
      %v319 = vrot.slane %v275, 1
      %v320 = vsel %vm299, %v318, %v319
      %v321 = vrot.slane %v276, 1
      %v322 = vrot.slane %v277, 1
      %v323 = vsel %vm299, %v321, %v322
      %s324 = scalar_lea.vmem %s244, 8
      %v325 = vld [vmem:[%s324] sm:$0xff]
      %vm326 = vcmask 64512
      %v327 = vsel %vm326, %v302, 0
      %v329 = vsel %vm326, %v305, 0
      %v331 = vsel %vm326, %v308, 0
      %v333 = vsel %vm326, %v311, 0
      %v335 = vsel %vm326, %v314, 0
      %v337 = vsel %vm326, %v317, 0
      %v339 = vsel %vm326, %v320, 0
      %v341 = vsel %vm326, %v323, 0
      %343 = vmatprep.subr.mxu0 0.0
      %344 = vmatpush1.msra.mxu0 %v325
      %345 = vmatprep.subr.mxu0 0.0
      %346 = vmatpush1.msra.mxu0 0.0
      %347 = vmatprep.subr.mxu0 0.0
      %348 = vmatpush1.msra.mxu0 0.0
      %349 = vmatprep.subr.mxu0 0.0
      %350 = vmatpush1.msra.mxu0 0.0
      %351 = vmatprep.subr.mxu0 0.0
      %352 = vmatpush1.msra.mxu0 0.0
      %353 = vmatprep.subr.mxu0 0.0
      %354 = vmatpush1.msra.mxu0 0.0
      %355 = vmatprep.subr.mxu0 0.0
      %356 = vmatpush1.msra.mxu0 0.0
      %357 = vmatprep.subr.mxu0 0.0
      %358 = vmatpush1.msra.mxu0 0.0
      %359 = vmatprep.subr.mxu0 0.0
      %360 = vmatpush1.msra.mxu0 0.0
      %361 = vmatprep.subr.mxu0 0.0
      %362 = vmatpush1.msra.mxu0 0.0
      %363 = vmatprep.subr.mxu0 0.0
      %364 = vmatpush1.msra.mxu0 0.0
      %365 = vmatprep.subr.mxu0 0.0
      %366 = vmatpush1.msra.mxu0 0.0
      %367 = vmatprep.subr.mxu0 0.0
      %368 = vmatpush1.msra.mxu0 0.0
      %369 = vmatprep.subr.mxu0 0.0
      %370 = vmatpush1.msra.mxu0 0.0
      %371 = vmatprep.subr.mxu0 0.0
      %372 = vmatpush1.msra.mxu0 0.0
      %373 = vmatprep.subr.mxu0 0.0
      %374 = vmatpush1.msra.mxu0 0.0
      %375 = vmatprep.subr.mxu0 0.0
      %376 = vmatpush1.msra.mxu0 0.0
      %377 = vmatprep.subr.mxu0 0.0
      %378 = vmatpush1.msra.mxu0 0.0
      %379 = vmatprep.subr.mxu0 0.0
      %380 = vmatpush1.msra.mxu0 0.0
      %381 = vmatprep.subr.mxu0 0.0
      %382 = vmatpush1.msra.mxu0 0.0
      %383 = vmatprep.subr.mxu0 0.0
      %384 = vmatpush1.msra.mxu0 0.0
      %385 = vmatprep.subr.mxu0 0.0
      %386 = vmatpush1.msra.mxu0 0.0
      %387 = vmatprep.subr.mxu0 0.0
      %388 = vmatpush1.msra.mxu0 0.0
      %389 = vmatprep.subr.mxu0 0.0
      %390 = vmatpush1.msra.mxu0 0.0
      %391 = vmatprep.subr.mxu0 0.0
      %392 = vmatpush1.msra.mxu0 0.0
      %393 = vmatprep.subr.mxu0 0.0
      %394 = vmatpush1.msra.mxu0 0.0
      %395 = vmatprep.subr.mxu0 0.0
      %396 = vmatpush1.msra.mxu0 0.0
      %397 = vmatprep.subr.mxu0 0.0
      %398 = vmatpush1.msra.mxu0 0.0
      %399 = vmatprep.subr.mxu0 0.0
      %400 = vmatpush1.msra.mxu0 0.0
      %401 = vmatprep.subr.mxu0 0.0
      %402 = vmatpush1.msra.mxu0 0.0
      %403 = vmatprep.subr.mxu0 0.0
      %404 = vmatpush1.msra.mxu0 0.0
      %405 = vmatprep.subr.mxu0 0.0
      %406 = vmatpush1.msra.mxu0 0.0
      %407 = vmatprep.mubr.f32.mxu0 0.0
      %408 = vmatmul.mubr.f32.gmra.mrb[0].mxu0 %v327
      %v409 = vpop.f32.mrb[0].mxu0
      %v410 = vadd.f32 0.0, %v409
      %v411 = vpop.f32.mrb[0].mxu0
      %412 = vmatprep.mubr.f32.mxu0 0.0
      %413 = vmatmul.mubr.f32.gmra.mrb[0].mxu0 %v329
      %v414 = vpop.f32.mrb[0].mxu0
      %v415 = vadd.f32 0.0, %v414
      %v416 = vpop.f32.mrb[0].mxu0
      %417 = vmatprep.mubr.f32.mxu0 0.0
      %418 = vmatmul.mubr.f32.gmra.mrb[0].mxu0 %v331
      %v419 = vpop.f32.mrb[0].mxu0
      %v420 = vadd.f32 0.0, %v419
      %v421 = vpop.f32.mrb[0].mxu0
      %422 = vmatprep.mubr.f32.mxu0 0.0
      %423 = vmatmul.mubr.f32.gmra.mrb[0].mxu0 %v333
      %v424 = vpop.f32.mrb[0].mxu0
      %v425 = vadd.f32 0.0, %v424
      %v426 = vpop.f32.mrb[0].mxu0
      %427 = vmatprep.mubr.f32.mxu0 0.0
      %428 = vmatmul.mubr.f32.gmra.mrb[0].mxu0 %v335
      %v429 = vpop.f32.mrb[0].mxu0
      %v430 = vadd.f32 0.0, %v429
      %v431 = vpop.f32.mrb[0].mxu0
      %432 = vmatprep.mubr.f32.mxu0 0.0
      %433 = vmatmul.mubr.f32.gmra.mrb[0].mxu0 %v337
      %v434 = vpop.f32.mrb[0].mxu0
      %v435 = vadd.f32 0.0, %v434
      %v436 = vpop.f32.mrb[0].mxu0
      %437 = vmatprep.mubr.f32.mxu0 0.0
      %438 = vmatmul.mubr.f32.gmra.mrb[0].mxu0 %v339
      %v439 = vpop.f32.mrb[0].mxu0
      %v440 = vadd.f32 0.0, %v439
      %v441 = vpop.f32.mrb[0].mxu0
      %442 = vmatprep.mubr.f32.mxu0 0.0
      %443 = vmatmul.mubr.f32.gmra.mrb[0].mxu0 %v341
      %v444 = vpop.f32.mrb[0].mxu0
      %v445 = vadd.f32 0.0, %v444
      %v446 = vpop.f32.mrb[0].mxu0
      %447 = vdwg.mxu0
      %v448 = vsel %vm326, %v262, 0
      %v450 = vsel %vm326, %v264, 0
      %v452 = vsel %vm326, %v266, 0
      %v454 = vsel %vm326, %v268, 0
      %v456 = vsel %vm326, %v270, 0
      %v458 = vsel %vm326, %v272, 0
      %v460 = vsel %vm326, %v274, 0
      %v462 = vsel %vm326, %v276, 0
      %464 = vmatprep.subr.mxu0 0.0
      %465 = vmatpush1.msra.mxu0 %v282
      %466 = vmatprep.subr.mxu0 0.0
      %467 = vmatpush1.msra.mxu0 0.0
      %468 = vmatprep.subr.mxu0 0.0
      %469 = vmatpush1.msra.mxu0 0.0
      %470 = vmatprep.subr.mxu0 0.0
      %471 = vmatpush1.msra.mxu0 0.0
      %472 = vmatprep.subr.mxu0 0.0
      %473 = vmatpush1.msra.mxu0 0.0
      %474 = vmatprep.subr.mxu0 0.0
      %475 = vmatpush1.msra.mxu0 0.0
      %476 = vmatprep.subr.mxu0 0.0
      %477 = vmatpush1.msra.mxu0 0.0
      %478 = vmatprep.subr.mxu0 0.0
      %479 = vmatpush1.msra.mxu0 0.0
      %480 = vmatprep.subr.mxu0 0.0
      %481 = vmatpush1.msra.mxu0 0.0
      %482 = vmatprep.subr.mxu0 0.0
      %483 = vmatpush1.msra.mxu0 0.0
      %484 = vmatprep.subr.mxu0 0.0
      %485 = vmatpush1.msra.mxu0 0.0
      %486 = vmatprep.subr.mxu0 0.0
      %487 = vmatpush1.msra.mxu0 0.0
      %488 = vmatprep.subr.mxu0 0.0
      %489 = vmatpush1.msra.mxu0 0.0
      %490 = vmatprep.subr.mxu0 0.0
      %491 = vmatpush1.msra.mxu0 0.0
      %492 = vmatprep.subr.mxu0 0.0
      %493 = vmatpush1.msra.mxu0 0.0
      %494 = vmatprep.subr.mxu0 0.0
      %495 = vmatpush1.msra.mxu0 0.0
      %496 = vmatprep.subr.mxu0 0.0
      %497 = vmatpush1.msra.mxu0 0.0
      %498 = vmatprep.subr.mxu0 0.0
      %499 = vmatpush1.msra.mxu0 0.0
      %500 = vmatprep.subr.mxu0 0.0
      %501 = vmatpush1.msra.mxu0 0.0
      %502 = vmatprep.subr.mxu0 0.0
      %503 = vmatpush1.msra.mxu0 0.0
      %504 = vmatprep.subr.mxu0 0.0
      %505 = vmatpush1.msra.mxu0 0.0
      %506 = vmatprep.subr.mxu0 0.0
      %507 = vmatpush1.msra.mxu0 0.0
      %508 = vmatprep.subr.mxu0 0.0
      %509 = vmatpush1.msra.mxu0 0.0
      %510 = vmatprep.subr.mxu0 0.0
      %511 = vmatpush1.msra.mxu0 0.0
      %512 = vmatprep.subr.mxu0 0.0
      %513 = vmatpush1.msra.mxu0 0.0
      %514 = vmatprep.subr.mxu0 0.0
      %515 = vmatpush1.msra.mxu0 0.0
      %516 = vmatprep.subr.mxu0 0.0
      %517 = vmatpush1.msra.mxu0 0.0
      %518 = vmatprep.subr.mxu0 0.0
      %519 = vmatpush1.msra.mxu0 0.0
      %520 = vmatprep.subr.mxu0 0.0
      %521 = vmatpush1.msra.mxu0 0.0
      %522 = vmatprep.subr.mxu0 0.0
      %523 = vmatpush1.msra.mxu0 0.0
      %524 = vmatprep.subr.mxu0 0.0
      %525 = vmatpush1.msra.mxu0 0.0
      %526 = vmatprep.subr.mxu0 0.0
      %527 = vmatpush1.msra.mxu0 0.0
      %528 = vmatprep.mubr.f32.mxu0 0.0
      %529 = vmatmul.mubr.f32.gmra.mrb[0].mxu0 %v448
      %v530 = vpop.f32.mrb[0].mxu0
      %v531 = vadd.f32 %v410, %v530
      %v532 = vpop.f32.mrb[0].mxu0
      %533 = vmatprep.mubr.f32.mxu0 0.0
      %534 = vmatmul.mubr.f32.gmra.mrb[0].mxu0 %v450
      %v535 = vpop.f32.mrb[0].mxu0
      %v536 = vadd.f32 %v415, %v535
      %v537 = vpop.f32.mrb[0].mxu0
      %538 = vmatprep.mubr.f32.mxu0 0.0
      %539 = vmatmul.mubr.f32.gmra.mrb[0].mxu0 %v452
      %v540 = vpop.f32.mrb[0].mxu0
      %v541 = vadd.f32 %v420, %v540
      %v542 = vpop.f32.mrb[0].mxu0
      %543 = vmatprep.mubr.f32.mxu0 0.0
      %544 = vmatmul.mubr.f32.gmra.mrb[0].mxu0 %v454
      %v545 = vpop.f32.mrb[0].mxu0
      %v546 = vadd.f32 %v425, %v545
      %v547 = vpop.f32.mrb[0].mxu0
      %548 = vmatprep.mubr.f32.mxu0 0.0
      %549 = vmatmul.mubr.f32.gmra.mrb[0].mxu0 %v456
      %v550 = vpop.f32.mrb[0].mxu0
      %v551 = vadd.f32 %v430, %v550
      %v552 = vpop.f32.mrb[0].mxu0
      %553 = vmatprep.mubr.f32.mxu0 0.0
      %554 = vmatmul.mubr.f32.gmra.mrb[0].mxu0 %v458
      %v555 = vpop.f32.mrb[0].mxu0
      %v556 = vadd.f32 %v435, %v555
      %v557 = vpop.f32.mrb[0].mxu0
      %558 = vmatprep.mubr.f32.mxu0 0.0
      %559 = vmatmul.mubr.f32.gmra.mrb[0].mxu0 %v460
      %v560 = vpop.f32.mrb[0].mxu0
      %v561 = vadd.f32 %v440, %v560
      %v562 = vpop.f32.mrb[0].mxu0
      %563 = vmatprep.mubr.f32.mxu0 0.0
      %564 = vmatmul.mubr.f32.gmra.mrb[0].mxu0 %v462
      %v565 = vpop.f32.mrb[0].mxu0
      %v566 = vadd.f32 %v445, %v565
      %v567 = vpop.f32.mrb[0].mxu0
      %568 = vdwg.mxu0
      %vm569 = vcmask 1045504
      %v570 = vrot.slane %v262, 2
      %v571 = vrot.slane %v263, 2
      %v572 = vsel %vm569, %v570, %v571
      %v573 = vrot.slane %v264, 2
      %v574 = vrot.slane %v265, 2
      %v575 = vsel %vm569, %v573, %v574
      %v576 = vrot.slane %v266, 2
      %v577 = vrot.slane %v267, 2
      %v578 = vsel %vm569, %v576, %v577
      %v579 = vrot.slane %v268, 2
      %v580 = vrot.slane %v269, 2
      %v581 = vsel %vm569, %v579, %v580
      %v582 = vrot.slane %v270, 2
      %v583 = vrot.slane %v271, 2
      %v584 = vsel %vm569, %v582, %v583
      %v585 = vrot.slane %v272, 2
      %v586 = vrot.slane %v273, 2
      %v587 = vsel %vm569, %v585, %v586
      %v588 = vrot.slane %v274, 2
      %v589 = vrot.slane %v275, 2
      %v590 = vsel %vm569, %v588, %v589
      %v591 = vrot.slane %v276, 2
      %v592 = vrot.slane %v277, 2
      %v593 = vsel %vm569, %v591, %v592
      %s594 = scalar_lea.vmem %s244, 16
      %v595 = vld [vmem:[%s594] sm:$0xff]
      %v596 = vsel %vm326, %v572, 0
      %v598 = vsel %vm326, %v575, 0
      %v600 = vsel %vm326, %v578, 0
      %v602 = vsel %vm326, %v581, 0
      %v604 = vsel %vm326, %v584, 0
      %v606 = vsel %vm326, %v587, 0
      %v608 = vsel %vm326, %v590, 0
      %v610 = vsel %vm326, %v593, 0
      %612 = vmatprep.subr.mxu0 0.0
      %613 = vmatpush1.msra.mxu0 %v595
      %614 = vmatprep.subr.mxu0 0.0
      %615 = vmatpush1.msra.mxu0 0.0
      %616 = vmatprep.subr.mxu0 0.0
      %617 = vmatpush1.msra.mxu0 0.0
      %618 = vmatprep.subr.mxu0 0.0
      %619 = vmatpush1.msra.mxu0 0.0
      %620 = vmatprep.subr.mxu0 0.0
      %621 = vmatpush1.msra.mxu0 0.0
      %622 = vmatprep.subr.mxu0 0.0
      %623 = vmatpush1.msra.mxu0 0.0
      %624 = vmatprep.subr.mxu0 0.0
      %625 = vmatpush1.msra.mxu0 0.0
      %626 = vmatprep.subr.mxu0 0.0
      %627 = vmatpush1.msra.mxu0 0.0
      %628 = vmatprep.subr.mxu0 0.0
      %629 = vmatpush1.msra.mxu0 0.0
      %630 = vmatprep.subr.mxu0 0.0
      %631 = vmatpush1.msra.mxu0 0.0
      %632 = vmatprep.subr.mxu0 0.0
      %633 = vmatpush1.msra.mxu0 0.0
      %634 = vmatprep.subr.mxu0 0.0
      %635 = vmatpush1.msra.mxu0 0.0
      %636 = vmatprep.subr.mxu0 0.0
      %637 = vmatpush1.msra.mxu0 0.0
      %638 = vmatprep.subr.mxu0 0.0
      %639 = vmatpush1.msra.mxu0 0.0
      %640 = vmatprep.subr.mxu0 0.0
      %641 = vmatpush1.msra.mxu0 0.0
      %642 = vmatprep.subr.mxu0 0.0
      %643 = vmatpush1.msra.mxu0 0.0
      %644 = vmatprep.subr.mxu0 0.0
      %645 = vmatpush1.msra.mxu0 0.0
      %646 = vmatprep.subr.mxu0 0.0
      %647 = vmatpush1.msra.mxu0 0.0
      %648 = vmatprep.subr.mxu0 0.0
      %649 = vmatpush1.msra.mxu0 0.0
      %650 = vmatprep.subr.mxu0 0.0
      %651 = vmatpush1.msra.mxu0 0.0
      %652 = vmatprep.subr.mxu0 0.0
      %653 = vmatpush1.msra.mxu0 0.0
      %654 = vmatprep.subr.mxu0 0.0
      %655 = vmatpush1.msra.mxu0 0.0
      %656 = vmatprep.subr.mxu0 0.0
      %657 = vmatpush1.msra.mxu0 0.0
      %658 = vmatprep.subr.mxu0 0.0
      %659 = vmatpush1.msra.mxu0 0.0
      %660 = vmatprep.subr.mxu0 0.0
      %661 = vmatpush1.msra.mxu0 0.0
      %662 = vmatprep.subr.mxu0 0.0
      %663 = vmatpush1.msra.mxu0 0.0
      %664 = vmatprep.subr.mxu0 0.0
      %665 = vmatpush1.msra.mxu0 0.0
      %666 = vmatprep.subr.mxu0 0.0
      %667 = vmatpush1.msra.mxu0 0.0
      %668 = vmatprep.subr.mxu0 0.0
      %669 = vmatpush1.msra.mxu0 0.0
      %670 = vmatprep.subr.mxu0 0.0
      %671 = vmatpush1.msra.mxu0 0.0
      %672 = vmatprep.subr.mxu0 0.0
      %673 = vmatpush1.msra.mxu0 0.0
      %674 = vmatprep.subr.mxu0 0.0
      %675 = vmatpush1.msra.mxu0 0.0
      %676 = vmatprep.mubr.f32.mxu0 0.0
      %677 = vmatmul.mubr.f32.gmra.mrb[0].mxu0 %v596
      %v678 = vpop.f32.mrb[0].mxu0
      %v679 = vadd.f32 0.0, %v678
      %v680 = vpop.f32.mrb[0].mxu0
      %681 = vmatprep.mubr.f32.mxu0 0.0
      %682 = vmatmul.mubr.f32.gmra.mrb[0].mxu0 %v598
      %v683 = vpop.f32.mrb[0].mxu0
      %v684 = vadd.f32 0.0, %v683
      %v685 = vpop.f32.mrb[0].mxu0
      %686 = vmatprep.mubr.f32.mxu0 0.0
      %687 = vmatmul.mubr.f32.gmra.mrb[0].mxu0 %v600
      %v688 = vpop.f32.mrb[0].mxu0
      %v689 = vadd.f32 0.0, %v688
      %v690 = vpop.f32.mrb[0].mxu0
      %691 = vmatprep.mubr.f32.mxu0 0.0
      %692 = vmatmul.mubr.f32.gmra.mrb[0].mxu0 %v602
      %v693 = vpop.f32.mrb[0].mxu0
      %v694 = vadd.f32 0.0, %v693
      %v695 = vpop.f32.mrb[0].mxu0
      %696 = vmatprep.mubr.f32.mxu0 0.0
      %697 = vmatmul.mubr.f32.gmra.mrb[0].mxu0 %v604
      %v698 = vpop.f32.mrb[0].mxu0
      %v699 = vadd.f32 0.0, %v698
      %v700 = vpop.f32.mrb[0].mxu0
      %701 = vmatprep.mubr.f32.mxu0 0.0
      %702 = vmatmul.mubr.f32.gmra.mrb[0].mxu0 %v606
      %v703 = vpop.f32.mrb[0].mxu0
      %v704 = vadd.f32 0.0, %v703
      %v705 = vpop.f32.mrb[0].mxu0
      %706 = vmatprep.mubr.f32.mxu0 0.0
      %707 = vmatmul.mubr.f32.gmra.mrb[0].mxu0 %v608
      %v708 = vpop.f32.mrb[0].mxu0
      %v709 = vadd.f32 0.0, %v708
      %v710 = vpop.f32.mrb[0].mxu0
      %711 = vmatprep.mubr.f32.mxu0 0.0
      %712 = vmatmul.mubr.f32.gmra.mrb[0].mxu0 %v610
      %v713 = vpop.f32.mrb[0].mxu0
      %v714 = vadd.f32 0.0, %v713
      %v715 = vpop.f32.mrb[0].mxu0
      %716 = vdwg.mxu0
      %v717 = vadd.f32 %v531, %v679
      %v718 = vadd.f32 %v536, %v684
      %v719 = vadd.f32 %v541, %v689
      %v720 = vadd.f32 %v546, %v694
      %v721 = vadd.f32 %v551, %v699
      %v722 = vadd.f32 %v556, %v704
      %v723 = vadd.f32 %v561, %v709
      %v724 = vadd.f32 %v566, %v714
      %s725 = scalar_lea.vmem %s244, 24
      %v726 = vld [vmem:[%s725] sm:$0xff]
      %v728 = vsel %vm326, %v278, 0
      %730 = vmatprep.subr.mxu0 0.0
      %731 = vmatpush1.msra.mxu0 %v726
      %732 = vmatprep.subr.mxu0 0.0
      %733 = vmatpush1.msra.mxu0 0.0
      %734 = vmatprep.subr.mxu0 0.0
      %735 = vmatpush1.msra.mxu0 0.0
      %736 = vmatprep.subr.mxu0 0.0
      %737 = vmatpush1.msra.mxu0 0.0
      %738 = vmatprep.subr.mxu0 0.0
      %739 = vmatpush1.msra.mxu0 0.0
      %740 = vmatprep.subr.mxu0 0.0
      %741 = vmatpush1.msra.mxu0 0.0
      %742 = vmatprep.subr.mxu0 0.0
      %743 = vmatpush1.msra.mxu0 0.0
      %744 = vmatprep.subr.mxu0 0.0
      %745 = vmatpush1.msra.mxu0 0.0
      %746 = vmatprep.subr.mxu0 0.0
      %747 = vmatpush1.msra.mxu0 0.0
      %748 = vmatprep.subr.mxu0 0.0
      %749 = vmatpush1.msra.mxu0 0.0
      %750 = vmatprep.subr.mxu0 0.0
      %751 = vmatpush1.msra.mxu0 0.0
      %752 = vmatprep.subr.mxu0 0.0
      %753 = vmatpush1.msra.mxu0 0.0
      %754 = vmatprep.subr.mxu0 0.0
      %755 = vmatpush1.msra.mxu0 0.0
      %756 = vmatprep.subr.mxu0 0.0
      %757 = vmatpush1.msra.mxu0 0.0
      %758 = vmatprep.subr.mxu0 0.0
      %759 = vmatpush1.msra.mxu0 0.0
      %760 = vmatprep.subr.mxu0 0.0
      %761 = vmatpush1.msra.mxu0 0.0
      %762 = vmatprep.subr.mxu0 0.0
      %763 = vmatpush1.msra.mxu0 0.0
      %764 = vmatprep.subr.mxu0 0.0
      %765 = vmatpush1.msra.mxu0 0.0
      %766 = vmatprep.subr.mxu0 0.0
      %767 = vmatpush1.msra.mxu0 0.0
      %768 = vmatprep.subr.mxu0 0.0
      %769 = vmatpush1.msra.mxu0 0.0
      %770 = vmatprep.subr.mxu0 0.0
      %771 = vmatpush1.msra.mxu0 0.0
      %772 = vmatprep.subr.mxu0 0.0
      %773 = vmatpush1.msra.mxu0 0.0
      %774 = vmatprep.subr.mxu0 0.0
      %775 = vmatpush1.msra.mxu0 0.0
      %776 = vmatprep.subr.mxu0 0.0
      %777 = vmatpush1.msra.mxu0 0.0
      %778 = vmatprep.subr.mxu0 0.0
      %779 = vmatpush1.msra.mxu0 0.0
      %780 = vmatprep.subr.mxu0 0.0
      %781 = vmatpush1.msra.mxu0 0.0
      %782 = vmatprep.subr.mxu0 0.0
      %783 = vmatpush1.msra.mxu0 0.0
      %784 = vmatprep.subr.mxu0 0.0
      %785 = vmatpush1.msra.mxu0 0.0
      %786 = vmatprep.subr.mxu0 0.0
      %787 = vmatpush1.msra.mxu0 0.0
      %788 = vmatprep.subr.mxu0 0.0
      %789 = vmatpush1.msra.mxu0 0.0
      %790 = vmatprep.subr.mxu0 0.0
      %791 = vmatpush1.msra.mxu0 0.0
      %792 = vmatprep.subr.mxu0 0.0
      %793 = vmatpush1.msra.mxu0 0.0
      %794 = vmatprep.mubr.f32.mxu0 0.0
      %795 = vmatmul.mubr.f32.gmra.mrb[0].mxu0 %v450
      %v796 = vpop.f32.mrb[0].mxu0
      %v797 = vadd.f32 0.0, %v796
      %v798 = vpop.f32.mrb[0].mxu0
      %799 = vmatprep.mubr.f32.mxu0 0.0
      %800 = vmatmul.mubr.f32.gmra.mrb[0].mxu0 %v452
      %v801 = vpop.f32.mrb[0].mxu0
      %v802 = vadd.f32 0.0, %v801
      %v803 = vpop.f32.mrb[0].mxu0
      %804 = vmatprep.mubr.f32.mxu0 0.0
      %805 = vmatmul.mubr.f32.gmra.mrb[0].mxu0 %v454
      %v806 = vpop.f32.mrb[0].mxu0
      %v807 = vadd.f32 0.0, %v806
      %v808 = vpop.f32.mrb[0].mxu0
      %809 = vmatprep.mubr.f32.mxu0 0.0
      %810 = vmatmul.mubr.f32.gmra.mrb[0].mxu0 %v456
      %v811 = vpop.f32.mrb[0].mxu0
      %v812 = vadd.f32 0.0, %v811
      %v813 = vpop.f32.mrb[0].mxu0
      %814 = vmatprep.mubr.f32.mxu0 0.0
      %815 = vmatmul.mubr.f32.gmra.mrb[0].mxu0 %v458
      %v816 = vpop.f32.mrb[0].mxu0
      %v817 = vadd.f32 0.0, %v816
      %v818 = vpop.f32.mrb[0].mxu0
      %819 = vmatprep.mubr.f32.mxu0 0.0
      %820 = vmatmul.mubr.f32.gmra.mrb[0].mxu0 %v460
      %v821 = vpop.f32.mrb[0].mxu0
      %v822 = vadd.f32 0.0, %v821
      %v823 = vpop.f32.mrb[0].mxu0
      %824 = vmatprep.mubr.f32.mxu0 0.0
      %825 = vmatmul.mubr.f32.gmra.mrb[0].mxu0 %v462
      %v826 = vpop.f32.mrb[0].mxu0
      %v827 = vadd.f32 0.0, %v826
      %v828 = vpop.f32.mrb[0].mxu0
      %829 = vmatprep.mubr.f32.mxu0 0.0
      %830 = vmatmul.mubr.f32.gmra.mrb[0].mxu0 %v728
      %v831 = vpop.f32.mrb[0].mxu0
      %v832 = vadd.f32 0.0, %v831
      %v833 = vpop.f32.mrb[0].mxu0
      %834 = vdwg.mxu0
      %v835 = vadd.f32 %v717, %v797
      %v836 = vadd.f32 %v718, %v802
      %v837 = vadd.f32 %v719, %v807
      %v838 = vadd.f32 %v720, %v812
      %v839 = vadd.f32 %v721, %v817
      %v840 = vadd.f32 %v722, %v822
      %v841 = vadd.f32 %v723, %v827
      %v842 = vadd.f32 %v724, %v832
      %v844 = vrot.slane %v278, 1
      %v845 = vrot.slane %v279, 1
      %v846 = vsel %vm299, %v844, %v845
      %s847 = scalar_lea.vmem %s244, 32
      %v848 = vld [vmem:[%s847] sm:$0xff]
      %v849 = vsel %vm326, %v846, 0
      %851 = vmatprep.subr.mxu0 0.0
      %852 = vmatpush1.msra.mxu0 %v848
      %853 = vmatprep.subr.mxu0 0.0
      %854 = vmatpush1.msra.mxu0 0.0
      %855 = vmatprep.subr.mxu0 0.0
      %856 = vmatpush1.msra.mxu0 0.0
      %857 = vmatprep.subr.mxu0 0.0
      %858 = vmatpush1.msra.mxu0 0.0
      %859 = vmatprep.subr.mxu0 0.0
      %860 = vmatpush1.msra.mxu0 0.0
      %861 = vmatprep.subr.mxu0 0.0
      %862 = vmatpush1.msra.mxu0 0.0
      %863 = vmatprep.subr.mxu0 0.0
      %864 = vmatpush1.msra.mxu0 0.0
      %865 = vmatprep.subr.mxu0 0.0
      %866 = vmatpush1.msra.mxu0 0.0
      %867 = vmatprep.subr.mxu0 0.0
      %868 = vmatpush1.msra.mxu0 0.0
      %869 = vmatprep.subr.mxu0 0.0
      %870 = vmatpush1.msra.mxu0 0.0
      %871 = vmatprep.subr.mxu0 0.0
      %872 = vmatpush1.msra.mxu0 0.0
      %873 = vmatprep.subr.mxu0 0.0
      %874 = vmatpush1.msra.mxu0 0.0
      %875 = vmatprep.subr.mxu0 0.0
      %876 = vmatpush1.msra.mxu0 0.0
      %877 = vmatprep.subr.mxu0 0.0
      %878 = vmatpush1.msra.mxu0 0.0
      %879 = vmatprep.subr.mxu0 0.0
      %880 = vmatpush1.msra.mxu0 0.0
      %881 = vmatprep.subr.mxu0 0.0
      %882 = vmatpush1.msra.mxu0 0.0
      %883 = vmatprep.subr.mxu0 0.0
      %884 = vmatpush1.msra.mxu0 0.0
      %885 = vmatprep.subr.mxu0 0.0
      %886 = vmatpush1.msra.mxu0 0.0
      %887 = vmatprep.subr.mxu0 0.0
      %888 = vmatpush1.msra.mxu0 0.0
      %889 = vmatprep.subr.mxu0 0.0
      %890 = vmatpush1.msra.mxu0 0.0
      %891 = vmatprep.subr.mxu0 0.0
      %892 = vmatpush1.msra.mxu0 0.0
      %893 = vmatprep.subr.mxu0 0.0
      %894 = vmatpush1.msra.mxu0 0.0
      %895 = vmatprep.subr.mxu0 0.0
      %896 = vmatpush1.msra.mxu0 0.0
      %897 = vmatprep.subr.mxu0 0.0
      %898 = vmatpush1.msra.mxu0 0.0
      %899 = vmatprep.subr.mxu0 0.0
      %900 = vmatpush1.msra.mxu0 0.0
      %901 = vmatprep.subr.mxu0 0.0
      %902 = vmatpush1.msra.mxu0 0.0
      %903 = vmatprep.subr.mxu0 0.0
      %904 = vmatpush1.msra.mxu0 0.0
      %905 = vmatprep.subr.mxu0 0.0
      %906 = vmatpush1.msra.mxu0 0.0
      %907 = vmatprep.subr.mxu0 0.0
      %908 = vmatpush1.msra.mxu0 0.0
      %909 = vmatprep.subr.mxu0 0.0
      %910 = vmatpush1.msra.mxu0 0.0
      %911 = vmatprep.subr.mxu0 0.0
      %912 = vmatpush1.msra.mxu0 0.0
      %913 = vmatprep.subr.mxu0 0.0
      %914 = vmatpush1.msra.mxu0 0.0
      %915 = vmatprep.mubr.f32.mxu0 0.0
      %916 = vmatmul.mubr.f32.gmra.mrb[0].mxu0 %v329
      %v917 = vpop.f32.mrb[0].mxu0
      %v918 = vadd.f32 0.0, %v917
      %v919 = vpop.f32.mrb[0].mxu0
      %920 = vmatprep.mubr.f32.mxu0 0.0
      %921 = vmatmul.mubr.f32.gmra.mrb[0].mxu0 %v331
      %v922 = vpop.f32.mrb[0].mxu0
      %v923 = vadd.f32 0.0, %v922
      %v924 = vpop.f32.mrb[0].mxu0
      %925 = vmatprep.mubr.f32.mxu0 0.0
      %926 = vmatmul.mubr.f32.gmra.mrb[0].mxu0 %v333
      %v927 = vpop.f32.mrb[0].mxu0
      %v928 = vadd.f32 0.0, %v927
      %v929 = vpop.f32.mrb[0].mxu0
      %930 = vmatprep.mubr.f32.mxu0 0.0
      %931 = vmatmul.mubr.f32.gmra.mrb[0].mxu0 %v335
      %v932 = vpop.f32.mrb[0].mxu0
      %v933 = vadd.f32 0.0, %v932
      %v934 = vpop.f32.mrb[0].mxu0
      %935 = vmatprep.mubr.f32.mxu0 0.0
      %936 = vmatmul.mubr.f32.gmra.mrb[0].mxu0 %v337
      %v937 = vpop.f32.mrb[0].mxu0
      %v938 = vadd.f32 0.0, %v937
      %v939 = vpop.f32.mrb[0].mxu0
      %940 = vmatprep.mubr.f32.mxu0 0.0
      %941 = vmatmul.mubr.f32.gmra.mrb[0].mxu0 %v339
      %v942 = vpop.f32.mrb[0].mxu0
      %v943 = vadd.f32 0.0, %v942
      %v944 = vpop.f32.mrb[0].mxu0
      %945 = vmatprep.mubr.f32.mxu0 0.0
      %946 = vmatmul.mubr.f32.gmra.mrb[0].mxu0 %v341
      %v947 = vpop.f32.mrb[0].mxu0
      %v948 = vadd.f32 0.0, %v947
      %v949 = vpop.f32.mrb[0].mxu0
      %950 = vmatprep.mubr.f32.mxu0 0.0
      %951 = vmatmul.mubr.f32.gmra.mrb[0].mxu0 %v849
      %v952 = vpop.f32.mrb[0].mxu0
      %v953 = vadd.f32 0.0, %v952
      %v954 = vpop.f32.mrb[0].mxu0
      %955 = vdwg.mxu0
      %v956 = vadd.f32 %v835, %v918
      %v957 = vadd.f32 %v836, %v923
      %v958 = vadd.f32 %v837, %v928
      %v959 = vadd.f32 %v838, %v933
      %v960 = vadd.f32 %v839, %v938
      %v961 = vadd.f32 %v840, %v943
      %v962 = vadd.f32 %v841, %v948
      %v963 = vadd.f32 %v842, %v953
      %v964 = vrot.slane %v278, 2
      %v965 = vrot.slane %v279, 2
      %v966 = vsel %vm569, %v964, %v965
      %s967 = scalar_lea.vmem %s244, 40
      %v968 = vld [vmem:[%s967] sm:$0xff]
      %v969 = vsel %vm326, %v966, 0
      %971 = vmatprep.subr.mxu0 0.0
      %972 = vmatpush1.msra.mxu0 %v968
      %973 = vmatprep.subr.mxu0 0.0
      %974 = vmatpush1.msra.mxu0 0.0
      %975 = vmatprep.subr.mxu0 0.0
      %976 = vmatpush1.msra.mxu0 0.0
      %977 = vmatprep.subr.mxu0 0.0
      %978 = vmatpush1.msra.mxu0 0.0
      %979 = vmatprep.subr.mxu0 0.0
      %980 = vmatpush1.msra.mxu0 0.0
      %981 = vmatprep.subr.mxu0 0.0
      %982 = vmatpush1.msra.mxu0 0.0
      %983 = vmatprep.subr.mxu0 0.0
      %984 = vmatpush1.msra.mxu0 0.0
      %985 = vmatprep.subr.mxu0 0.0
      %986 = vmatpush1.msra.mxu0 0.0
      %987 = vmatprep.subr.mxu0 0.0
      %988 = vmatpush1.msra.mxu0 0.0
      %989 = vmatprep.subr.mxu0 0.0
      %990 = vmatpush1.msra.mxu0 0.0
      %991 = vmatprep.subr.mxu0 0.0
      %992 = vmatpush1.msra.mxu0 0.0
      %993 = vmatprep.subr.mxu0 0.0
      %994 = vmatpush1.msra.mxu0 0.0
      %995 = vmatprep.subr.mxu0 0.0
      %996 = vmatpush1.msra.mxu0 0.0
      %997 = vmatprep.subr.mxu0 0.0
      %998 = vmatpush1.msra.mxu0 0.0
      %999 = vmatprep.subr.mxu0 0.0
      %1000 = vmatpush1.msra.mxu0 0.0
      %1001 = vmatprep.subr.mxu0 0.0
      %1002 = vmatpush1.msra.mxu0 0.0
      %1003 = vmatprep.subr.mxu0 0.0
      %1004 = vmatpush1.msra.mxu0 0.0
      %1005 = vmatprep.subr.mxu0 0.0
      %1006 = vmatpush1.msra.mxu0 0.0
      %1007 = vmatprep.subr.mxu0 0.0
      %1008 = vmatpush1.msra.mxu0 0.0
      %1009 = vmatprep.subr.mxu0 0.0
      %1010 = vmatpush1.msra.mxu0 0.0
      %1011 = vmatprep.subr.mxu0 0.0
      %1012 = vmatpush1.msra.mxu0 0.0
      %1013 = vmatprep.subr.mxu0 0.0
      %1014 = vmatpush1.msra.mxu0 0.0
      %1015 = vmatprep.subr.mxu0 0.0
      %1016 = vmatpush1.msra.mxu0 0.0
      %1017 = vmatprep.subr.mxu0 0.0
      %1018 = vmatpush1.msra.mxu0 0.0
      %1019 = vmatprep.subr.mxu0 0.0
      %1020 = vmatpush1.msra.mxu0 0.0
      %1021 = vmatprep.subr.mxu0 0.0
      %1022 = vmatpush1.msra.mxu0 0.0
      %1023 = vmatprep.subr.mxu0 0.0
      %1024 = vmatpush1.msra.mxu0 0.0
      %1025 = vmatprep.subr.mxu0 0.0
      %1026 = vmatpush1.msra.mxu0 0.0
      %1027 = vmatprep.subr.mxu0 0.0
      %1028 = vmatpush1.msra.mxu0 0.0
      %1029 = vmatprep.subr.mxu0 0.0
      %1030 = vmatpush1.msra.mxu0 0.0
      %1031 = vmatprep.subr.mxu0 0.0
      %1032 = vmatpush1.msra.mxu0 0.0
      %1033 = vmatprep.subr.mxu0 0.0
      %1034 = vmatpush1.msra.mxu0 0.0
      %1035 = vmatprep.mubr.f32.mxu0 0.0
      %1036 = vmatmul.mubr.f32.gmra.mrb[0].mxu0 %v598
      %v1037 = vpop.f32.mrb[0].mxu0
      %v1038 = vadd.f32 0.0, %v1037
      %v1039 = vpop.f32.mrb[0].mxu0
      %1040 = vmatprep.mubr.f32.mxu0 0.0
      %1041 = vmatmul.mubr.f32.gmra.mrb[0].mxu0 %v600
      %v1042 = vpop.f32.mrb[0].mxu0
      %v1043 = vadd.f32 0.0, %v1042
      %v1044 = vpop.f32.mrb[0].mxu0
      %1045 = vmatprep.mubr.f32.mxu0 0.0
      %1046 = vmatmul.mubr.f32.gmra.mrb[0].mxu0 %v602
      %v1047 = vpop.f32.mrb[0].mxu0
      %v1048 = vadd.f32 0.0, %v1047
      %v1049 = vpop.f32.mrb[0].mxu0
      %1050 = vmatprep.mubr.f32.mxu0 0.0
      %1051 = vmatmul.mubr.f32.gmra.mrb[0].mxu0 %v604
      %v1052 = vpop.f32.mrb[0].mxu0
      %v1053 = vadd.f32 0.0, %v1052
      %v1054 = vpop.f32.mrb[0].mxu0
      %1055 = vmatprep.mubr.f32.mxu0 0.0
      %1056 = vmatmul.mubr.f32.gmra.mrb[0].mxu0 %v606
      %v1057 = vpop.f32.mrb[0].mxu0
      %v1058 = vadd.f32 0.0, %v1057
      %v1059 = vpop.f32.mrb[0].mxu0
      %1060 = vmatprep.mubr.f32.mxu0 0.0
      %1061 = vmatmul.mubr.f32.gmra.mrb[0].mxu0 %v608
      %v1062 = vpop.f32.mrb[0].mxu0
      %v1063 = vadd.f32 0.0, %v1062
      %v1064 = vpop.f32.mrb[0].mxu0
      %1065 = vmatprep.mubr.f32.mxu0 0.0
      %1066 = vmatmul.mubr.f32.gmra.mrb[0].mxu0 %v610
      %v1067 = vpop.f32.mrb[0].mxu0
      %v1068 = vadd.f32 0.0, %v1067
      %v1069 = vpop.f32.mrb[0].mxu0
      %1070 = vmatprep.mubr.f32.mxu0 0.0
      %1071 = vmatmul.mubr.f32.gmra.mrb[0].mxu0 %v969
      %v1072 = vpop.f32.mrb[0].mxu0
      %v1073 = vadd.f32 0.0, %v1072
      %v1074 = vpop.f32.mrb[0].mxu0
      %1075 = vdwg.mxu0
      %v1076 = vadd.f32 %v956, %v1038
      %v1077 = vadd.f32 %v957, %v1043
      %v1078 = vadd.f32 %v958, %v1048
      %v1079 = vadd.f32 %v959, %v1053
      %v1080 = vadd.f32 %v960, %v1058
      %v1081 = vadd.f32 %v961, %v1063
      %v1082 = vadd.f32 %v962, %v1068
      %v1083 = vadd.f32 %v963, %v1073
      %s1084 = scalar_lea.vmem %s244, 48
      %v1085 = vld [vmem:[%s1084] sm:$0xff]
      %v1087 = vsel %vm326, %v280, 0
      %1089 = vmatprep.subr.mxu0 0.0
      %1090 = vmatpush1.msra.mxu0 %v1085
      %1091 = vmatprep.subr.mxu0 0.0
      %1092 = vmatpush1.msra.mxu0 0.0
      %1093 = vmatprep.subr.mxu0 0.0
      %1094 = vmatpush1.msra.mxu0 0.0
      %1095 = vmatprep.subr.mxu0 0.0
      %1096 = vmatpush1.msra.mxu0 0.0
      %1097 = vmatprep.subr.mxu0 0.0
      %1098 = vmatpush1.msra.mxu0 0.0
      %1099 = vmatprep.subr.mxu0 0.0
      %1100 = vmatpush1.msra.mxu0 0.0
      %1101 = vmatprep.subr.mxu0 0.0
      %1102 = vmatpush1.msra.mxu0 0.0
      %1103 = vmatprep.subr.mxu0 0.0
      %1104 = vmatpush1.msra.mxu0 0.0
      %1105 = vmatprep.subr.mxu0 0.0
      %1106 = vmatpush1.msra.mxu0 0.0
      %1107 = vmatprep.subr.mxu0 0.0
      %1108 = vmatpush1.msra.mxu0 0.0
      %1109 = vmatprep.subr.mxu0 0.0
      %1110 = vmatpush1.msra.mxu0 0.0
      %1111 = vmatprep.subr.mxu0 0.0
      %1112 = vmatpush1.msra.mxu0 0.0
      %1113 = vmatprep.subr.mxu0 0.0
      %1114 = vmatpush1.msra.mxu0 0.0
      %1115 = vmatprep.subr.mxu0 0.0
      %1116 = vmatpush1.msra.mxu0 0.0
      %1117 = vmatprep.subr.mxu0 0.0
      %1118 = vmatpush1.msra.mxu0 0.0
      %1119 = vmatprep.subr.mxu0 0.0
      %1120 = vmatpush1.msra.mxu0 0.0
      %1121 = vmatprep.subr.mxu0 0.0
      %1122 = vmatpush1.msra.mxu0 0.0
      %1123 = vmatprep.subr.mxu0 0.0
      %1124 = vmatpush1.msra.mxu0 0.0
      %1125 = vmatprep.subr.mxu0 0.0
      %1126 = vmatpush1.msra.mxu0 0.0
      %1127 = vmatprep.subr.mxu0 0.0
      %1128 = vmatpush1.msra.mxu0 0.0
      %1129 = vmatprep.subr.mxu0 0.0
      %1130 = vmatpush1.msra.mxu0 0.0
      %1131 = vmatprep.subr.mxu0 0.0
      %1132 = vmatpush1.msra.mxu0 0.0
      %1133 = vmatprep.subr.mxu0 0.0
      %1134 = vmatpush1.msra.mxu0 0.0
      %1135 = vmatprep.subr.mxu0 0.0
      %1136 = vmatpush1.msra.mxu0 0.0
      %1137 = vmatprep.subr.mxu0 0.0
      %1138 = vmatpush1.msra.mxu0 0.0
      %1139 = vmatprep.subr.mxu0 0.0
      %1140 = vmatpush1.msra.mxu0 0.0
      %1141 = vmatprep.subr.mxu0 0.0
      %1142 = vmatpush1.msra.mxu0 0.0
      %1143 = vmatprep.subr.mxu0 0.0
      %1144 = vmatpush1.msra.mxu0 0.0
      %1145 = vmatprep.subr.mxu0 0.0
      %1146 = vmatpush1.msra.mxu0 0.0
      %1147 = vmatprep.subr.mxu0 0.0
      %1148 = vmatpush1.msra.mxu0 0.0
      %1149 = vmatprep.subr.mxu0 0.0
      %1150 = vmatpush1.msra.mxu0 0.0
      %1151 = vmatprep.subr.mxu0 0.0
      %1152 = vmatpush1.msra.mxu0 0.0
      %1153 = vmatprep.mubr.f32.mxu0 0.0
      %1154 = vmatmul.mubr.f32.gmra.mrb[0].mxu0 %v452
      %v1155 = vpop.f32.mrb[0].mxu0
      %v1156 = vadd.f32 0.0, %v1155
      %v1157 = vpop.f32.mrb[0].mxu0
      %1158 = vmatprep.mubr.f32.mxu0 0.0
      %1159 = vmatmul.mubr.f32.gmra.mrb[0].mxu0 %v454
      %v1160 = vpop.f32.mrb[0].mxu0
      %v1161 = vadd.f32 0.0, %v1160
      %v1162 = vpop.f32.mrb[0].mxu0
      %1163 = vmatprep.mubr.f32.mxu0 0.0
      %1164 = vmatmul.mubr.f32.gmra.mrb[0].mxu0 %v456
      %v1165 = vpop.f32.mrb[0].mxu0
      %v1166 = vadd.f32 0.0, %v1165
      %v1167 = vpop.f32.mrb[0].mxu0
      %1168 = vmatprep.mubr.f32.mxu0 0.0
      %1169 = vmatmul.mubr.f32.gmra.mrb[0].mxu0 %v458
      %v1170 = vpop.f32.mrb[0].mxu0
      %v1171 = vadd.f32 0.0, %v1170
      %v1172 = vpop.f32.mrb[0].mxu0
      %1173 = vmatprep.mubr.f32.mxu0 0.0
      %1174 = vmatmul.mubr.f32.gmra.mrb[0].mxu0 %v460
      %v1175 = vpop.f32.mrb[0].mxu0
      %v1176 = vadd.f32 0.0, %v1175
      %v1177 = vpop.f32.mrb[0].mxu0
      %1178 = vmatprep.mubr.f32.mxu0 0.0
      %1179 = vmatmul.mubr.f32.gmra.mrb[0].mxu0 %v462
      %v1180 = vpop.f32.mrb[0].mxu0
      %v1181 = vadd.f32 0.0, %v1180
      %v1182 = vpop.f32.mrb[0].mxu0
      %1183 = vmatprep.mubr.f32.mxu0 0.0
      %1184 = vmatmul.mubr.f32.gmra.mrb[0].mxu0 %v728
      %v1185 = vpop.f32.mrb[0].mxu0
      %v1186 = vadd.f32 0.0, %v1185
      %v1187 = vpop.f32.mrb[0].mxu0
      %1188 = vmatprep.mubr.f32.mxu0 0.0
      %1189 = vmatmul.mubr.f32.gmra.mrb[0].mxu0 %v1087
      %v1190 = vpop.f32.mrb[0].mxu0
      %v1191 = vadd.f32 0.0, %v1190
      %v1192 = vpop.f32.mrb[0].mxu0
      %1193 = vdwg.mxu0
      %v1194 = vadd.f32 %v1076, %v1156
      %v1195 = vadd.f32 %v1077, %v1161
      %v1196 = vadd.f32 %v1078, %v1166
      %v1197 = vadd.f32 %v1079, %v1171
      %v1198 = vadd.f32 %v1080, %v1176
      %v1199 = vadd.f32 %v1081, %v1181
      %v1200 = vadd.f32 %v1082, %v1186
      %v1201 = vadd.f32 %v1083, %v1191
      %v1203 = vrot.slane %v280, 1
      %v1204 = vrot.slane %v281, 1
      %v1205 = vsel %vm299, %v1203, %v1204
      %s1206 = scalar_lea.vmem %s244, 56
      %v1207 = vld [vmem:[%s1206] sm:$0xff]
      %v1208 = vsel %vm326, %v1205, 0
      %1210 = vmatprep.subr.mxu0 0.0
      %1211 = vmatpush1.msra.mxu0 %v1207
      %1212 = vmatprep.subr.mxu0 0.0
      %1213 = vmatpush1.msra.mxu0 0.0
      %1214 = vmatprep.subr.mxu0 0.0
      %1215 = vmatpush1.msra.mxu0 0.0
      %1216 = vmatprep.subr.mxu0 0.0
      %1217 = vmatpush1.msra.mxu0 0.0
      %1218 = vmatprep.subr.mxu0 0.0
      %1219 = vmatpush1.msra.mxu0 0.0
      %1220 = vmatprep.subr.mxu0 0.0
      %1221 = vmatpush1.msra.mxu0 0.0
      %1222 = vmatprep.subr.mxu0 0.0
      %1223 = vmatpush1.msra.mxu0 0.0
      %1224 = vmatprep.subr.mxu0 0.0
      %1225 = vmatpush1.msra.mxu0 0.0
      %1226 = vmatprep.subr.mxu0 0.0
      %1227 = vmatpush1.msra.mxu0 0.0
      %1228 = vmatprep.subr.mxu0 0.0
      %1229 = vmatpush1.msra.mxu0 0.0
      %1230 = vmatprep.subr.mxu0 0.0
      %1231 = vmatpush1.msra.mxu0 0.0
      %1232 = vmatprep.subr.mxu0 0.0
      %1233 = vmatpush1.msra.mxu0 0.0
      %1234 = vmatprep.subr.mxu0 0.0
      %1235 = vmatpush1.msra.mxu0 0.0
      %1236 = vmatprep.subr.mxu0 0.0
      %1237 = vmatpush1.msra.mxu0 0.0
      %1238 = vmatprep.subr.mxu0 0.0
      %1239 = vmatpush1.msra.mxu0 0.0
      %1240 = vmatprep.subr.mxu0 0.0
      %1241 = vmatpush1.msra.mxu0 0.0
      %1242 = vmatprep.subr.mxu0 0.0
      %1243 = vmatpush1.msra.mxu0 0.0
      %1244 = vmatprep.subr.mxu0 0.0
      %1245 = vmatpush1.msra.mxu0 0.0
      %1246 = vmatprep.subr.mxu0 0.0
      %1247 = vmatpush1.msra.mxu0 0.0
      %1248 = vmatprep.subr.mxu0 0.0
      %1249 = vmatpush1.msra.mxu0 0.0
      %1250 = vmatprep.subr.mxu0 0.0
      %1251 = vmatpush1.msra.mxu0 0.0
      %1252 = vmatprep.subr.mxu0 0.0
      %1253 = vmatpush1.msra.mxu0 0.0
      %1254 = vmatprep.subr.mxu0 0.0
      %1255 = vmatpush1.msra.mxu0 0.0
      %1256 = vmatprep.subr.mxu0 0.0
      %1257 = vmatpush1.msra.mxu0 0.0
      %1258 = vmatprep.subr.mxu0 0.0
      %1259 = vmatpush1.msra.mxu0 0.0
      %1260 = vmatprep.subr.mxu0 0.0
      %1261 = vmatpush1.msra.mxu0 0.0
      %1262 = vmatprep.subr.mxu0 0.0
      %1263 = vmatpush1.msra.mxu0 0.0
      %1264 = vmatprep.subr.mxu0 0.0
      %1265 = vmatpush1.msra.mxu0 0.0
      %1266 = vmatprep.subr.mxu0 0.0
      %1267 = vmatpush1.msra.mxu0 0.0
      %1268 = vmatprep.subr.mxu0 0.0
      %1269 = vmatpush1.msra.mxu0 0.0
      %1270 = vmatprep.subr.mxu0 0.0
      %1271 = vmatpush1.msra.mxu0 0.0
      %1272 = vmatprep.subr.mxu0 0.0
      %1273 = vmatpush1.msra.mxu0 0.0
      %1274 = vmatprep.mubr.f32.mxu0 0.0
      %1275 = vmatmul.mubr.f32.gmra.mrb[0].mxu0 %v331
      %v1276 = vpop.f32.mrb[0].mxu0
      %v1277 = vadd.f32 0.0, %v1276
      %v1278 = vpop.f32.mrb[0].mxu0
      %1279 = vmatprep.mubr.f32.mxu0 0.0
      %1280 = vmatmul.mubr.f32.gmra.mrb[0].mxu0 %v333
      %v1281 = vpop.f32.mrb[0].mxu0
      %v1282 = vadd.f32 0.0, %v1281
      %v1283 = vpop.f32.mrb[0].mxu0
      %1284 = vmatprep.mubr.f32.mxu0 0.0
      %1285 = vmatmul.mubr.f32.gmra.mrb[0].mxu0 %v335
      %v1286 = vpop.f32.mrb[0].mxu0
      %v1287 = vadd.f32 0.0, %v1286
      %v1288 = vpop.f32.mrb[0].mxu0
      %1289 = vmatprep.mubr.f32.mxu0 0.0
      %1290 = vmatmul.mubr.f32.gmra.mrb[0].mxu0 %v337
      %v1291 = vpop.f32.mrb[0].mxu0
      %v1292 = vadd.f32 0.0, %v1291
      %v1293 = vpop.f32.mrb[0].mxu0
      %1294 = vmatprep.mubr.f32.mxu0 0.0
      %1295 = vmatmul.mubr.f32.gmra.mrb[0].mxu0 %v339
      %v1296 = vpop.f32.mrb[0].mxu0
      %v1297 = vadd.f32 0.0, %v1296
      %v1298 = vpop.f32.mrb[0].mxu0
      %1299 = vmatprep.mubr.f32.mxu0 0.0
      %1300 = vmatmul.mubr.f32.gmra.mrb[0].mxu0 %v341
      %v1301 = vpop.f32.mrb[0].mxu0
      %v1302 = vadd.f32 0.0, %v1301
      %v1303 = vpop.f32.mrb[0].mxu0
      %1304 = vmatprep.mubr.f32.mxu0 0.0
      %1305 = vmatmul.mubr.f32.gmra.mrb[0].mxu0 %v849
      %v1306 = vpop.f32.mrb[0].mxu0
      %v1307 = vadd.f32 0.0, %v1306
      %v1308 = vpop.f32.mrb[0].mxu0
      %1309 = vmatprep.mubr.f32.mxu0 0.0
      %1310 = vmatmul.mubr.f32.gmra.mrb[0].mxu0 %v1208
      %v1311 = vpop.f32.mrb[0].mxu0
      %v1312 = vadd.f32 0.0, %v1311
      %v1313 = vpop.f32.mrb[0].mxu0
      %1314 = vdwg.mxu0
      %v1315 = vadd.f32 %v1194, %v1277
      %v1316 = vadd.f32 %v1195, %v1282
      %v1317 = vadd.f32 %v1196, %v1287
      %v1318 = vadd.f32 %v1197, %v1292
      %v1319 = vadd.f32 %v1198, %v1297
      %v1320 = vadd.f32 %v1199, %v1302
      %v1321 = vadd.f32 %v1200, %v1307
      %v1322 = vadd.f32 %v1201, %v1312
      %v1323 = vrot.slane %v280, 2
      %v1324 = vrot.slane %v281, 2
      %v1325 = vsel %vm569, %v1323, %v1324
      %s1326 = scalar_lea.vmem %s244, 64
      %v1327 = vld [vmem:[%s1326] sm:$0xff]
      %v1328 = vsel %vm326, %v1325, 0
      %1330 = vmatprep.subr.mxu0 0.0
      %1331 = vmatpush1.msra.mxu0 %v1327
      %1332 = vmatprep.subr.mxu0 0.0
      %1333 = vmatpush1.msra.mxu0 0.0
      %1334 = vmatprep.subr.mxu0 0.0
      %1335 = vmatpush1.msra.mxu0 0.0
      %1336 = vmatprep.subr.mxu0 0.0
      %1337 = vmatpush1.msra.mxu0 0.0
      %1338 = vmatprep.subr.mxu0 0.0
      %1339 = vmatpush1.msra.mxu0 0.0
      %1340 = vmatprep.subr.mxu0 0.0
      %1341 = vmatpush1.msra.mxu0 0.0
      %1342 = vmatprep.subr.mxu0 0.0
      %1343 = vmatpush1.msra.mxu0 0.0
      %1344 = vmatprep.subr.mxu0 0.0
      %1345 = vmatpush1.msra.mxu0 0.0
      %1346 = vmatprep.subr.mxu0 0.0
      %1347 = vmatpush1.msra.mxu0 0.0
      %1348 = vmatprep.subr.mxu0 0.0
      %1349 = vmatpush1.msra.mxu0 0.0
      %1350 = vmatprep.subr.mxu0 0.0
      %1351 = vmatpush1.msra.mxu0 0.0
      %1352 = vmatprep.subr.mxu0 0.0
      %1353 = vmatpush1.msra.mxu0 0.0
      %1354 = vmatprep.subr.mxu0 0.0
      %1355 = vmatpush1.msra.mxu0 0.0
      %1356 = vmatprep.subr.mxu0 0.0
      %1357 = vmatpush1.msra.mxu0 0.0
      %1358 = vmatprep.subr.mxu0 0.0
      %1359 = vmatpush1.msra.mxu0 0.0
      %1360 = vmatprep.subr.mxu0 0.0
      %1361 = vmatpush1.msra.mxu0 0.0
      %1362 = vmatprep.subr.mxu0 0.0
      %1363 = vmatpush1.msra.mxu0 0.0
      %1364 = vmatprep.subr.mxu0 0.0
      %1365 = vmatpush1.msra.mxu0 0.0
      %1366 = vmatprep.subr.mxu0 0.0
      %1367 = vmatpush1.msra.mxu0 0.0
      %1368 = vmatprep.subr.mxu0 0.0
      %1369 = vmatpush1.msra.mxu0 0.0
      %1370 = vmatprep.subr.mxu0 0.0
      %1371 = vmatpush1.msra.mxu0 0.0
      %1372 = vmatprep.subr.mxu0 0.0
      %1373 = vmatpush1.msra.mxu0 0.0
      %1374 = vmatprep.subr.mxu0 0.0
      %1375 = vmatpush1.msra.mxu0 0.0
      %1376 = vmatprep.subr.mxu0 0.0
      %1377 = vmatpush1.msra.mxu0 0.0
      %1378 = vmatprep.subr.mxu0 0.0
      %1379 = vmatpush1.msra.mxu0 0.0
      %1380 = vmatprep.subr.mxu0 0.0
      %1381 = vmatpush1.msra.mxu0 0.0
      %1382 = vmatprep.subr.mxu0 0.0
      %1383 = vmatpush1.msra.mxu0 0.0
      %1384 = vmatprep.subr.mxu0 0.0
      %1385 = vmatpush1.msra.mxu0 0.0
      %1386 = vmatprep.subr.mxu0 0.0
      %1387 = vmatpush1.msra.mxu0 0.0
      %1388 = vmatprep.subr.mxu0 0.0
      %1389 = vmatpush1.msra.mxu0 0.0
      %1390 = vmatprep.subr.mxu0 0.0
      %1391 = vmatpush1.msra.mxu0 0.0
      %1392 = vmatprep.subr.mxu0 0.0
      %1393 = vmatpush1.msra.mxu0 0.0
      %1394 = vmatprep.mubr.f32.mxu0 0.0
      %1395 = vmatmul.mubr.f32.gmra.mrb[0].mxu0 %v600
      %v1396 = vpop.f32.mrb[0].mxu0
      %v1397 = vadd.f32 0.0, %v1396
      %v1398 = vpop.f32.mrb[0].mxu0
      %1399 = vmatprep.mubr.f32.mxu0 0.0
      %1400 = vmatmul.mubr.f32.gmra.mrb[0].mxu0 %v602
      %v1401 = vpop.f32.mrb[0].mxu0
      %v1402 = vadd.f32 0.0, %v1401
      %v1403 = vpop.f32.mrb[0].mxu0
      %1404 = vmatprep.mubr.f32.mxu0 0.0
      %1405 = vmatmul.mubr.f32.gmra.mrb[0].mxu0 %v604
      %v1406 = vpop.f32.mrb[0].mxu0
      %v1407 = vadd.f32 0.0, %v1406
      %v1408 = vpop.f32.mrb[0].mxu0
      %1409 = vmatprep.mubr.f32.mxu0 0.0
      %1410 = vmatmul.mubr.f32.gmra.mrb[0].mxu0 %v606
      %v1411 = vpop.f32.mrb[0].mxu0
      %v1412 = vadd.f32 0.0, %v1411
      %v1413 = vpop.f32.mrb[0].mxu0
      %1414 = vmatprep.mubr.f32.mxu0 0.0
      %1415 = vmatmul.mubr.f32.gmra.mrb[0].mxu0 %v608
      %v1416 = vpop.f32.mrb[0].mxu0
      %v1417 = vadd.f32 0.0, %v1416
      %v1418 = vpop.f32.mrb[0].mxu0
      %1419 = vmatprep.mubr.f32.mxu0 0.0
      %1420 = vmatmul.mubr.f32.gmra.mrb[0].mxu0 %v610
      %v1421 = vpop.f32.mrb[0].mxu0
      %v1422 = vadd.f32 0.0, %v1421
      %v1423 = vpop.f32.mrb[0].mxu0
      %1424 = vmatprep.mubr.f32.mxu0 0.0
      %1425 = vmatmul.mubr.f32.gmra.mrb[0].mxu0 %v969
      %v1426 = vpop.f32.mrb[0].mxu0
      %v1427 = vadd.f32 0.0, %v1426
      %v1428 = vpop.f32.mrb[0].mxu0
      %1429 = vmatprep.mubr.f32.mxu0 0.0
      %1430 = vmatmul.mubr.f32.gmra.mrb[0].mxu0 %v1328
      %v1431 = vpop.f32.mrb[0].mxu0
      %v1432 = vadd.f32 0.0, %v1431
      %v1433 = vpop.f32.mrb[0].mxu0
      %1434 = vdwg.mxu0
      %v1435 = vadd.f32 %v1315, %v1397
      %v1436 = vadd.f32 %v1316, %v1402
      %v1437 = vadd.f32 %v1317, %v1407
      %v1438 = vadd.f32 %v1318, %v1412
      %v1439 = vadd.f32 %v1319, %v1417
      %v1440 = vadd.f32 %v1320, %v1422
      %v1441 = vadd.f32 %v1321, %v1427
      %v1442 = vadd.f32 %v1322, %v1432
      %p1443 = scmp.eq.s32.totalorder %s22, 0
      // Predicated region
      $region29: #{inception_forward.11} parent=27 // pred_check
        %p1444 = pneg %p1443
      $region30: #{inception_forward.11} parent=27 // pred_check_branch
        %1446 = sbr.rel (%p1444) target = $region32
      $region31: #{inception_forward.11} parent=27 // pred_region
        %vm1447 = vcmask 130048
        %1448 = vst.msk [vmem:[%s253] sm:$0xff] %vm1447, %v1435
        %1449 = vst.msk [vmem:[%s253 + $0x8] sm:$0xff] %vm1447, %v1436
        %1450 = vst.msk [vmem:[%s253 + $0x10] sm:$0xff] %vm1447, %v1437
        %1451 = vst.msk [vmem:[%s253 + $0x18] sm:$0xff] %vm1447, %v1438
        %1452 = vst.msk [vmem:[%s253 + $0x20] sm:$0xff] %vm1447, %v1439
        %1453 = vst.msk [vmem:[%s253 + $0x28] sm:$0xff] %vm1447, %v1440
        %1454 = vst.msk [vmem:[%s253 + $0x30] sm:$0xff] %vm1447, %v1441
        %1455 = vst.msk [vmem:[%s253 + $0x38] sm:$0xff] %vm1447, %v1442
      $region32: #{inception_forward.11} parent=27 // pred_fallthru
        _
      %p1456 = scmp.gt.s32.totalorder %s22, 0
      // Predicated region
      $region33: #{inception_forward.11} parent=27 // pred_check
        %p1457 = pneg %p1456
      $region34: #{inception_forward.11} parent=27 // pred_check_branch
        %1459 = sbr.rel (%p1457) target = $region36
      $region35: #{inception_forward.11} parent=27 // pred_region
        %v1460 = vld [vmem:[%s253] sm:$0xff]
        %v1461 = vld [vmem:[%s253 + $0x8] sm:$0xff]
        %v1462 = vld [vmem:[%s253 + $0x10] sm:$0xff]
        %v1463 = vld [vmem:[%s253 + $0x18] sm:$0xff]
        %v1464 = vld [vmem:[%s253 + $0x20] sm:$0xff]
        %v1465 = vld [vmem:[%s253 + $0x28] sm:$0xff]
        %v1466 = vld [vmem:[%s253 + $0x30] sm:$0xff]
        %v1467 = vld [vmem:[%s253 + $0x38] sm:$0xff]
        %v1468 = vadd.f32 %v1460, %v1435
        %v1469 = vadd.f32 %v1461, %v1436
        %v1470 = vadd.f32 %v1462, %v1437
        %v1471 = vadd.f32 %v1463, %v1438
        %v1472 = vadd.f32 %v1464, %v1439
        %v1473 = vadd.f32 %v1465, %v1440
        %v1474 = vadd.f32 %v1466, %v1441
        %v1475 = vadd.f32 %v1467, %v1442
        %vm1476 = vcmask 130048
        %1477 = vst.msk [vmem:[%s253] sm:$0xff] %vm1476, %v1468
        %1478 = vst.msk [vmem:[%s253 + $0x8] sm:$0xff] %vm1476, %v1469
        %1479 = vst.msk [vmem:[%s253 + $0x10] sm:$0xff] %vm1476, %v1470
        %1480 = vst.msk [vmem:[%s253 + $0x18] sm:$0xff] %vm1476, %v1471
        %1481 = vst.msk [vmem:[%s253 + $0x20] sm:$0xff] %vm1476, %v1472
        %1482 = vst.msk [vmem:[%s253 + $0x28] sm:$0xff] %vm1476, %v1473
        %1483 = vst.msk [vmem:[%s253 + $0x30] sm:$0xff] %vm1476, %v1474
        %1484 = vst.msk [vmem:[%s253 + $0x38] sm:$0xff] %vm1476, %v1475
      $region36: #{inception_forward.11} parent=27 // pred_fallthru
        _
      %p1485 = scmp.eq.s32.totalorder %s22, 2
      // Predicated region
      $region37: #{inception_forward.11} parent=27 // pred_check
        %p1486 = pneg %p1485
      $region38: #{inception_forward.11} parent=27 // pred_check_branch
        %1488 = sbr.rel (%p1486) target = $region40
      $region39: #{inception_forward.11} parent=27 // pred_region
        %v1489 = vld [vmem:[%s253] sm:$0xff]
        %v1490 = vld [vmem:[%s253 + $0x8] sm:$0xff]
        %v1491 = vld [vmem:[%s253 + $0x10] sm:$0xff]
        %v1492 = vld [vmem:[%s253 + $0x18] sm:$0xff]
        %v1493 = vld [vmem:[%s253 + $0x20] sm:$0xff]
        %v1494 = vld [vmem:[%s253 + $0x28] sm:$0xff]
        %v1495 = vld [vmem:[%s253 + $0x30] sm:$0xff]
        %v1496 = vld [vmem:[%s253 + $0x38] sm:$0xff]
        %vm1497 = vcmask 130048
        %v1498 = vsel %vm1497, %v1489, 0.0
        %v1499 = vsel %vm1497, %v1490, 0.0
        %v1500 = vadd.f32 %v1498, %v1499
        %v1501 = vsel %vm1497, %v1491, 0.0
        %v1502 = vadd.f32 %v1500, %v1501
        %v1503 = vsel %vm1497, %v1492, 0.0
        %v1504 = vadd.f32 %v1502, %v1503
        %v1505 = vsel %vm1497, %v1493, 0.0
        %v1506 = vadd.f32 %v1504, %v1505
        %v1507 = vsel %vm1497, %v1494, 0.0
        %v1508 = vadd.f32 %v1506, %v1507
        %v1509 = vsel %vm1497, %v1495, 0.0
        %v1510 = vadd.f32 %v1508, %v1509
        %v1511 = vsel %vm1497, %v1496, 0.0
        %v1512 = vadd.f32 %v1510, %v1511
        %v1513 = vrot.slane %v1512, 4
        %v1514 = vadd.f32 %v1512, %v1513
        %v1515 = vrot.slane %v1514, 2
        %v1516 = vadd.f32 %v1514, %v1515
        %v1517 = vrot.slane %v1516, 1
        %v1518 = vadd.f32 %v1516, %v1517
        %v1519 = vmul.f32 %v1518, 0.015625
        %v1520 = vsub.f32 %v1489, %v1519
        %v1521 = vsub.f32 %v1490, %v1519
        %v1522 = vsub.f32 %v1491, %v1519
        %v1523 = vsub.f32 %v1492, %v1519
        %v1524 = vsub.f32 %v1493, %v1519
        %v1525 = vsub.f32 %v1494, %v1519
        %v1526 = vsub.f32 %v1495, %v1519
        %v1527 = vsub.f32 %v1496, %v1519
        %v1528 = vmul.f32 %v1520, %v1520
        %v1529 = vmul.f32 %v1521, %v1521
        %v1530 = vmul.f32 %v1522, %v1522
        %v1531 = vmul.f32 %v1523, %v1523
        %v1532 = vmul.f32 %v1524, %v1524
        %v1533 = vmul.f32 %v1525, %v1525
        %v1534 = vmul.f32 %v1526, %v1526
        %v1535 = vmul.f32 %v1527, %v1527
        %v1536 = vsel %vm1497, %v1528, 0.0
        %v1537 = vsel %vm1497, %v1529, 0.0
        %v1538 = vadd.f32 %v1536, %v1537
        %v1539 = vsel %vm1497, %v1530, 0.0
        %v1540 = vadd.f32 %v1538, %v1539
        %v1541 = vsel %vm1497, %v1531, 0.0
        %v1542 = vadd.f32 %v1540, %v1541
        %v1543 = vsel %vm1497, %v1532, 0.0
        %v1544 = vadd.f32 %v1542, %v1543
        %v1545 = vsel %vm1497, %v1533, 0.0
        %v1546 = vadd.f32 %v1544, %v1545
        %v1547 = vsel %vm1497, %v1534, 0.0
        %v1548 = vadd.f32 %v1546, %v1547
        %v1549 = vsel %vm1497, %v1535, 0.0
        %v1550 = vadd.f32 %v1548, %v1549
        %v1551 = vrot.slane %v1550, 4
        %v1552 = vadd.f32 %v1550, %v1551
        %v1553 = vrot.slane %v1552, 2
        %v1554 = vadd.f32 %v1552, %v1553
        %v1555 = vrot.slane %v1554, 1
        %v1556 = vadd.f32 %v1554, %v1555
        %vm1557 = vcmask 1040384
        %v1558 = vsel %vm1557, %v1519, %v1556
        %vm1559 = vcmask 123904
        %1560 = vst.msk [vmem:[%s261] sm:$0x3] %vm1559, %v1558
      $region40: #{inception_forward.11} parent=27 // pred_fallthru
        _
      %p1561 = scmp.lt.s32.totalorder %s20, 1
      %s1562 = scalar_select %p1561, %s20, 1
      %p1563 = scmp.lt.s32.totalorder %s21, 3
      %s1564 = scalar_select %p1563, %s21, 3
      %s1565 = smul.addr %s1564, 8
      %s1566 = smul.addr %s1562, 32
      %s1567 = sadd.s32 %s1565, %s1566
      %s1568 = smul.addr %s1567, 8
      %s1569 = scalar_lea.vmem %s2, %s1568
      %p1570 = scmp.lt.s32.totalorder %s20, 1
      %s1571 = scalar_select %p1570, %s20, 1
      %p1572 = scmp.lt.s32.totalorder %s21, 3
      %s1573 = scalar_select %p1572, %s21, 3
      %s1574 = smul.addr %s1571, 4
      %s1575 = sadd.s32 %s1573, %s1574
      %s1576 = smul.addr %s1575, 2
      %s1577 = scalar_lea.vmem %s3, %s1576
      // Predicated region
      $region41: #{inception_forward.11} parent=27 // pred_check
        %p1578 = pneg %p110
      $region42: #{inception_forward.11} parent=27 // pred_check_branch
        %1580 = sbr.rel (%p1578) target = $region44
      $region43: #{inception_forward.11} parent=27 // pred_region
        _
      $region44: #{inception_forward.11} parent=27 // pred_fallthru
        _
      // Predicated region
      $region45: #{inception_forward.11} parent=27 // pred_check
        %p1581 = pneg %p138
      $region46: #{inception_forward.11} parent=27 // pred_check_branch
        %1583 = sbr.rel (%p1581) target = $region48
      $region47: #{inception_forward.11} parent=27 // pred_region
        _
      $region48: #{inception_forward.11} parent=27 // pred_fallthru
        _
    $region28: #{inception_forward.11} parent=5 // pred_fallthru
      _
    %p1584 = scmp.le.s32.totalorder 2, %s10
    // Predicated region
    $region49: #{inception_forward.11} parent=5 // pred_check
      %p1585 = pneg %p1584
    $region50: #{inception_forward.11} parent=5 // pred_check_branch
      %1587 = sbr.rel (%p1585) target = $region52
    $region51: #{inception_forward.11} parent=5 // pred_region
      %s1588 = ssub.s32 %s10, 2
      // Predicated region
      $region53: #{inception_forward.11} parent=51 // pred_check
        %p1589 = pneg %p116
      $region54: #{inception_forward.11} parent=51 // pred_check_branch
        %1591 = sbr.rel (%p1589) target = $region56
      $region55: #{inception_forward.11} parent=51 // pred_region
        %p1592 = scmp.lt.s32.totalorder %s23, 1
        %s1593 = scalar_select %p1592, %s23, 1
        %p1594 = scmp.lt.s32.totalorder %s24, 3
        %s1595 = scalar_select %p1594, %s24, 3
        %s1596 = smul.addr %s1595, 8
        %s1597 = smul.addr %s1593, 32
        %s1598 = sadd.s32 %s1596, %s1597
        %s1599 = smul.addr %s1598, 8
        %s1600 = scalar_lea.vmem %s2, %s1599
      $region56: #{inception_forward.11} parent=51 // pred_fallthru
        _
      // Predicated region
      $region57: #{inception_forward.11} parent=51 // pred_check
        %p1601 = pneg %p144
      $region58: #{inception_forward.11} parent=51 // pred_check_branch
        %1603 = sbr.rel (%p1601) target = $region60
      $region59: #{inception_forward.11} parent=51 // pred_region
        %p1604 = scmp.lt.s32.totalorder %s23, 1
        %s1605 = scalar_select %p1604, %s23, 1
        %p1606 = scmp.lt.s32.totalorder %s24, 3
        %s1607 = scalar_select %p1606, %s24, 3
        %s1608 = smul.addr %s1605, 4
        %s1609 = sadd.s32 %s1607, %s1608
        %s1610 = smul.addr %s1609, 2
        %s1611 = scalar_lea.vmem %s3, %s1610
      $region60: #{inception_forward.11} parent=51 // pred_fallthru
        _
    $region52: #{inception_forward.11} parent=5 // pred_fallthru
      _
  $region6: #{inception_forward.11} parent=0 // loop_footer
    %s14 = sadd.s32 1, %s10
  $region7: #{inception_forward.11} parent=0 // loop_footer_branch
    %9 = sbr.rel target = $region3
  $region8: #{inception_forward.11} parent=0 // loop_exit
    _

// kernel: inception_forward.12
$region0: #{inception_forward.12}
  #allocation0 [shape = 'u32[]', space=smem, size = 0x4, offset = 0x4, fixed_abs, tag = 'smem constant byte address 0x4 - core index']
  #allocation1 [shape = 'u32[144,128]{1,0:T(1,128)}', space=vmem, size = 0x12000, scoped, tag = 'internal scratch']
  #allocation2 [shape = 'f32[8,8,16]{2,1,0:T(8,128)}', space=vmem, size = 0x8000, scoped, tag = 'scratch operand']
  %s0 = inlined_call_operand.vmem [shape: f32[2,6,10,10,16], index: 0, kind: input, shape index: {}]
  %s1 = inlined_call_operand.vmem [shape: f32[16,8], index: 1, kind: input, shape index: {}]
  %s2 = inlined_call_operand.vmem [shape: f32[2,4,8,8,8], index: 2, kind: output, shape index: {0}]
  %s3 = inlined_call_operand.vmem [shape: f32[2,4,2,8], index: 3, kind: output, shape index: {1}]
  %4 = xla_tuple %s2, %s3
  %s5 = sld [smem:[#allocation0]]
  $region61: #{inception_forward.12} parent=0
    _
  %s7 = ssub.s32 1, %s5
  %s8 = scalar_select 0, %s7, %s5
  loop: start=0, step=1, limit=26
  $region2: #{inception_forward.12} parent=0 // loop_pre_header
    _
  $region3: #{inception_forward.12} parent=0 // loop_header
    %s10 = sphi 0, %s14
    %p11 = scmp.ge.s32.totalorder %s10, 26
    %s17 = sphi 0, %s36
    %s18 = sphi 0, %s32
    %s19 = sphi 0, %s28
    %s20 = sphi 0, %s17
    %s21 = sphi 0, %s18
    %s22 = sphi 0, %s19
    %s23 = sphi 0, %s20
    %s24 = sphi 0, %s21
    %s25 = sphi 0, %s22
    %s43 = sphi 0, %s45
    %s46 = sphi 0, %s43
    %s47 = sphi 0, %s46
    %s63 = sphi 0, %s47
    %s67 = sphi 0, %s67
    %s69 = sphi 0, %s67
    %s70 = sphi 0, %s69
    %s84 = sphi 0, %s70
    %s92 = sphi 0, %s94
    %s95 = sphi 0, %s92
    %s96 = sphi 0, %s95
    %s112 = sphi 0, %s96
    %s120 = sphi 0, %s122
    %s123 = sphi 0, %s120
    %s124 = sphi 0, %s123
    %s140 = sphi 0, %s124
  $region4: #{inception_forward.12} parent=0 // loop_header_branch
    %13 = sbr.rel (%p11) target = $region8
  $region5: #{inception_forward.12} parent=0 // loop_body
    %s15 = ssub.s32 %s10, 1
    %s16 = ssub.s32 %s10, 2
    %s26 = sadd.s32 1, %s19
    %p27 = scmp.ge.s32.totalorder %s26, 3
    %s28 = scalar_select %p27, 0, %s26
    %s29 = sadd.s32 1, %s18
    %s30 = scalar_select %p27, %s29, %s18
    %p31 = scmp.ge.s32.totalorder %s30, 4
    %s32 = scalar_select %p31, 0, %s30
    %s33 = sadd.s32 1, %s17
    %s34 = scalar_select %p31, %s33, %s17
    %p35 = scmp.ge.s32.totalorder %s34, 2
    %s36 = scalar_select %p35, 0, %s34
    %s37 = sadd.s32 %s18, %s19
    %s38 = sadd.s32 %s32, %s28
    %s39 = ssub.s32 %s17, %s36
    %s40 = ssub.s32 %s37, %s38
    %s41 = sor.u32 %s39, %s40
    %p42 = scmp.eq.s32.totalorder %s41, 0
    %s44 = sadd.s32 %s43, 1
    %s45 = scalar_select %p42, %s43, %s44
    %p48 = pneg %p42
    %p49 = scmp.eq.s32.totalorder %s10, 23
    %p50 = por %p48, %p49
    %p51 = scmp.ne.s32.totalorder %s43, %s46
    %p52 = scmp.eq.s32.totalorder %s10, 0
    %p53 = por %p51, %p52
    %p54 = scmp.ne.s32.totalorder %s43, %s46
    %p55 = scmp.eq.s32.totalorder %s15, 23
    %p56 = por %p54, %p55
    %p57 = scmp.ne.s32.totalorder %s46, %s47
    %p58 = scmp.eq.s32.totalorder %s15, 0
    %p59 = por %p57, %p58
    %p60 = scmp.ne.s32.totalorder %s46, %s47
    %p61 = scmp.eq.s32.totalorder %s16, 23
    %p62 = por %p60, %p61
    %p64 = scmp.ne.s32.totalorder %s47, %s63
    %p65 = scmp.eq.s32.totalorder %s16, 0
    %p66 = por %p64, %p65
    %s68 = sadd.s32 %s67, 1
    %p71 = scmp.eq.s32.totalorder %s10, 23
    %p72 = scmp.ne.s32.totalorder %s67, %s69
    %p73 = scmp.eq.s32.totalorder %s10, 0
    %p74 = por %p72, %p73
    %p75 = scmp.ne.s32.totalorder %s67, %s69
    %p76 = scmp.eq.s32.totalorder %s15, 23
    %p77 = por %p75, %p76
    %p78 = scmp.ne.s32.totalorder %s69, %s70
    %p79 = scmp.eq.s32.totalorder %s15, 0
    %p80 = por %p78, %p79
    %p81 = scmp.ne.s32.totalorder %s69, %s70
    %p82 = scmp.eq.s32.totalorder %s16, 23
    %p83 = por %p81, %p82
    %p85 = scmp.ne.s32.totalorder %s70, %s84
    %p86 = scmp.eq.s32.totalorder %s16, 0
    %p87 = por %p85, %p86
    %s88 = ssub.s32 %s17, %s36
    %s89 = ssub.s32 %s18, %s32
    %s90 = sor.u32 %s88, %s89
    %p91 = scmp.eq.s32.totalorder %s90, 0
    %s93 = sadd.s32 %s92, 1
    %s94 = scalar_select %p91, %s92, %s93
    %p97 = pneg %p91
    %p98 = scmp.eq.s32.totalorder %s10, 23
    %p99 = por %p97, %p98
    %p100 = scmp.ne.s32.totalorder %s92, %s95
    %p101 = scmp.eq.s32.totalorder %s10, 0
    %p102 = por %p100, %p101
    %p103 = scmp.ne.s32.totalorder %s92, %s95
    %p104 = scmp.eq.s32.totalorder %s15, 23
    %p105 = por %p103, %p104
    %p106 = scmp.ne.s32.totalorder %s95, %s96
    %p107 = scmp.eq.s32.totalorder %s15, 0
    %p108 = por %p106, %p107
    %p109 = scmp.ne.s32.totalorder %s95, %s96
    %p110 = scmp.eq.s32.totalorder %s16, 23
    %p111 = por %p109, %p110
    %p113 = scmp.ne.s32.totalorder %s96, %s112
    %p114 = scmp.eq.s32.totalorder %s16, 0
    %p115 = por %p113, %p114
    %s116 = ssub.s32 %s17, %s36
    %s117 = ssub.s32 %s18, %s32
    %s118 = sor.u32 %s116, %s117
    %p119 = scmp.eq.s32.totalorder %s118, 0
    %s121 = sadd.s32 %s120, 1
    %s122 = scalar_select %p119, %s120, %s121
    %p125 = pneg %p119
    %p126 = scmp.eq.s32.totalorder %s10, 23
    %p127 = por %p125, %p126
    %p128 = scmp.ne.s32.totalorder %s120, %s123
    %p129 = scmp.eq.s32.totalorder %s10, 0
    %p130 = por %p128, %p129
    %p131 = scmp.ne.s32.totalorder %s120, %s123
    %p132 = scmp.eq.s32.totalorder %s15, 23
    %p133 = por %p131, %p132
    %p134 = scmp.ne.s32.totalorder %s123, %s124
    %p135 = scmp.eq.s32.totalorder %s15, 0
    %p136 = por %p134, %p135
    %p137 = scmp.ne.s32.totalorder %s123, %s124
    %p138 = scmp.eq.s32.totalorder %s16, 23
    %p139 = por %p137, %p138
    %p141 = scmp.ne.s32.totalorder %s124, %s140
    %p142 = scmp.eq.s32.totalorder %s16, 0
    %p143 = por %p141, %p142
    %p144 = scmp.le.s32.totalorder 1, %s10
    %p145 = scmp.lt.s32.totalorder %s10, 25
    %p146 = pnand %p144, %p145
    %p147 = pneg %p146
    // Predicated region
    $region9: #{inception_forward.12} parent=5 // pred_check
      _
    $region10: #{inception_forward.12} parent=5 // pred_check_branch
      %149 = sbr.rel (%p146) target = $region12
    $region11: #{inception_forward.12} parent=5 // pred_region
      %s150 = ssub.s32 %s10, 1
      // Predicated region
      $region13: #{inception_forward.12} parent=11 // pred_check
        %p151 = pneg %p80
      $region14: #{inception_forward.12} parent=11 // pred_check_branch
        %153 = sbr.rel (%p151) target = $region16
      $region15: #{inception_forward.12} parent=11 // pred_region
        _
      $region16: #{inception_forward.12} parent=11 // pred_fallthru
        _
    $region12: #{inception_forward.12} parent=5 // pred_fallthru
      _
    %p154 = scmp.lt.s32.totalorder %s10, 24
    // Predicated region
    $region17: #{inception_forward.12} parent=5 // pred_check
      %p155 = pneg %p154
    $region18: #{inception_forward.12} parent=5 // pred_check_branch
      %157 = sbr.rel (%p155) target = $region20
    $region19: #{inception_forward.12} parent=5 // pred_region
      // Predicated region
      $region21: #{inception_forward.12} parent=19 // pred_check
        %p158 = pneg %p53
      $region22: #{inception_forward.12} parent=19 // pred_check_branch
        %160 = sbr.rel (%p158) target = $region24
      $region23: #{inception_forward.12} parent=19 // pred_region
        %s161 = sadd.s32 %s18, %s19
        %p162 = scmp.lt.s32.totalorder %s17, 1
        %s163 = scalar_select %p162, %s17, 1
        %p164 = scmp.lt.s32.totalorder %s161, 5
        %s165 = scalar_select %p164, %s161, 5
        %s166 = smul.addr %s165, 20
        %s167 = smul.addr %s163, 120
        %s168 = sadd.s32 %s166, %s167
        %s169 = smul.addr %s168, 8
        %s170 = scalar_lea.vmem %s0, %s169
        %s171 = sadd.s32 %s18, %s19
      $region24: #{inception_forward.12} parent=19 // pred_fallthru
        _
    $region20: #{inception_forward.12} parent=5 // pred_fallthru
      _
    %p172 = scmp.le.s32.totalorder 1, %s10
    %p173 = scmp.lt.s32.totalorder %s10, 25
    %p174 = pnand %p172, %p173
    %p175 = pneg %p174
    // Predicated region
    $region25: #{inception_forward.12} parent=5 // pred_check
      _
    $region26: #{inception_forward.12} parent=5 // pred_check_branch
      %177 = sbr.rel (%p174) target = $region28
    $region27: #{inception_forward.12} parent=5 // pred_region
      %s178 = ssub.s32 %s10, 1
      %s179 = sadd.s32 %s21, %s22
      %p180 = scmp.lt.s32.totalorder %s20, 1
      %s181 = scalar_select %p180, %s20, 1
      %p182 = scmp.lt.s32.totalorder %s179, 5
      %s183 = scalar_select %p182, %s179, 5
      %s184 = smul.addr %s183, 20
      %s185 = smul.addr %s181, 120
      %s186 = sadd.s32 %s184, %s185
      %s187 = smul.addr %s186, 8
      %s188 = scalar_lea.vmem %s0, %s187
      %p189 = pneg %p59
      %p190 = pneg %p56
      %p191 = pneg %p80
      %p192 = pneg %p77
      %p193 = pneg %p108
      %p194 = pneg %p105
      %p195 = scmp.lt.s32.totalorder %s20, 1
      %s196 = scalar_select %p195, %s20, 1
      %p197 = scmp.lt.s32.totalorder %s21, 3
      %s198 = scalar_select %p197, %s21, 3
      %s199 = smul.addr %s198, 8
      %s200 = smul.addr %s196, 32
      %s201 = sadd.s32 %s199, %s200
      %s202 = smul.addr %s201, 8
      %s203 = scalar_lea.vmem %s2, %s202
      %p204 = pneg %p136
      %p205 = pneg %p133
      %p206 = scmp.lt.s32.totalorder %s20, 1
      %s207 = scalar_select %p206, %s20, 1
      %p208 = scmp.lt.s32.totalorder %s21, 3
      %s209 = scalar_select %p208, %s21, 3
      %s210 = smul.addr %s207, 4
      %s211 = sadd.s32 %s209, %s210
      %s212 = smul.addr %s211, 2
      %s213 = scalar_lea.vmem %s3, %s212
      %s214 = sadd.s32 %s21, %s22
      %p215 = scmp.lt.s32.totalorder %s20, 1
      %s216 = scalar_select %p215, %s20, 1
      %p217 = scmp.lt.s32.totalorder %s214, 5
      %s218 = scalar_select %p217, %s214, 5
      %s219 = smul.addr %s218, 20
      %s220 = smul.addr %s216, 120
      %s221 = sadd.s32 %s219, %s220
      %s222 = smul.addr %s221, 8
      %s223 = scalar_lea.vmem %s0, %s222
      %s224 = sadd.s32 %s21, %s22
      %p225 = scmp.lt.s32.totalorder %s20, 1
      %s226 = scalar_select %p225, %s20, 1
      %p227 = scmp.lt.s32.totalorder %s21, 3
      %s228 = scalar_select %p227, %s21, 3
      %s229 = smul.addr %s228, 8
      %s230 = smul.addr %s226, 32
      %s231 = sadd.s32 %s229, %s230
      %s232 = smul.addr %s231, 8
      %s233 = scalar_lea.vmem %s2, %s232
      %p234 = scmp.lt.s32.totalorder %s20, 1
      %s235 = scalar_select %p234, %s20, 1
      %p236 = scmp.lt.s32.totalorder %s21, 3
      %s237 = scalar_select %p236, %s21, 3
      %s238 = smul.addr %s235, 4
      %s239 = sadd.s32 %s237, %s238
      %s240 = smul.addr %s239, 2
      %s241 = scalar_lea.vmem %s3, %s240
      %v242 = vld [vmem:[%s223] sm:$0xff]
      %v243 = vld [vmem:[%s223 + $0x8] sm:$0x3]
      %v244 = vld [vmem:[%s223 + $0x10] sm:$0xff]
      %v245 = vld [vmem:[%s223 + $0x18] sm:$0x3]
      %v246 = vld [vmem:[%s223 + $0x20] sm:$0xff]
      %v247 = vld [vmem:[%s223 + $0x28] sm:$0x3]
      %v248 = vld [vmem:[%s223 + $0x30] sm:$0xff]
      %v249 = vld [vmem:[%s223 + $0x38] sm:$0x3]
      %v250 = vld [vmem:[%s223 + $0x40] sm:$0xff]
      %v251 = vld [vmem:[%s223 + $0x48] sm:$0x3]
      %v252 = vld [vmem:[%s223 + $0x50] sm:$0xff]
      %v253 = vld [vmem:[%s223 + $0x58] sm:$0x3]
      %v254 = vld [vmem:[%s223 + $0x60] sm:$0xff]
      %v255 = vld [vmem:[%s223 + $0x68] sm:$0x3]
      %v256 = vld [vmem:[%s223 + $0x70] sm:$0xff]
      %v257 = vld [vmem:[%s223 + $0x78] sm:$0x3]
      %v258 = vld [vmem:[%s223 + $0x80] sm:$0xff]
      %v259 = vld [vmem:[%s223 + $0x88] sm:$0x3]
      %v260 = vld [vmem:[%s223 + $0x90] sm:$0xff]
      %v261 = vld [vmem:[%s223 + $0x98] sm:$0x3]
      %vm278 = vcmask 1046528
      %v279 = vrot.slane %v242, 1
      %v280 = vrot.slane %v243, 1
      %v281 = vsel %vm278, %v279, %v280
      %v282 = vrot.slane %v244, 1
      %v283 = vrot.slane %v245, 1
      %v284 = vsel %vm278, %v282, %v283
      %v285 = vrot.slane %v246, 1
      %v286 = vrot.slane %v247, 1
      %v287 = vsel %vm278, %v285, %v286
      %v288 = vrot.slane %v248, 1
      %v289 = vrot.slane %v249, 1
      %v290 = vsel %vm278, %v288, %v289
      %v291 = vrot.slane %v250, 1
      %v292 = vrot.slane %v251, 1
      %v293 = vsel %vm278, %v291, %v292
      %v294 = vrot.slane %v252, 1
      %v295 = vrot.slane %v253, 1
      %v296 = vsel %vm278, %v294, %v295
      %v297 = vrot.slane %v254, 1
      %v298 = vrot.slane %v255, 1
      %v299 = vsel %vm278, %v297, %v298
      %v300 = vrot.slane %v256, 1
      %v301 = vrot.slane %v257, 1
      %v302 = vsel %vm278, %v300, %v301
      %v311 = vmax.f32 %v242, %v281
      %v312 = vmax.f32 %v244, %v284
      %v313 = vmax.f32 %v246, %v287
      %v314 = vmax.f32 %v248, %v290
      %v315 = vmax.f32 %v250, %v293
      %v316 = vmax.f32 %v252, %v296
      %v317 = vmax.f32 %v254, %v299
      %v318 = vmax.f32 %v256, %v302
      %vm319 = vcmask 1045504
      %v320 = vrot.slane %v242, 2
      %v321 = vrot.slane %v243, 2
      %v322 = vsel %vm319, %v320, %v321
      %v323 = vrot.slane %v244, 2
      %v324 = vrot.slane %v245, 2
      %v325 = vsel %vm319, %v323, %v324
      %v326 = vrot.slane %v246, 2
      %v327 = vrot.slane %v247, 2
      %v328 = vsel %vm319, %v326, %v327
      %v329 = vrot.slane %v248, 2
      %v330 = vrot.slane %v249, 2
      %v331 = vsel %vm319, %v329, %v330
      %v332 = vrot.slane %v250, 2
      %v333 = vrot.slane %v251, 2
      %v334 = vsel %vm319, %v332, %v333
      %v335 = vrot.slane %v252, 2
      %v336 = vrot.slane %v253, 2
      %v337 = vsel %vm319, %v335, %v336
      %v338 = vrot.slane %v254, 2
      %v339 = vrot.slane %v255, 2
      %v340 = vsel %vm319, %v338, %v339
      %v341 = vrot.slane %v256, 2
      %v342 = vrot.slane %v257, 2
      %v343 = vsel %vm319, %v341, %v342
      %v352 = vmax.f32 %v311, %v322
      %v353 = vmax.f32 %v312, %v325
      %v354 = vmax.f32 %v313, %v328
      %v355 = vmax.f32 %v314, %v331
      %v356 = vmax.f32 %v315, %v334
      %v357 = vmax.f32 %v316, %v337
      %v358 = vmax.f32 %v317, %v340
      %v359 = vmax.f32 %v318, %v343
      %v360 = vmax.f32 %v352, %v244
      %v361 = vmax.f32 %v353, %v246
      %v362 = vmax.f32 %v354, %v248
      %v363 = vmax.f32 %v355, %v250
      %v364 = vmax.f32 %v356, %v252
      %v365 = vmax.f32 %v357, %v254
      %v366 = vmax.f32 %v358, %v256
      %v367 = vmax.f32 %v359, %v258
      %v370 = vrot.slane %v258, 1
      %v371 = vrot.slane %v259, 1
      %v372 = vsel %vm278, %v370, %v371
      %v374 = vmax.f32 %v360, %v284
      %v375 = vmax.f32 %v361, %v287
      %v376 = vmax.f32 %v362, %v290
      %v377 = vmax.f32 %v363, %v293
      %v378 = vmax.f32 %v364, %v296
      %v379 = vmax.f32 %v365, %v299
      %v380 = vmax.f32 %v366, %v302
      %v381 = vmax.f32 %v367, %v372
      %v382 = vrot.slane %v258, 2
      %v383 = vrot.slane %v259, 2
      %v384 = vsel %vm319, %v382, %v383
      %v386 = vmax.f32 %v374, %v325
      %v387 = vmax.f32 %v375, %v328
      %v388 = vmax.f32 %v376, %v331
      %v389 = vmax.f32 %v377, %v334
      %v390 = vmax.f32 %v378, %v337
      %v391 = vmax.f32 %v379, %v340
      %v392 = vmax.f32 %v380, %v343
      %v393 = vmax.f32 %v381, %v384
      %v394 = vmax.f32 %v386, %v246
      %v395 = vmax.f32 %v387, %v248
      %v396 = vmax.f32 %v388, %v250
      %v397 = vmax.f32 %v389, %v252
      %v398 = vmax.f32 %v390, %v254
      %v399 = vmax.f32 %v391, %v256
      %v400 = vmax.f32 %v392, %v258
      %v401 = vmax.f32 %v393, %v260
      %v404 = vrot.slane %v260, 1
      %v405 = vrot.slane %v261, 1
      %v406 = vsel %vm278, %v404, %v405
      %v408 = vmax.f32 %v394, %v287
      %v409 = vmax.f32 %v395, %v290
      %v410 = vmax.f32 %v396, %v293
      %v411 = vmax.f32 %v397, %v296
      %v412 = vmax.f32 %v398, %v299
      %v413 = vmax.f32 %v399, %v302
      %v414 = vmax.f32 %v400, %v372
      %v415 = vmax.f32 %v401, %v406
      %v416 = vrot.slane %v260, 2
      %v417 = vrot.slane %v261, 2
      %v418 = vsel %vm319, %v416, %v417
      %v420 = vmax.f32 %v408, %v328
      %v421 = vmax.f32 %v409, %v331
      %v422 = vmax.f32 %v410, %v334
      %v423 = vmax.f32 %v411, %v337
      %v424 = vmax.f32 %v412, %v340
      %v425 = vmax.f32 %v413, %v343
      %v426 = vmax.f32 %v414, %v384
      %v427 = vmax.f32 %v415, %v418
      %p428 = scmp.eq.s32.totalorder %s22, 0
      // Predicated region
      $region29: #{inception_forward.12} parent=27 // pred_check
        %p429 = pneg %p428
      $region30: #{inception_forward.12} parent=27 // pred_check_branch
        %431 = sbr.rel (%p429) target = $region32
      $region31: #{inception_forward.12} parent=27 // pred_region
        %vm432 = vcmask 130048
        %433 = vst.msk [vmem:[#allocation2] sm:$0xff] %vm432, %v420
        %434 = vst.msk [vmem:[#allocation2 + $0x8] sm:$0xff] %vm432, %v421
        %435 = vst.msk [vmem:[#allocation2 + $0x10] sm:$0xff] %vm432, %v422
        %436 = vst.msk [vmem:[#allocation2 + $0x18] sm:$0xff] %vm432, %v423
        %437 = vst.msk [vmem:[#allocation2 + $0x20] sm:$0xff] %vm432, %v424
        %438 = vst.msk [vmem:[#allocation2 + $0x28] sm:$0xff] %vm432, %v425
        %439 = vst.msk [vmem:[#allocation2 + $0x30] sm:$0xff] %vm432, %v426
        %440 = vst.msk [vmem:[#allocation2 + $0x38] sm:$0xff] %vm432, %v427
      $region32: #{inception_forward.12} parent=27 // pred_fallthru
        _
      %p441 = scmp.gt.s32.totalorder %s22, 0
      // Predicated region
      $region33: #{inception_forward.12} parent=27 // pred_check
        %p442 = pneg %p441
      $region34: #{inception_forward.12} parent=27 // pred_check_branch
        %444 = sbr.rel (%p442) target = $region36
      $region35: #{inception_forward.12} parent=27 // pred_region
        %v445 = vld [vmem:[#allocation2] sm:$0xff]
        %v446 = vld [vmem:[#allocation2 + $0x8] sm:$0xff]
        %v447 = vld [vmem:[#allocation2 + $0x10] sm:$0xff]
        %v448 = vld [vmem:[#allocation2 + $0x18] sm:$0xff]
        %v449 = vld [vmem:[#allocation2 + $0x20] sm:$0xff]
        %v450 = vld [vmem:[#allocation2 + $0x28] sm:$0xff]
        %v451 = vld [vmem:[#allocation2 + $0x30] sm:$0xff]
        %v452 = vld [vmem:[#allocation2 + $0x38] sm:$0xff]
        %v453 = vmax.f32 %v445, %v420
        %v454 = vmax.f32 %v446, %v421
        %v455 = vmax.f32 %v447, %v422
        %v456 = vmax.f32 %v448, %v423
        %v457 = vmax.f32 %v449, %v424
        %v458 = vmax.f32 %v450, %v425
        %v459 = vmax.f32 %v451, %v426
        %v460 = vmax.f32 %v452, %v427
        %vm461 = vcmask 130048
        %462 = vst.msk [vmem:[#allocation2] sm:$0xff] %vm461, %v453
        %463 = vst.msk [vmem:[#allocation2 + $0x8] sm:$0xff] %vm461, %v454
        %464 = vst.msk [vmem:[#allocation2 + $0x10] sm:$0xff] %vm461, %v455
        %465 = vst.msk [vmem:[#allocation2 + $0x18] sm:$0xff] %vm461, %v456
        %466 = vst.msk [vmem:[#allocation2 + $0x20] sm:$0xff] %vm461, %v457
        %467 = vst.msk [vmem:[#allocation2 + $0x28] sm:$0xff] %vm461, %v458
        %468 = vst.msk [vmem:[#allocation2 + $0x30] sm:$0xff] %vm461, %v459
        %469 = vst.msk [vmem:[#allocation2 + $0x38] sm:$0xff] %vm461, %v460
      $region36: #{inception_forward.12} parent=27 // pred_fallthru
        _
      %p470 = scmp.eq.s32.totalorder %s22, 2
      // Predicated region
      $region37: #{inception_forward.12} parent=27 // pred_check
        %p471 = pneg %p470
      $region38: #{inception_forward.12} parent=27 // pred_check_branch
        %473 = sbr.rel (%p471) target = $region40
      $region39: #{inception_forward.12} parent=27 // pred_region
        %v474 = vld [vmem:[#allocation2] sm:$0xff]
        %v475 = vld [vmem:[#allocation2 + $0x8] sm:$0xff]
        %v476 = vld [vmem:[#allocation2 + $0x10] sm:$0xff]
        %v477 = vld [vmem:[#allocation2 + $0x18] sm:$0xff]
        %v478 = vld [vmem:[#allocation2 + $0x20] sm:$0xff]
        %v479 = vld [vmem:[#allocation2 + $0x28] sm:$0xff]
        %v480 = vld [vmem:[#allocation2 + $0x30] sm:$0xff]
        %v481 = vld [vmem:[#allocation2 + $0x38] sm:$0xff]
        %v482 = vld [vmem:[%s1] sm:$0xff]
        %v483 = vld [vmem:[%s1 + $0x8] sm:$0xff]
        %vm484 = vcmask 130048
        %v486 = vsel %vm484, %v474, 0
        %v489 = vsel %vm484, %v475, 0
        %v492 = vsel %vm484, %v476, 0
        %v495 = vsel %vm484, %v477, 0
        %v498 = vsel %vm484, %v478, 0
        %v501 = vsel %vm484, %v479, 0
        %v504 = vsel %vm484, %v480, 0
        %v507 = vsel %vm484, %v481, 0
        %509 = vmatprep.subr.mxu0 0.0
        %510 = vmatpush1.msra.mxu0 %v482
        %511 = vmatprep.subr.mxu0 0.0
        %512 = vmatpush1.msra.mxu0 %v483
        %513 = vmatprep.subr.mxu0 0.0
        %514 = vmatpush1.msra.mxu0 0.0
        %515 = vmatprep.subr.mxu0 0.0
        %516 = vmatpush1.msra.mxu0 0.0
        %517 = vmatprep.subr.mxu0 0.0
        %518 = vmatpush1.msra.mxu0 0.0
        %519 = vmatprep.subr.mxu0 0.0
        %520 = vmatpush1.msra.mxu0 0.0
        %521 = vmatprep.subr.mxu0 0.0
        %522 = vmatpush1.msra.mxu0 0.0
        %523 = vmatprep.subr.mxu0 0.0
        %524 = vmatpush1.msra.mxu0 0.0
        %525 = vmatprep.subr.mxu0 0.0
        %526 = vmatpush1.msra.mxu0 0.0
        %527 = vmatprep.subr.mxu0 0.0
        %528 = vmatpush1.msra.mxu0 0.0
        %529 = vmatprep.subr.mxu0 0.0
        %530 = vmatpush1.msra.mxu0 0.0
        %531 = vmatprep.subr.mxu0 0.0
        %532 = vmatpush1.msra.mxu0 0.0
        %533 = vmatprep.subr.mxu0 0.0
        %534 = vmatpush1.msra.mxu0 0.0
        %535 = vmatprep.subr.mxu0 0.0
        %536 = vmatpush1.msra.mxu0 0.0
        %537 = vmatprep.subr.mxu0 0.0
        %538 = vmatpush1.msra.mxu0 0.0
        %539 = vmatprep.subr.mxu0 0.0
        %540 = vmatpush1.msra.mxu0 0.0
        %541 = vmatprep.subr.mxu0 0.0
        %542 = vmatpush1.msra.mxu0 0.0
        %543 = vmatprep.subr.mxu0 0.0
        %544 = vmatpush1.msra.mxu0 0.0
        %545 = vmatprep.subr.mxu0 0.0
        %546 = vmatpush1.msra.mxu0 0.0
        %547 = vmatprep.subr.mxu0 0.0
        %548 = vmatpush1.msra.mxu0 0.0
        %549 = vmatprep.subr.mxu0 0.0
        %550 = vmatpush1.msra.mxu0 0.0
        %551 = vmatprep.subr.mxu0 0.0
        %552 = vmatpush1.msra.mxu0 0.0
        %553 = vmatprep.subr.mxu0 0.0
        %554 = vmatpush1.msra.mxu0 0.0
        %555 = vmatprep.subr.mxu0 0.0
        %556 = vmatpush1.msra.mxu0 0.0
        %557 = vmatprep.subr.mxu0 0.0
        %558 = vmatpush1.msra.mxu0 0.0
        %559 = vmatprep.subr.mxu0 0.0
        %560 = vmatpush1.msra.mxu0 0.0
        %561 = vmatprep.subr.mxu0 0.0
        %562 = vmatpush1.msra.mxu0 0.0
        %563 = vmatprep.subr.mxu0 0.0
        %564 = vmatpush1.msra.mxu0 0.0
        %565 = vmatprep.subr.mxu0 0.0
        %566 = vmatpush1.msra.mxu0 0.0
        %567 = vmatprep.subr.mxu0 0.0
        %568 = vmatpush1.msra.mxu0 0.0
        %569 = vmatprep.subr.mxu0 0.0
        %570 = vmatpush1.msra.mxu0 0.0
        %571 = vmatprep.subr.mxu0 0.0
        %572 = vmatpush1.msra.mxu0 0.0
        %573 = vmatprep.mubr.f32.mxu0 0.0
        %574 = vmatmul.mubr.f32.gmra.mrb[0].mxu0 %v486
        %v575 = vpop.f32.mrb[0].mxu0
        %v576 = vadd.f32 0.0, %v575
        %v577 = vpop.f32.mrb[0].mxu0
        %578 = vmatprep.mubr.f32.mxu0 0.0
        %579 = vmatmul.mubr.f32.gmra.mrb[0].mxu0 %v489
        %v580 = vpop.f32.mrb[0].mxu0
        %v581 = vadd.f32 0.0, %v580
        %v582 = vpop.f32.mrb[0].mxu0
        %583 = vmatprep.mubr.f32.mxu0 0.0
        %584 = vmatmul.mubr.f32.gmra.mrb[0].mxu0 %v492
        %v585 = vpop.f32.mrb[0].mxu0
        %v586 = vadd.f32 0.0, %v585
        %v587 = vpop.f32.mrb[0].mxu0
        %588 = vmatprep.mubr.f32.mxu0 0.0
        %589 = vmatmul.mubr.f32.gmra.mrb[0].mxu0 %v495
        %v590 = vpop.f32.mrb[0].mxu0
        %v591 = vadd.f32 0.0, %v590
        %v592 = vpop.f32.mrb[0].mxu0
        %593 = vmatprep.mubr.f32.mxu0 0.0
        %594 = vmatmul.mubr.f32.gmra.mrb[0].mxu0 %v498
        %v595 = vpop.f32.mrb[0].mxu0
        %v596 = vadd.f32 0.0, %v595
        %v597 = vpop.f32.mrb[0].mxu0
        %598 = vmatprep.mubr.f32.mxu0 0.0
        %599 = vmatmul.mubr.f32.gmra.mrb[0].mxu0 %v501
        %v600 = vpop.f32.mrb[0].mxu0
        %v601 = vadd.f32 0.0, %v600
        %v602 = vpop.f32.mrb[0].mxu0
        %603 = vmatprep.mubr.f32.mxu0 0.0
        %604 = vmatmul.mubr.f32.gmra.mrb[0].mxu0 %v504
        %v605 = vpop.f32.mrb[0].mxu0
        %v606 = vadd.f32 0.0, %v605
        %v607 = vpop.f32.mrb[0].mxu0
        %608 = vmatprep.mubr.f32.mxu0 0.0
        %609 = vmatmul.mubr.f32.gmra.mrb[0].mxu0 %v507
        %v610 = vpop.f32.mrb[0].mxu0
        %v611 = vadd.f32 0.0, %v610
        %v612 = vpop.f32.mrb[0].mxu0
        %613 = vdwg.mxu0
        %vm614 = vcmask 64512
        %615 = vst.msk [vmem:[%s233] sm:$0xff] %vm614, %v576
        %616 = vst.msk [vmem:[%s233 + $0x8] sm:$0xff] %vm614, %v581
        %617 = vst.msk [vmem:[%s233 + $0x10] sm:$0xff] %vm614, %v586
        %618 = vst.msk [vmem:[%s233 + $0x18] sm:$0xff] %vm614, %v591
        %619 = vst.msk [vmem:[%s233 + $0x20] sm:$0xff] %vm614, %v596
        %620 = vst.msk [vmem:[%s233 + $0x28] sm:$0xff] %vm614, %v601
        %621 = vst.msk [vmem:[%s233 + $0x30] sm:$0xff] %vm614, %v606
        %622 = vst.msk [vmem:[%s233 + $0x38] sm:$0xff] %vm614, %v611
        %v623 = vsel %vm614, %v576, 0.0
        %v624 = vsel %vm614, %v581, 0.0
        %v625 = vadd.f32 %v623, %v624
        %v626 = vsel %vm614, %v586, 0.0
        %v627 = vadd.f32 %v625, %v626
        %v628 = vsel %vm614, %v591, 0.0
        %v629 = vadd.f32 %v627, %v628
        %v630 = vsel %vm614, %v596, 0.0
        %v631 = vadd.f32 %v629, %v630
        %v632 = vsel %vm614, %v601, 0.0
        %v633 = vadd.f32 %v631, %v632
        %v634 = vsel %vm614, %v606, 0.0
        %v635 = vadd.f32 %v633, %v634
        %v636 = vsel %vm614, %v611, 0.0
        %v637 = vadd.f32 %v635, %v636
        %v638 = vrot.slane %v637, 4
        %v639 = vadd.f32 %v637, %v638
        %v640 = vrot.slane %v639, 2
        %v641 = vadd.f32 %v639, %v640
        %v642 = vrot.slane %v641, 1
        %v643 = vadd.f32 %v641, %v642
        %v644 = vmul.f32 %v643, 0.015625
        %v645 = vsub.f32 %v576, %v644
        %v646 = vsub.f32 %v581, %v644
        %v647 = vsub.f32 %v586, %v644
        %v648 = vsub.f32 %v591, %v644
        %v649 = vsub.f32 %v596, %v644
        %v650 = vsub.f32 %v601, %v644
        %v651 = vsub.f32 %v606, %v644
        %v652 = vsub.f32 %v611, %v644
        %v653 = vmul.f32 %v645, %v645
        %v654 = vmul.f32 %v646, %v646
        %v655 = vmul.f32 %v647, %v647
        %v656 = vmul.f32 %v648, %v648
        %v657 = vmul.f32 %v649, %v649
        %v658 = vmul.f32 %v650, %v650
        %v659 = vmul.f32 %v651, %v651
        %v660 = vmul.f32 %v652, %v652
        %v661 = vsel %vm614, %v653, 0.0
        %v662 = vsel %vm614, %v654, 0.0
        %v663 = vadd.f32 %v661, %v662
        %v664 = vsel %vm614, %v655, 0.0
        %v665 = vadd.f32 %v663, %v664
        %v666 = vsel %vm614, %v656, 0.0
        %v667 = vadd.f32 %v665, %v666
        %v668 = vsel %vm614, %v657, 0.0
        %v669 = vadd.f32 %v667, %v668
        %v670 = vsel %vm614, %v658, 0.0
        %v671 = vadd.f32 %v669, %v670
        %v672 = vsel %vm614, %v659, 0.0
        %v673 = vadd.f32 %v671, %v672
        %v674 = vsel %vm614, %v660, 0.0
        %v675 = vadd.f32 %v673, %v674
        %v676 = vrot.slane %v675, 4
        %v677 = vadd.f32 %v675, %v676
        %v678 = vrot.slane %v677, 2
        %v679 = vadd.f32 %v677, %v678
        %v680 = vrot.slane %v679, 1
        %v681 = vadd.f32 %v679, %v680
        %vm682 = vcmask 1040384
        %v683 = vsel %vm682, %v644, %v681
        %vm684 = vcmask 58368
        %685 = vst.msk [vmem:[%s241] sm:$0x3] %vm684, %v683
      $region40: #{inception_forward.12} parent=27 // pred_fallthru
        _
      %p686 = scmp.lt.s32.totalorder %s20, 1
      %s687 = scalar_select %p686, %s20, 1
      %p688 = scmp.lt.s32.totalorder %s21, 3
      %s689 = scalar_select %p688, %s21, 3
      %s690 = smul.addr %s689, 8
      %s691 = smul.addr %s687, 32
      %s692 = sadd.s32 %s690, %s691
      %s693 = smul.addr %s692, 8
      %s694 = scalar_lea.vmem %s2, %s693
      %p695 = scmp.lt.s32.totalorder %s20, 1
      %s696 = scalar_select %p695, %s20, 1
      %p697 = scmp.lt.s32.totalorder %s21, 3
      %s698 = scalar_select %p697, %s21, 3
      %s699 = smul.addr %s696, 4
      %s700 = sadd.s32 %s698, %s699
      %s701 = smul.addr %s700, 2
      %s702 = scalar_lea.vmem %s3, %s701
      // Predicated region
      $region41: #{inception_forward.12} parent=27 // pred_check
        %p703 = pneg %p105
      $region42: #{inception_forward.12} parent=27 // pred_check_branch
        %705 = sbr.rel (%p703) target = $region44
      $region43: #{inception_forward.12} parent=27 // pred_region
        _
      $region44: #{inception_forward.12} parent=27 // pred_fallthru
        _
      // Predicated region
      $region45: #{inception_forward.12} parent=27 // pred_check
        %p706 = pneg %p133
      $region46: #{inception_forward.12} parent=27 // pred_check_branch
        %708 = sbr.rel (%p706) target = $region48
      $region47: #{inception_forward.12} parent=27 // pred_region
        _
      $region48: #{inception_forward.12} parent=27 // pred_fallthru
        _
    $region28: #{inception_forward.12} parent=5 // pred_fallthru
      _
    %p709 = scmp.le.s32.totalorder 2, %s10
    // Predicated region
    $region49: #{inception_forward.12} parent=5 // pred_check
      %p710 = pneg %p709
    $region50: #{inception_forward.12} parent=5 // pred_check_branch
      %712 = sbr.rel (%p710) target = $region52
    $region51: #{inception_forward.12} parent=5 // pred_region
      %s713 = ssub.s32 %s10, 2
      // Predicated region
      $region53: #{inception_forward.12} parent=51 // pred_check
        %p714 = pneg %p111
      $region54: #{inception_forward.12} parent=51 // pred_check_branch
        %716 = sbr.rel (%p714) target = $region56
      $region55: #{inception_forward.12} parent=51 // pred_region
        %p717 = scmp.lt.s32.totalorder %s23, 1
        %s718 = scalar_select %p717, %s23, 1
        %p719 = scmp.lt.s32.totalorder %s24, 3
        %s720 = scalar_select %p719, %s24, 3
        %s721 = smul.addr %s720, 8
        %s722 = smul.addr %s718, 32
        %s723 = sadd.s32 %s721, %s722
        %s724 = smul.addr %s723, 8
        %s725 = scalar_lea.vmem %s2, %s724
      $region56: #{inception_forward.12} parent=51 // pred_fallthru
        _
      // Predicated region
      $region57: #{inception_forward.12} parent=51 // pred_check
        %p726 = pneg %p139
      $region58: #{inception_forward.12} parent=51 // pred_check_branch
        %728 = sbr.rel (%p726) target = $region60
      $region59: #{inception_forward.12} parent=51 // pred_region
        %p729 = scmp.lt.s32.totalorder %s23, 1
        %s730 = scalar_select %p729, %s23, 1
        %p731 = scmp.lt.s32.totalorder %s24, 3
        %s732 = scalar_select %p731, %s24, 3
        %s733 = smul.addr %s730, 4
        %s734 = sadd.s32 %s732, %s733
        %s735 = smul.addr %s734, 2
        %s736 = scalar_lea.vmem %s3, %s735
      $region60: #{inception_forward.12} parent=51 // pred_fallthru
        _
    $region52: #{inception_forward.12} parent=5 // pred_fallthru
      _
  $region6: #{inception_forward.12} parent=0 // loop_footer
    %s14 = sadd.s32 1, %s10
  $region7: #{inception_forward.12} parent=0 // loop_footer_branch
    %9 = sbr.rel target = $region3
  $region8: #{inception_forward.12} parent=0 // loop_exit
    _

// kernel: inception_forward.13
$region0: #{inception_forward.13}
  #allocation0 [shape = 'u32[]', space=smem, size = 0x4, offset = 0x4, fixed_abs, tag = 'smem constant byte address 0x4 - core index']
  #allocation1 [shape = 'u32[144,128]{1,0:T(1,128)}', space=vmem, size = 0x12000, scoped, tag = 'internal scratch']
  %s0 = inlined_call_operand.vmem [shape: f32[512,8], index: 0, kind: input, shape index: {}]
  %s1 = inlined_call_operand.vmem [shape: f32[512,16], index: 1, kind: input, shape index: {}]
  %s2 = inlined_call_operand.vmem [shape: f32[512,16], index: 2, kind: input, shape index: {}]
  %s3 = inlined_call_operand.vmem [shape: f32[512,8], index: 3, kind: input, shape index: {}]
  %s4 = inlined_call_operand.vmem [shape: f32[1,48], index: 4, kind: input, shape index: {}]
  %s5 = inlined_call_operand.vmem [shape: f32[1,48], index: 5, kind: input, shape index: {}]
  %s6 = inlined_call_operand.hbm [shape: f32[512,48], index: 6, kind: output, shape index: {}]
  %s7 = sld [smem:[#allocation0]]
  $region57: #{inception_forward.13} parent=0
    _
  %s9 = ssub.s32 1, %s7
  %s10 = scalar_select 0, %s9, %s7
  $region1: #{inception_forward.13} parent=0
    #allocation2 [shape = 'u8[262144]{0}', space=vmem, size = 0x40000, scoped, tag = 'output window, operand 0']
    #allocation3 [shape = 's32[2]{0}', space=sflag, size = 0x8, scoped, tag = 'scoped memory for inception_forward.13']
    %11 = vsyncpa [#allocation3], 0
    %s12 = scalar_lea.sflag [#allocation3], 1
    %13 = vsyncpa %s12, 0
    loop: start=0, step=1, limit=4
    $region2: #{inception_forward.13} parent=1 // loop_pre_header
      _
    $region3: #{inception_forward.13} parent=1 // loop_header
      %s15 = sphi 0, %s19
      %p16 = scmp.ge.s32.totalorder %s15, 4
      %s25 = sphi 0, %s27
      %s28 = sphi 0, %s25
      %s29 = sphi 0, %s28
      %s45 = sphi 0, %s29
      %s51 = sphi 0, %s53
      %s54 = sphi 0, %s51
      %s55 = sphi 0, %s54
      %s71 = sphi 0, %s55
      %s77 = sphi 0, %s79
      %s80 = sphi 0, %s77
      %s81 = sphi 0, %s80
      %s97 = sphi 0, %s81
      %s103 = sphi 0, %s105
      %s106 = sphi 0, %s103
      %s107 = sphi 0, %s106
      %s123 = sphi 0, %s107
      %s127 = sphi 0, %s127
      %s129 = sphi 0, %s127
      %s130 = sphi 0, %s129
      %s144 = sphi 0, %s130
      %s148 = sphi 0, %s148
      %s150 = sphi 0, %s148
      %s151 = sphi 0, %s150
      %s165 = sphi 0, %s151
      %s171 = sphi 0, %s173
      %s174 = sphi 0, %s171
      %s175 = sphi 0, %s174
      %s191 = sphi 0, %s175
    $region4: #{inception_forward.13} parent=1 // loop_header_branch
      %18 = sbr.rel (%p16) target = $region8
    $region5: #{inception_forward.13} parent=1 // loop_body
      %s20 = ssub.s32 %s15, 1
      %s21 = ssub.s32 %s15, 2
      %s22 = sadd.s32 %s15, 1
      %s23 = ssub.s32 %s15, %s22
      %p24 = scmp.eq.s32.totalorder %s23, 0
      %s26 = sadd.s32 %s25, 1
      %s27 = scalar_select %p24, %s25, %s26
      %p30 = pneg %p24
      %p31 = scmp.eq.s32.totalorder %s15, 1
      %p32 = por %p30, %p31
      %p33 = scmp.ne.s32.totalorder %s25, %s28
      %p34 = scmp.eq.s32.totalorder %s15, 0
      %p35 = por %p33, %p34
      %p36 = scmp.ne.s32.totalorder %s25, %s28
      %p37 = scmp.eq.s32.totalorder %s20, 1
      %p38 = por %p36, %p37
      %p39 = scmp.ne.s32.totalorder %s28, %s29
      %p40 = scmp.eq.s32.totalorder %s20, 0
      %p41 = por %p39, %p40
      %p42 = scmp.ne.s32.totalorder %s28, %s29
      %p43 = scmp.eq.s32.totalorder %s21, 1
      %p44 = por %p42, %p43
      %p46 = scmp.ne.s32.totalorder %s29, %s45
      %p47 = scmp.eq.s32.totalorder %s21, 0
      %p48 = por %p46, %p47
      %s49 = ssub.s32 %s15, %s22
      %p50 = scmp.eq.s32.totalorder %s49, 0
      %s52 = sadd.s32 %s51, 1
      %s53 = scalar_select %p50, %s51, %s52
      %p56 = pneg %p50
      %p57 = scmp.eq.s32.totalorder %s15, 1
      %p58 = por %p56, %p57
      %p59 = scmp.ne.s32.totalorder %s51, %s54
      %p60 = scmp.eq.s32.totalorder %s15, 0
      %p61 = por %p59, %p60
      %p62 = scmp.ne.s32.totalorder %s51, %s54
      %p63 = scmp.eq.s32.totalorder %s20, 1
      %p64 = por %p62, %p63
      %p65 = scmp.ne.s32.totalorder %s54, %s55
      %p66 = scmp.eq.s32.totalorder %s20, 0
      %p67 = por %p65, %p66
      %p68 = scmp.ne.s32.totalorder %s54, %s55
      %p69 = scmp.eq.s32.totalorder %s21, 1
      %p70 = por %p68, %p69
      %p72 = scmp.ne.s32.totalorder %s55, %s71
      %p73 = scmp.eq.s32.totalorder %s21, 0
      %p74 = por %p72, %p73
      %s75 = ssub.s32 %s15, %s22
      %p76 = scmp.eq.s32.totalorder %s75, 0
      %s78 = sadd.s32 %s77, 1
      %s79 = scalar_select %p76, %s77, %s78
      %p82 = pneg %p76
      %p83 = scmp.eq.s32.totalorder %s15, 1
      %p84 = por %p82, %p83
      %p85 = scmp.ne.s32.totalorder %s77, %s80
      %p86 = scmp.eq.s32.totalorder %s15, 0
      %p87 = por %p85, %p86
      %p88 = scmp.ne.s32.totalorder %s77, %s80
      %p89 = scmp.eq.s32.totalorder %s20, 1
      %p90 = por %p88, %p89
      %p91 = scmp.ne.s32.totalorder %s80, %s81
      %p92 = scmp.eq.s32.totalorder %s20, 0
      %p93 = por %p91, %p92
      %p94 = scmp.ne.s32.totalorder %s80, %s81
      %p95 = scmp.eq.s32.totalorder %s21, 1
      %p96 = por %p94, %p95
      %p98 = scmp.ne.s32.totalorder %s81, %s97
      %p99 = scmp.eq.s32.totalorder %s21, 0
      %p100 = por %p98, %p99
      %s101 = ssub.s32 %s15, %s22
      %p102 = scmp.eq.s32.totalorder %s101, 0
      %s104 = sadd.s32 %s103, 1
      %s105 = scalar_select %p102, %s103, %s104
      %p108 = pneg %p102
      %p109 = scmp.eq.s32.totalorder %s15, 1
      %p110 = por %p108, %p109
      %p111 = scmp.ne.s32.totalorder %s103, %s106
      %p112 = scmp.eq.s32.totalorder %s15, 0
      %p113 = por %p111, %p112
      %p114 = scmp.ne.s32.totalorder %s103, %s106
      %p115 = scmp.eq.s32.totalorder %s20, 1
      %p116 = por %p114, %p115
      %p117 = scmp.ne.s32.totalorder %s106, %s107
      %p118 = scmp.eq.s32.totalorder %s20, 0
      %p119 = por %p117, %p118
      %p120 = scmp.ne.s32.totalorder %s106, %s107
      %p121 = scmp.eq.s32.totalorder %s21, 1
      %p122 = por %p120, %p121
      %p124 = scmp.ne.s32.totalorder %s107, %s123
      %p125 = scmp.eq.s32.totalorder %s21, 0
      %p126 = por %p124, %p125
      %s128 = sadd.s32 %s127, 1
      %p131 = scmp.eq.s32.totalorder %s15, 1
      %p132 = scmp.ne.s32.totalorder %s127, %s129
      %p133 = scmp.eq.s32.totalorder %s15, 0
      %p134 = por %p132, %p133
      %p135 = scmp.ne.s32.totalorder %s127, %s129
      %p136 = scmp.eq.s32.totalorder %s20, 1
      %p137 = por %p135, %p136
      %p138 = scmp.ne.s32.totalorder %s129, %s130
      %p139 = scmp.eq.s32.totalorder %s20, 0
      %p140 = por %p138, %p139
      %p141 = scmp.ne.s32.totalorder %s129, %s130
      %p142 = scmp.eq.s32.totalorder %s21, 1
      %p143 = por %p141, %p142
      %p145 = scmp.ne.s32.totalorder %s130, %s144
      %p146 = scmp.eq.s32.totalorder %s21, 0
      %p147 = por %p145, %p146
      %s149 = sadd.s32 %s148, 1
      %p152 = scmp.eq.s32.totalorder %s15, 1
      %p153 = scmp.ne.s32.totalorder %s148, %s150
      %p154 = scmp.eq.s32.totalorder %s15, 0
      %p155 = por %p153, %p154
      %p156 = scmp.ne.s32.totalorder %s148, %s150
      %p157 = scmp.eq.s32.totalorder %s20, 1
      %p158 = por %p156, %p157
      %p159 = scmp.ne.s32.totalorder %s150, %s151
      %p160 = scmp.eq.s32.totalorder %s20, 0
      %p161 = por %p159, %p160
      %p162 = scmp.ne.s32.totalorder %s150, %s151
      %p163 = scmp.eq.s32.totalorder %s21, 1
      %p164 = por %p162, %p163
      %p166 = scmp.ne.s32.totalorder %s151, %s165
      %p167 = scmp.eq.s32.totalorder %s21, 0
      %p168 = por %p166, %p167
      %s169 = ssub.s32 %s15, %s22
      %p170 = scmp.eq.s32.totalorder %s169, 0
      %s172 = sadd.s32 %s171, 1
      %s173 = scalar_select %p170, %s171, %s172
      %p176 = pneg %p170
      %p177 = scmp.eq.s32.totalorder %s15, 1
      %p178 = por %p176, %p177
      %p179 = scmp.ne.s32.totalorder %s171, %s174
      %p180 = scmp.eq.s32.totalorder %s15, 0
      %p181 = por %p179, %p180
      %p182 = scmp.ne.s32.totalorder %s171, %s174
      %p183 = scmp.eq.s32.totalorder %s20, 1
      %p184 = por %p182, %p183
      %p185 = scmp.ne.s32.totalorder %s174, %s175
      %p186 = scmp.eq.s32.totalorder %s20, 0
      %p187 = por %p185, %p186
      %p188 = scmp.ne.s32.totalorder %s174, %s175
      %p189 = scmp.eq.s32.totalorder %s21, 1
      %p190 = por %p188, %p189
      %p192 = scmp.ne.s32.totalorder %s175, %s191
      %p193 = scmp.eq.s32.totalorder %s21, 0
      %p194 = por %p192, %p193
      %p195 = scmp.le.s32.totalorder 1, %s15
      %p196 = scmp.lt.s32.totalorder %s15, 3
      %p197 = pnand %p195, %p196
      %p198 = pneg %p197
      // Predicated region
      $region9: #{inception_forward.13} parent=5 // pred_check
        _
      $region10: #{inception_forward.13} parent=5 // pred_check_branch
        %200 = sbr.rel (%p197) target = $region12
      $region11: #{inception_forward.13} parent=5 // pred_region
        %s201 = ssub.s32 %s15, 1
        // Predicated region
        $region13: #{inception_forward.13} parent=11 // pred_check
          %p202 = pneg %p140
        $region14: #{inception_forward.13} parent=11 // pred_check_branch
          %204 = sbr.rel (%p202) target = $region16
        $region15: #{inception_forward.13} parent=11 // pred_region
          _
        $region16: #{inception_forward.13} parent=11 // pred_fallthru
          _
        // Predicated region
        $region17: #{inception_forward.13} parent=11 // pred_check
          %p205 = pneg %p161
        $region18: #{inception_forward.13} parent=11 // pred_check_branch
          %207 = sbr.rel (%p205) target = $region20
        $region19: #{inception_forward.13} parent=11 // pred_region
          _
        $region20: #{inception_forward.13} parent=11 // pred_fallthru
          _
      $region12: #{inception_forward.13} parent=5 // pred_fallthru
        _
      %p208 = scmp.lt.s32.totalorder %s15, 2
      // Predicated region
      $region21: #{inception_forward.13} parent=5 // pred_check
        %p209 = pneg %p208
      $region22: #{inception_forward.13} parent=5 // pred_check_branch
        %211 = sbr.rel (%p209) target = $region24
      $region23: #{inception_forward.13} parent=5 // pred_region
        // Predicated region
        $region25: #{inception_forward.13} parent=23 // pred_check
          %p212 = pneg %p35
        $region26: #{inception_forward.13} parent=23 // pred_check_branch
          %214 = sbr.rel (%p212) target = $region28
        $region27: #{inception_forward.13} parent=23 // pred_region
          %s215 = smul.u32 32, %s15
          %p216 = scmp.lt.s32.totalorder %s215, 63
          %s217 = scalar_select %p216, %s215, 63
          %s218 = smul.addr %s217, 8
          %s219 = scalar_lea.vmem %s0, %s218
          %s220 = smul.u32 32, %s15
        $region28: #{inception_forward.13} parent=23 // pred_fallthru
          _
        // Predicated region
        $region29: #{inception_forward.13} parent=23 // pred_check
          %p221 = pneg %p61
        $region30: #{inception_forward.13} parent=23 // pred_check_branch
          %223 = sbr.rel (%p221) target = $region32
        $region31: #{inception_forward.13} parent=23 // pred_region
          %s224 = smul.u32 32, %s15
          %p225 = scmp.lt.s32.totalorder %s224, 63
          %s226 = scalar_select %p225, %s224, 63
          %s227 = smul.addr %s226, 8
          %s228 = scalar_lea.vmem %s1, %s227
          %s229 = smul.u32 32, %s15
        $region32: #{inception_forward.13} parent=23 // pred_fallthru
          _
        // Predicated region
        $region33: #{inception_forward.13} parent=23 // pred_check
          %p230 = pneg %p87
        $region34: #{inception_forward.13} parent=23 // pred_check_branch
          %232 = sbr.rel (%p230) target = $region36
        $region35: #{inception_forward.13} parent=23 // pred_region
          %s233 = smul.u32 32, %s15
          %p234 = scmp.lt.s32.totalorder %s233, 63
          %s235 = scalar_select %p234, %s233, 63
          %s236 = smul.addr %s235, 8
          %s237 = scalar_lea.vmem %s2, %s236
          %s238 = smul.u32 32, %s15
        $region36: #{inception_forward.13} parent=23 // pred_fallthru
          _
        // Predicated region
        $region37: #{inception_forward.13} parent=23 // pred_check
          %p239 = pneg %p113
        $region38: #{inception_forward.13} parent=23 // pred_check_branch
          %241 = sbr.rel (%p239) target = $region40
        $region39: #{inception_forward.13} parent=23 // pred_region
          %s242 = smul.u32 32, %s15
          %p243 = scmp.lt.s32.totalorder %s242, 63
          %s244 = scalar_select %p243, %s242, 63
          %s245 = smul.addr %s244, 8
          %s246 = scalar_lea.vmem %s3, %s245
          %s247 = smul.u32 32, %s15
        $region40: #{inception_forward.13} parent=23 // pred_fallthru
          _
      $region24: #{inception_forward.13} parent=5 // pred_fallthru
        _
      %p248 = scmp.le.s32.totalorder 1, %s15
      %p249 = scmp.lt.s32.totalorder %s15, 3
      %p250 = pnand %p248, %p249
      %p251 = pneg %p250
      // Predicated region
      $region41: #{inception_forward.13} parent=5 // pred_check
        _
      $region42: #{inception_forward.13} parent=5 // pred_check_branch
        %253 = sbr.rel (%p250) target = $region44
      $region43: #{inception_forward.13} parent=5 // pred_region
        %s254 = ssub.s32 %s15, 1
        %s255 = smul.u32 32, %s20
        %p256 = scmp.lt.s32.totalorder %s255, 63
        %s257 = scalar_select %p256, %s255, 63
        %s258 = smul.addr %s257, 8
        %s259 = scalar_lea.vmem %s0, %s258
        %p260 = pneg %p41
        %p261 = pneg %p38
        %s262 = smul.u32 32, %s20
        %p263 = scmp.lt.s32.totalorder %s262, 63
        %s264 = scalar_select %p263, %s262, 63
        %s265 = smul.addr %s264, 8
        %s266 = scalar_lea.vmem %s1, %s265
        %p267 = pneg %p67
        %p268 = pneg %p64
        %s269 = smul.u32 32, %s20
        %p270 = scmp.lt.s32.totalorder %s269, 63
        %s271 = scalar_select %p270, %s269, 63
        %s272 = smul.addr %s271, 8
        %s273 = scalar_lea.vmem %s2, %s272
        %p274 = pneg %p93
        %p275 = pneg %p90
        %s276 = smul.u32 32, %s20
        %p277 = scmp.lt.s32.totalorder %s276, 63
        %s278 = scalar_select %p277, %s276, 63
        %s279 = smul.addr %s278, 8
        %s280 = scalar_lea.vmem %s3, %s279
        %p281 = pneg %p119
        %p282 = pneg %p116
        %p283 = pneg %p140
        %p284 = pneg %p137
        %p285 = pneg %p161
        %p286 = pneg %p158
        %p287 = pneg %p187
        %p288 = pneg %p184
        %s289 = sand.u32 %s174, 1
        %s290 = scalar_lea.sflag [#allocation3], %s289
        %s291 = sand.u32 %s174, 1
        %s292 = smul.addr %s291, 256
        %s293 = scalar_lea.vmem [#allocation2], %s292
        %s294 = smul.u32 32, %s20
        %p295 = scmp.lt.s32.totalorder %s294, 63
        %s296 = scalar_select %p295, %s294, 63
        %s297 = smul.addr %s296, 8
        %s298 = scalar_lea.vmem %s0, %s297
        %s299 = smul.u32 32, %s20
        %s300 = smul.u32 32, %s20
        %p301 = scmp.lt.s32.totalorder %s300, 63
        %s302 = scalar_select %p301, %s300, 63
        %s303 = smul.addr %s302, 8
        %s304 = scalar_lea.vmem %s1, %s303
        %s305 = smul.u32 32, %s20
        %s306 = smul.u32 32, %s20
        %p307 = scmp.lt.s32.totalorder %s306, 63
        %s308 = scalar_select %p307, %s306, 63
        %s309 = smul.addr %s308, 8
        %s310 = scalar_lea.vmem %s2, %s309
        %s311 = smul.u32 32, %s20
        %s312 = smul.u32 32, %s20
        %p313 = scmp.lt.s32.totalorder %s312, 63
        %s314 = scalar_select %p313, %s312, 63
        %s315 = smul.addr %s314, 8
        %s316 = scalar_lea.vmem %s3, %s315
        %s317 = smul.u32 32, %s20
        %s318 = smul.u32 32, %s20
        %v319 = vld [vmem:[%s298] sm:$0xff]
        %v320 = vld [vmem:[%s298 + $0x8] sm:$0xff]
        %v321 = vld [vmem:[%s298 + $0x10] sm:$0xff]
        %v322 = vld [vmem:[%s298 + $0x18] sm:$0xff]
        %v323 = vld [vmem:[%s298 + $0x20] sm:$0xff]
        %v324 = vld [vmem:[%s298 + $0x28] sm:$0xff]
        %v325 = vld [vmem:[%s298 + $0x30] sm:$0xff]
        %v326 = vld [vmem:[%s298 + $0x38] sm:$0xff]
        %v327 = vld [vmem:[%s298 + $0x40] sm:$0xff]
        %v328 = vld [vmem:[%s298 + $0x48] sm:$0xff]
        %v329 = vld [vmem:[%s298 + $0x50] sm:$0xff]
        %v330 = vld [vmem:[%s298 + $0x58] sm:$0xff]
        %v331 = vld [vmem:[%s298 + $0x60] sm:$0xff]
        %v332 = vld [vmem:[%s298 + $0x68] sm:$0xff]
        %v333 = vld [vmem:[%s298 + $0x70] sm:$0xff]
        %v334 = vld [vmem:[%s298 + $0x78] sm:$0xff]
        %v335 = vld [vmem:[%s298 + $0x80] sm:$0xff]
        %v336 = vld [vmem:[%s298 + $0x88] sm:$0xff]
        %v337 = vld [vmem:[%s298 + $0x90] sm:$0xff]
        %v338 = vld [vmem:[%s298 + $0x98] sm:$0xff]
        %v339 = vld [vmem:[%s298 + $0xa0] sm:$0xff]
        %v340 = vld [vmem:[%s298 + $0xa8] sm:$0xff]
        %v341 = vld [vmem:[%s298 + $0xb0] sm:$0xff]
        %v342 = vld [vmem:[%s298 + $0xb8] sm:$0xff]
        %v343 = vld [vmem:[%s298 + $0xc0] sm:$0xff]
        %v344 = vld [vmem:[%s298 + $0xc8] sm:$0xff]
        %v345 = vld [vmem:[%s298 + $0xd0] sm:$0xff]
        %v346 = vld [vmem:[%s298 + $0xd8] sm:$0xff]
        %v347 = vld [vmem:[%s298 + $0xe0] sm:$0xff]
        %v348 = vld [vmem:[%s298 + $0xe8] sm:$0xff]
        %v349 = vld [vmem:[%s298 + $0xf0] sm:$0xff]
        %v350 = vld [vmem:[%s298 + $0xf8] sm:$0xff]
        %v351 = vld [vmem:[%s304] sm:$0xff]
        %v352 = vld [vmem:[%s304 + $0x8] sm:$0xff]
        %v353 = vld [vmem:[%s304 + $0x10] sm:$0xff]
        %v354 = vld [vmem:[%s304 + $0x18] sm:$0xff]
        %v355 = vld [vmem:[%s304 + $0x20] sm:$0xff]
        %v356 = vld [vmem:[%s304 + $0x28] sm:$0xff]
        %v357 = vld [vmem:[%s304 + $0x30] sm:$0xff]
        %v358 = vld [vmem:[%s304 + $0x38] sm:$0xff]
        %v359 = vld [vmem:[%s304 + $0x40] sm:$0xff]
        %v360 = vld [vmem:[%s304 + $0x48] sm:$0xff]
        %v361 = vld [vmem:[%s304 + $0x50] sm:$0xff]
        %v362 = vld [vmem:[%s304 + $0x58] sm:$0xff]
        %v363 = vld [vmem:[%s304 + $0x60] sm:$0xff]
        %v364 = vld [vmem:[%s304 + $0x68] sm:$0xff]
        %v365 = vld [vmem:[%s304 + $0x70] sm:$0xff]
        %v366 = vld [vmem:[%s304 + $0x78] sm:$0xff]
        %v367 = vld [vmem:[%s304 + $0x80] sm:$0xff]
        %v368 = vld [vmem:[%s304 + $0x88] sm:$0xff]
        %v369 = vld [vmem:[%s304 + $0x90] sm:$0xff]
        %v370 = vld [vmem:[%s304 + $0x98] sm:$0xff]
        %v371 = vld [vmem:[%s304 + $0xa0] sm:$0xff]
        %v372 = vld [vmem:[%s304 + $0xa8] sm:$0xff]
        %v373 = vld [vmem:[%s304 + $0xb0] sm:$0xff]
        %v374 = vld [vmem:[%s304 + $0xb8] sm:$0xff]
        %v375 = vld [vmem:[%s304 + $0xc0] sm:$0xff]
        %v376 = vld [vmem:[%s304 + $0xc8] sm:$0xff]
        %v377 = vld [vmem:[%s304 + $0xd0] sm:$0xff]
        %v378 = vld [vmem:[%s304 + $0xd8] sm:$0xff]
        %v379 = vld [vmem:[%s304 + $0xe0] sm:$0xff]
        %v380 = vld [vmem:[%s304 + $0xe8] sm:$0xff]
        %v381 = vld [vmem:[%s304 + $0xf0] sm:$0xff]
        %v382 = vld [vmem:[%s304 + $0xf8] sm:$0xff]
        %v383 = vld [vmem:[%s310] sm:$0xff]
        %v384 = vld [vmem:[%s310 + $0x8] sm:$0xff]
        %v385 = vld [vmem:[%s310 + $0x10] sm:$0xff]
        %v386 = vld [vmem:[%s310 + $0x18] sm:$0xff]
        %v387 = vld [vmem:[%s310 + $0x20] sm:$0xff]
        %v388 = vld [vmem:[%s310 + $0x28] sm:$0xff]
        %v389 = vld [vmem:[%s310 + $0x30] sm:$0xff]
        %v390 = vld [vmem:[%s310 + $0x38] sm:$0xff]
        %v391 = vld [vmem:[%s310 + $0x40] sm:$0xff]
        %v392 = vld [vmem:[%s310 + $0x48] sm:$0xff]
        %v393 = vld [vmem:[%s310 + $0x50] sm:$0xff]
        %v394 = vld [vmem:[%s310 + $0x58] sm:$0xff]
        %v395 = vld [vmem:[%s310 + $0x60] sm:$0xff]
        %v396 = vld [vmem:[%s310 + $0x68] sm:$0xff]
        %v397 = vld [vmem:[%s310 + $0x70] sm:$0xff]
        %v398 = vld [vmem:[%s310 + $0x78] sm:$0xff]
        %v399 = vld [vmem:[%s310 + $0x80] sm:$0xff]
        %v400 = vld [vmem:[%s310 + $0x88] sm:$0xff]
        %v401 = vld [vmem:[%s310 + $0x90] sm:$0xff]
        %v402 = vld [vmem:[%s310 + $0x98] sm:$0xff]
        %v403 = vld [vmem:[%s310 + $0xa0] sm:$0xff]
        %v404 = vld [vmem:[%s310 + $0xa8] sm:$0xff]
        %v405 = vld [vmem:[%s310 + $0xb0] sm:$0xff]
        %v406 = vld [vmem:[%s310 + $0xb8] sm:$0xff]
        %v407 = vld [vmem:[%s310 + $0xc0] sm:$0xff]
        %v408 = vld [vmem:[%s310 + $0xc8] sm:$0xff]
        %v409 = vld [vmem:[%s310 + $0xd0] sm:$0xff]
        %v410 = vld [vmem:[%s310 + $0xd8] sm:$0xff]
        %v411 = vld [vmem:[%s310 + $0xe0] sm:$0xff]
        %v412 = vld [vmem:[%s310 + $0xe8] sm:$0xff]
        %v413 = vld [vmem:[%s310 + $0xf0] sm:$0xff]
        %v414 = vld [vmem:[%s310 + $0xf8] sm:$0xff]
        %v415 = vld [vmem:[%s316] sm:$0xff]
        %v416 = vld [vmem:[%s316 + $0x8] sm:$0xff]
        %v417 = vld [vmem:[%s316 + $0x10] sm:$0xff]
        %v418 = vld [vmem:[%s316 + $0x18] sm:$0xff]
        %v419 = vld [vmem:[%s316 + $0x20] sm:$0xff]
        %v420 = vld [vmem:[%s316 + $0x28] sm:$0xff]
        %v421 = vld [vmem:[%s316 + $0x30] sm:$0xff]
        %v422 = vld [vmem:[%s316 + $0x38] sm:$0xff]
        %v423 = vld [vmem:[%s316 + $0x40] sm:$0xff]
        %v424 = vld [vmem:[%s316 + $0x48] sm:$0xff]
        %v425 = vld [vmem:[%s316 + $0x50] sm:$0xff]
        %v426 = vld [vmem:[%s316 + $0x58] sm:$0xff]
        %v427 = vld [vmem:[%s316 + $0x60] sm:$0xff]
        %v428 = vld [vmem:[%s316 + $0x68] sm:$0xff]
        %v429 = vld [vmem:[%s316 + $0x70] sm:$0xff]
        %v430 = vld [vmem:[%s316 + $0x78] sm:$0xff]
        %v431 = vld [vmem:[%s316 + $0x80] sm:$0xff]
        %v432 = vld [vmem:[%s316 + $0x88] sm:$0xff]
        %v433 = vld [vmem:[%s316 + $0x90] sm:$0xff]
        %v434 = vld [vmem:[%s316 + $0x98] sm:$0xff]
        %v435 = vld [vmem:[%s316 + $0xa0] sm:$0xff]
        %v436 = vld [vmem:[%s316 + $0xa8] sm:$0xff]
        %v437 = vld [vmem:[%s316 + $0xb0] sm:$0xff]
        %v438 = vld [vmem:[%s316 + $0xb8] sm:$0xff]
        %v439 = vld [vmem:[%s316 + $0xc0] sm:$0xff]
        %v440 = vld [vmem:[%s316 + $0xc8] sm:$0xff]
        %v441 = vld [vmem:[%s316 + $0xd0] sm:$0xff]
        %v442 = vld [vmem:[%s316 + $0xd8] sm:$0xff]
        %v443 = vld [vmem:[%s316 + $0xe0] sm:$0xff]
        %v444 = vld [vmem:[%s316 + $0xe8] sm:$0xff]
        %v445 = vld [vmem:[%s316 + $0xf0] sm:$0xff]
        %v446 = vld [vmem:[%s316 + $0xf8] sm:$0xff]
        %479 = vrot.lane.b32.xlu0 %v351, 8
        %v480 = vpop.permute.xlu0 %479
        %481 = vrot.lane.b32.xlu0 %v352, 8
        %v482 = vpop.permute.xlu0 %481
        %483 = vrot.lane.b32.xlu0 %v353, 8
        %v484 = vpop.permute.xlu0 %483
        %485 = vrot.lane.b32.xlu0 %v354, 8
        %v486 = vpop.permute.xlu0 %485
        %487 = vrot.lane.b32.xlu0 %v355, 8
        %v488 = vpop.permute.xlu0 %487
        %489 = vrot.lane.b32.xlu0 %v356, 8
        %v490 = vpop.permute.xlu0 %489
        %491 = vrot.lane.b32.xlu0 %v357, 8
        %v492 = vpop.permute.xlu0 %491
        %493 = vrot.lane.b32.xlu0 %v358, 8
        %v494 = vpop.permute.xlu0 %493
        %495 = vrot.lane.b32.xlu0 %v359, 8
        %v496 = vpop.permute.xlu0 %495
        %497 = vrot.lane.b32.xlu0 %v360, 8
        %v498 = vpop.permute.xlu0 %497
        %499 = vrot.lane.b32.xlu0 %v361, 8
        %v500 = vpop.permute.xlu0 %499
        %501 = vrot.lane.b32.xlu0 %v362, 8
        %v502 = vpop.permute.xlu0 %501
        %503 = vrot.lane.b32.xlu0 %v363, 8
        %v504 = vpop.permute.xlu0 %503
        %505 = vrot.lane.b32.xlu0 %v364, 8
        %v506 = vpop.permute.xlu0 %505
        %507 = vrot.lane.b32.xlu0 %v365, 8
        %v508 = vpop.permute.xlu0 %507
        %509 = vrot.lane.b32.xlu0 %v366, 8
        %v510 = vpop.permute.xlu0 %509
        %511 = vrot.lane.b32.xlu0 %v367, 8
        %v512 = vpop.permute.xlu0 %511
        %513 = vrot.lane.b32.xlu0 %v368, 8
        %v514 = vpop.permute.xlu0 %513
        %515 = vrot.lane.b32.xlu0 %v369, 8
        %v516 = vpop.permute.xlu0 %515
        %517 = vrot.lane.b32.xlu0 %v370, 8
        %v518 = vpop.permute.xlu0 %517
        %519 = vrot.lane.b32.xlu0 %v371, 8
        %v520 = vpop.permute.xlu0 %519
        %521 = vrot.lane.b32.xlu0 %v372, 8
        %v522 = vpop.permute.xlu0 %521
        %523 = vrot.lane.b32.xlu0 %v373, 8
        %v524 = vpop.permute.xlu0 %523
        %525 = vrot.lane.b32.xlu0 %v374, 8
        %v526 = vpop.permute.xlu0 %525
        %527 = vrot.lane.b32.xlu0 %v375, 8
        %v528 = vpop.permute.xlu0 %527
        %529 = vrot.lane.b32.xlu0 %v376, 8
        %v530 = vpop.permute.xlu0 %529
        %531 = vrot.lane.b32.xlu0 %v377, 8
        %v532 = vpop.permute.xlu0 %531
        %533 = vrot.lane.b32.xlu0 %v378, 8
        %v534 = vpop.permute.xlu0 %533
        %535 = vrot.lane.b32.xlu0 %v379, 8
        %v536 = vpop.permute.xlu0 %535
        %537 = vrot.lane.b32.xlu0 %v380, 8
        %v538 = vpop.permute.xlu0 %537
        %539 = vrot.lane.b32.xlu0 %v381, 8
        %v540 = vpop.permute.xlu0 %539
        %541 = vrot.lane.b32.xlu0 %v382, 8
        %v542 = vpop.permute.xlu0 %541
        %607 = vrot.lane.b32.xlu0 %v383, 24
        %v608 = vpop.permute.xlu0 %607
        %609 = vrot.lane.b32.xlu0 %v384, 24
        %v610 = vpop.permute.xlu0 %609
        %611 = vrot.lane.b32.xlu0 %v385, 24
        %v612 = vpop.permute.xlu0 %611
        %613 = vrot.lane.b32.xlu0 %v386, 24
        %v614 = vpop.permute.xlu0 %613
        %615 = vrot.lane.b32.xlu0 %v387, 24
        %v616 = vpop.permute.xlu0 %615
        %617 = vrot.lane.b32.xlu0 %v388, 24
        %v618 = vpop.permute.xlu0 %617
        %619 = vrot.lane.b32.xlu0 %v389, 24
        %v620 = vpop.permute.xlu0 %619
        %621 = vrot.lane.b32.xlu0 %v390, 24
        %v622 = vpop.permute.xlu0 %621
        %623 = vrot.lane.b32.xlu0 %v391, 24
        %v624 = vpop.permute.xlu0 %623
        %625 = vrot.lane.b32.xlu0 %v392, 24
        %v626 = vpop.permute.xlu0 %625
        %627 = vrot.lane.b32.xlu0 %v393, 24
        %v628 = vpop.permute.xlu0 %627
        %629 = vrot.lane.b32.xlu0 %v394, 24
        %v630 = vpop.permute.xlu0 %629
        %631 = vrot.lane.b32.xlu0 %v395, 24
        %v632 = vpop.permute.xlu0 %631
        %633 = vrot.lane.b32.xlu0 %v396, 24
        %v634 = vpop.permute.xlu0 %633
        %635 = vrot.lane.b32.xlu0 %v397, 24
        %v636 = vpop.permute.xlu0 %635
        %637 = vrot.lane.b32.xlu0 %v398, 24
        %v638 = vpop.permute.xlu0 %637
        %639 = vrot.lane.b32.xlu0 %v399, 24
        %v640 = vpop.permute.xlu0 %639
        %641 = vrot.lane.b32.xlu0 %v400, 24
        %v642 = vpop.permute.xlu0 %641
        %643 = vrot.lane.b32.xlu0 %v401, 24
        %v644 = vpop.permute.xlu0 %643
        %645 = vrot.lane.b32.xlu0 %v402, 24
        %v646 = vpop.permute.xlu0 %645
        %647 = vrot.lane.b32.xlu0 %v403, 24
        %v648 = vpop.permute.xlu0 %647
        %649 = vrot.lane.b32.xlu0 %v404, 24
        %v650 = vpop.permute.xlu0 %649
        %651 = vrot.lane.b32.xlu0 %v405, 24
        %v652 = vpop.permute.xlu0 %651
        %653 = vrot.lane.b32.xlu0 %v406, 24
        %v654 = vpop.permute.xlu0 %653
        %655 = vrot.lane.b32.xlu0 %v407, 24
        %v656 = vpop.permute.xlu0 %655
        %657 = vrot.lane.b32.xlu0 %v408, 24
        %v658 = vpop.permute.xlu0 %657
        %659 = vrot.lane.b32.xlu0 %v409, 24
        %v660 = vpop.permute.xlu0 %659
        %661 = vrot.lane.b32.xlu0 %v410, 24
        %v662 = vpop.permute.xlu0 %661
        %663 = vrot.lane.b32.xlu0 %v411, 24
        %v664 = vpop.permute.xlu0 %663
        %665 = vrot.lane.b32.xlu0 %v412, 24
        %v666 = vpop.permute.xlu0 %665
        %667 = vrot.lane.b32.xlu0 %v413, 24
        %v668 = vpop.permute.xlu0 %667
        %669 = vrot.lane.b32.xlu0 %v414, 24
        %v670 = vpop.permute.xlu0 %669
        %735 = vrot.lane.b32.xlu0 %v415, 40
        %v736 = vpop.permute.xlu0 %735
        %737 = vrot.lane.b32.xlu0 %v416, 40
        %v738 = vpop.permute.xlu0 %737
        %739 = vrot.lane.b32.xlu0 %v417, 40
        %v740 = vpop.permute.xlu0 %739
        %741 = vrot.lane.b32.xlu0 %v418, 40
        %v742 = vpop.permute.xlu0 %741
        %743 = vrot.lane.b32.xlu0 %v419, 40
        %v744 = vpop.permute.xlu0 %743
        %745 = vrot.lane.b32.xlu0 %v420, 40
        %v746 = vpop.permute.xlu0 %745
        %747 = vrot.lane.b32.xlu0 %v421, 40
        %v748 = vpop.permute.xlu0 %747
        %749 = vrot.lane.b32.xlu0 %v422, 40
        %v750 = vpop.permute.xlu0 %749
        %751 = vrot.lane.b32.xlu0 %v423, 40
        %v752 = vpop.permute.xlu0 %751
        %753 = vrot.lane.b32.xlu0 %v424, 40
        %v754 = vpop.permute.xlu0 %753
        %755 = vrot.lane.b32.xlu0 %v425, 40
        %v756 = vpop.permute.xlu0 %755
        %757 = vrot.lane.b32.xlu0 %v426, 40
        %v758 = vpop.permute.xlu0 %757
        %759 = vrot.lane.b32.xlu0 %v427, 40
        %v760 = vpop.permute.xlu0 %759
        %761 = vrot.lane.b32.xlu0 %v428, 40
        %v762 = vpop.permute.xlu0 %761
        %763 = vrot.lane.b32.xlu0 %v429, 40
        %v764 = vpop.permute.xlu0 %763
        %765 = vrot.lane.b32.xlu0 %v430, 40
        %v766 = vpop.permute.xlu0 %765
        %767 = vrot.lane.b32.xlu0 %v431, 40
        %v768 = vpop.permute.xlu0 %767
        %769 = vrot.lane.b32.xlu0 %v432, 40
        %v770 = vpop.permute.xlu0 %769
        %771 = vrot.lane.b32.xlu0 %v433, 40
        %v772 = vpop.permute.xlu0 %771
        %773 = vrot.lane.b32.xlu0 %v434, 40
        %v774 = vpop.permute.xlu0 %773
        %775 = vrot.lane.b32.xlu0 %v435, 40
        %v776 = vpop.permute.xlu0 %775
        %777 = vrot.lane.b32.xlu0 %v436, 40
        %v778 = vpop.permute.xlu0 %777
        %779 = vrot.lane.b32.xlu0 %v437, 40
        %v780 = vpop.permute.xlu0 %779
        %781 = vrot.lane.b32.xlu0 %v438, 40
        %v782 = vpop.permute.xlu0 %781
        %783 = vrot.lane.b32.xlu0 %v439, 40
        %v784 = vpop.permute.xlu0 %783
        %785 = vrot.lane.b32.xlu0 %v440, 40
        %v786 = vpop.permute.xlu0 %785
        %787 = vrot.lane.b32.xlu0 %v441, 40
        %v788 = vpop.permute.xlu0 %787
        %789 = vrot.lane.b32.xlu0 %v442, 40
        %v790 = vpop.permute.xlu0 %789
        %791 = vrot.lane.b32.xlu0 %v443, 40
        %v792 = vpop.permute.xlu0 %791
        %793 = vrot.lane.b32.xlu0 %v444, 40
        %v794 = vpop.permute.xlu0 %793
        %795 = vrot.lane.b32.xlu0 %v445, 40
        %v796 = vpop.permute.xlu0 %795
        %797 = vrot.lane.b32.xlu0 %v446, 40
        %v798 = vpop.permute.xlu0 %797
        %vm831 = vcmask 64512
        %v832 = vsel %vm831, %v319, %v480
        %v833 = vsel %vm831, %v320, %v482
        %v834 = vsel %vm831, %v321, %v484
        %v835 = vsel %vm831, %v322, %v486
        %v836 = vsel %vm831, %v323, %v488
        %v837 = vsel %vm831, %v324, %v490
        %v838 = vsel %vm831, %v325, %v492
        %v839 = vsel %vm831, %v326, %v494
        %v840 = vsel %vm831, %v327, %v496
        %v841 = vsel %vm831, %v328, %v498
        %v842 = vsel %vm831, %v329, %v500
        %v843 = vsel %vm831, %v330, %v502
        %v844 = vsel %vm831, %v331, %v504
        %v845 = vsel %vm831, %v332, %v506
        %v846 = vsel %vm831, %v333, %v508
        %v847 = vsel %vm831, %v334, %v510
        %v848 = vsel %vm831, %v335, %v512
        %v849 = vsel %vm831, %v336, %v514
        %v850 = vsel %vm831, %v337, %v516
        %v851 = vsel %vm831, %v338, %v518
        %v852 = vsel %vm831, %v339, %v520
        %v853 = vsel %vm831, %v340, %v522
        %v854 = vsel %vm831, %v341, %v524
        %v855 = vsel %vm831, %v342, %v526
        %v856 = vsel %vm831, %v343, %v528
        %v857 = vsel %vm831, %v344, %v530
        %v858 = vsel %vm831, %v345, %v532
        %v859 = vsel %vm831, %v346, %v534
        %v860 = vsel %vm831, %v347, %v536
        %v861 = vsel %vm831, %v348, %v538
        %v862 = vsel %vm831, %v349, %v540
        %v863 = vsel %vm831, %v350, %v542
        %vm864 = vcmask 195584
        %v865 = vsel %vm864, %v832, %v608
        %v866 = vsel %vm864, %v833, %v610
        %v867 = vsel %vm864, %v834, %v612
        %v868 = vsel %vm864, %v835, %v614
        %v869 = vsel %vm864, %v836, %v616
        %v870 = vsel %vm864, %v837, %v618
        %v871 = vsel %vm864, %v838, %v620
        %v872 = vsel %vm864, %v839, %v622
        %v873 = vsel %vm864, %v840, %v624
        %v874 = vsel %vm864, %v841, %v626
        %v875 = vsel %vm864, %v842, %v628
        %v876 = vsel %vm864, %v843, %v630
        %v877 = vsel %vm864, %v844, %v632
        %v878 = vsel %vm864, %v845, %v634
        %v879 = vsel %vm864, %v846, %v636
        %v880 = vsel %vm864, %v847, %v638
        %v881 = vsel %vm864, %v848, %v640
        %v882 = vsel %vm864, %v849, %v642
        %v883 = vsel %vm864, %v850, %v644
        %v884 = vsel %vm864, %v851, %v646
        %v885 = vsel %vm864, %v852, %v648
        %v886 = vsel %vm864, %v853, %v650
        %v887 = vsel %vm864, %v854, %v652
        %v888 = vsel %vm864, %v855, %v654
        %v889 = vsel %vm864, %v856, %v656
        %v890 = vsel %vm864, %v857, %v658
        %v891 = vsel %vm864, %v858, %v660
        %v892 = vsel %vm864, %v859, %v662
        %v893 = vsel %vm864, %v860, %v664
        %v894 = vsel %vm864, %v861, %v666
        %v895 = vsel %vm864, %v862, %v668
        %v896 = vsel %vm864, %v863, %v670
        %vm897 = vcmask 326656
        %v898 = vsel %vm897, %v865, %v736
        %v899 = vsel %vm897, %v866, %v738
        %v900 = vsel %vm897, %v867, %v740
        %v901 = vsel %vm897, %v868, %v742
        %v902 = vsel %vm897, %v869, %v744
        %v903 = vsel %vm897, %v870, %v746
        %v904 = vsel %vm897, %v871, %v748
        %v905 = vsel %vm897, %v872, %v750
        %v906 = vsel %vm897, %v873, %v752
        %v907 = vsel %vm897, %v874, %v754
        %v908 = vsel %vm897, %v875, %v756
        %v909 = vsel %vm897, %v876, %v758
        %v910 = vsel %vm897, %v877, %v760
        %v911 = vsel %vm897, %v878, %v762
        %v912 = vsel %vm897, %v879, %v764
        %v913 = vsel %vm897, %v880, %v766
        %v914 = vsel %vm897, %v881, %v768
        %v915 = vsel %vm897, %v882, %v770
        %v916 = vsel %vm897, %v883, %v772
        %v917 = vsel %vm897, %v884, %v774
        %v918 = vsel %vm897, %v885, %v776
        %v919 = vsel %vm897, %v886, %v778
        %v920 = vsel %vm897, %v887, %v780
        %v921 = vsel %vm897, %v888, %v782
        %v922 = vsel %vm897, %v889, %v784
        %v923 = vsel %vm897, %v890, %v786
        %v924 = vsel %vm897, %v891, %v788
        %v925 = vsel %vm897, %v892, %v790
        %v926 = vsel %vm897, %v893, %v792
        %v927 = vsel %vm897, %v894, %v794
        %v928 = vsel %vm897, %v895, %v796
        %v929 = vsel %vm897, %v896, %v798
        %v930 = vld [vmem:[%s4] sm:$0x1]
        %v932 = vlaneseq
        %v933 = vshrl.u32 %v932, 7
        %v934 = vsub.s32 0, %v933
        %v935 = vrot.slane %v930, %v934
        %v937 = vmul.f32 %v898, %v935
        %v938 = vmul.f32 %v899, %v935
        %v939 = vmul.f32 %v900, %v935
        %v940 = vmul.f32 %v901, %v935
        %v941 = vmul.f32 %v902, %v935
        %v942 = vmul.f32 %v903, %v935
        %v943 = vmul.f32 %v904, %v935
        %v944 = vmul.f32 %v905, %v935
        %v945 = vmul.f32 %v906, %v935
        %v946 = vmul.f32 %v907, %v935
        %v947 = vmul.f32 %v908, %v935
        %v948 = vmul.f32 %v909, %v935
        %v949 = vmul.f32 %v910, %v935
        %v950 = vmul.f32 %v911, %v935
        %v951 = vmul.f32 %v912, %v935
        %v952 = vmul.f32 %v913, %v935
        %v953 = vmul.f32 %v914, %v935
        %v954 = vmul.f32 %v915, %v935
        %v955 = vmul.f32 %v916, %v935
        %v956 = vmul.f32 %v917, %v935
        %v957 = vmul.f32 %v918, %v935
        %v958 = vmul.f32 %v919, %v935
        %v959 = vmul.f32 %v920, %v935
        %v960 = vmul.f32 %v921, %v935
        %v961 = vmul.f32 %v922, %v935
        %v962 = vmul.f32 %v923, %v935
        %v963 = vmul.f32 %v924, %v935
        %v964 = vmul.f32 %v925, %v935
        %v965 = vmul.f32 %v926, %v935
        %v966 = vmul.f32 %v927, %v935
        %v967 = vmul.f32 %v928, %v935
        %v968 = vmul.f32 %v929, %v935
        %v969 = vld [vmem:[%s5] sm:$0x1]
        %v971 = vlaneseq
        %v972 = vshrl.u32 %v971, 7
        %v973 = vsub.s32 0, %v972
        %v974 = vrot.slane %v969, %v973
        %v976 = vadd.f32 %v937, %v974
        %v977 = vadd.f32 %v938, %v974
        %v978 = vadd.f32 %v939, %v974
        %v979 = vadd.f32 %v940, %v974
        %v980 = vadd.f32 %v941, %v974
        %v981 = vadd.f32 %v942, %v974
        %v982 = vadd.f32 %v943, %v974
        %v983 = vadd.f32 %v944, %v974
        %v984 = vadd.f32 %v945, %v974
        %v985 = vadd.f32 %v946, %v974
        %v986 = vadd.f32 %v947, %v974
        %v987 = vadd.f32 %v948, %v974
        %v988 = vadd.f32 %v949, %v974
        %v989 = vadd.f32 %v950, %v974
        %v990 = vadd.f32 %v951, %v974
        %v991 = vadd.f32 %v952, %v974
        %v992 = vadd.f32 %v953, %v974
        %v993 = vadd.f32 %v954, %v974
        %v994 = vadd.f32 %v955, %v974
        %v995 = vadd.f32 %v956, %v974
        %v996 = vadd.f32 %v957, %v974
        %v997 = vadd.f32 %v958, %v974
        %v998 = vadd.f32 %v959, %v974
        %v999 = vadd.f32 %v960, %v974
        %v1000 = vadd.f32 %v961, %v974
        %v1001 = vadd.f32 %v962, %v974
        %v1002 = vadd.f32 %v963, %v974
        %v1003 = vadd.f32 %v964, %v974
        %v1004 = vadd.f32 %v965, %v974
        %v1005 = vadd.f32 %v966, %v974
        %v1006 = vadd.f32 %v967, %v974
        %v1007 = vadd.f32 %v968, %v974
        %v1008 = vmax.f32 %v976, 0.0
        %v1009 = vmax.f32 %v977, 0.0
        %v1010 = vmax.f32 %v978, 0.0
        %v1011 = vmax.f32 %v979, 0.0
        %v1012 = vmax.f32 %v980, 0.0
        %v1013 = vmax.f32 %v981, 0.0
        %v1014 = vmax.f32 %v982, 0.0
        %v1015 = vmax.f32 %v983, 0.0
        %v1016 = vmax.f32 %v984, 0.0
        %v1017 = vmax.f32 %v985, 0.0
        %v1018 = vmax.f32 %v986, 0.0
        %v1019 = vmax.f32 %v987, 0.0
        %v1020 = vmax.f32 %v988, 0.0
        %v1021 = vmax.f32 %v989, 0.0
        %v1022 = vmax.f32 %v990, 0.0
        %v1023 = vmax.f32 %v991, 0.0
        %v1024 = vmax.f32 %v992, 0.0
        %v1025 = vmax.f32 %v993, 0.0
        %v1026 = vmax.f32 %v994, 0.0
        %v1027 = vmax.f32 %v995, 0.0
        %v1028 = vmax.f32 %v996, 0.0
        %v1029 = vmax.f32 %v997, 0.0
        %v1030 = vmax.f32 %v998, 0.0
        %v1031 = vmax.f32 %v999, 0.0
        %v1032 = vmax.f32 %v1000, 0.0
        %v1033 = vmax.f32 %v1001, 0.0
        %v1034 = vmax.f32 %v1002, 0.0
        %v1035 = vmax.f32 %v1003, 0.0
        %v1036 = vmax.f32 %v1004, 0.0
        %v1037 = vmax.f32 %v1005, 0.0
        %v1038 = vmax.f32 %v1006, 0.0
        %v1039 = vmax.f32 %v1007, 0.0
        %vm1040 = vcmask 392192
        %1041 = vst.msk [vmem:[%s293] sm:$0xff] %vm1040, %v1008
        %1042 = vst.msk [vmem:[%s293 + $0x8] sm:$0xff] %vm1040, %v1009
        %1043 = vst.msk [vmem:[%s293 + $0x10] sm:$0xff] %vm1040, %v1010
        %1044 = vst.msk [vmem:[%s293 + $0x18] sm:$0xff] %vm1040, %v1011
        %1045 = vst.msk [vmem:[%s293 + $0x20] sm:$0xff] %vm1040, %v1012
        %1046 = vst.msk [vmem:[%s293 + $0x28] sm:$0xff] %vm1040, %v1013
        %1047 = vst.msk [vmem:[%s293 + $0x30] sm:$0xff] %vm1040, %v1014
        %1048 = vst.msk [vmem:[%s293 + $0x38] sm:$0xff] %vm1040, %v1015
        %1049 = vst.msk [vmem:[%s293 + $0x40] sm:$0xff] %vm1040, %v1016
        %1050 = vst.msk [vmem:[%s293 + $0x48] sm:$0xff] %vm1040, %v1017
        %1051 = vst.msk [vmem:[%s293 + $0x50] sm:$0xff] %vm1040, %v1018
        %1052 = vst.msk [vmem:[%s293 + $0x58] sm:$0xff] %vm1040, %v1019
        %1053 = vst.msk [vmem:[%s293 + $0x60] sm:$0xff] %vm1040, %v1020
        %1054 = vst.msk [vmem:[%s293 + $0x68] sm:$0xff] %vm1040, %v1021
        %1055 = vst.msk [vmem:[%s293 + $0x70] sm:$0xff] %vm1040, %v1022
        %1056 = vst.msk [vmem:[%s293 + $0x78] sm:$0xff] %vm1040, %v1023
        %1057 = vst.msk [vmem:[%s293 + $0x80] sm:$0xff] %vm1040, %v1024
        %1058 = vst.msk [vmem:[%s293 + $0x88] sm:$0xff] %vm1040, %v1025
        %1059 = vst.msk [vmem:[%s293 + $0x90] sm:$0xff] %vm1040, %v1026
        %1060 = vst.msk [vmem:[%s293 + $0x98] sm:$0xff] %vm1040, %v1027
        %1061 = vst.msk [vmem:[%s293 + $0xa0] sm:$0xff] %vm1040, %v1028
        %1062 = vst.msk [vmem:[%s293 + $0xa8] sm:$0xff] %vm1040, %v1029
        %1063 = vst.msk [vmem:[%s293 + $0xb0] sm:$0xff] %vm1040, %v1030
        %1064 = vst.msk [vmem:[%s293 + $0xb8] sm:$0xff] %vm1040, %v1031
        %1065 = vst.msk [vmem:[%s293 + $0xc0] sm:$0xff] %vm1040, %v1032
        %1066 = vst.msk [vmem:[%s293 + $0xc8] sm:$0xff] %vm1040, %v1033
        %1067 = vst.msk [vmem:[%s293 + $0xd0] sm:$0xff] %vm1040, %v1034
        %1068 = vst.msk [vmem:[%s293 + $0xd8] sm:$0xff] %vm1040, %v1035
        %1069 = vst.msk [vmem:[%s293 + $0xe0] sm:$0xff] %vm1040, %v1036
        %1070 = vst.msk [vmem:[%s293 + $0xe8] sm:$0xff] %vm1040, %v1037
        %1071 = vst.msk [vmem:[%s293 + $0xf0] sm:$0xff] %vm1040, %v1038
        %1072 = vst.msk [vmem:[%s293 + $0xf8] sm:$0xff] %vm1040, %v1039
        %s1073 = sand.u32 %s174, 1
        %s1074 = scalar_lea.sflag [#allocation3], %s1073
        %s1075 = sand.u32 %s174, 1
        %s1076 = smul.addr %s1075, 256
        %s1077 = scalar_lea.vmem [#allocation2], %s1076
        // Predicated region
        $region45: #{inception_forward.13} parent=43 // pred_check
          %p1078 = pneg %p184
        $region46: #{inception_forward.13} parent=43 // pred_check_branch
          %1080 = sbr.rel (%p1078) target = $region48
        $region47: #{inception_forward.13} parent=43 // pred_region
          %s1081 = smul.u32 32, %s20
          %s1083 = ssub.s32 4096, 4096
          %1084 = vsyncadd %s1074, %s1083
          %s1085 = smul.addr %s1081, 128
          %s1086 = scalar_lea.hbm %s6, %s1085
          %s1087 = sshll.u32 %s1077, 4
          %s1088 = int_to_ptr.vmem [resolvable:$true] %s1087
          %1093 = dma.vmem_to_hbm [thread:$0]  %s1088, 4096, %s1086, %s1074, 128, 128, 8
        $region48: #{inception_forward.13} parent=43 // pred_fallthru
          _
      $region44: #{inception_forward.13} parent=5 // pred_fallthru
        _
      %p1094 = scmp.le.s32.totalorder 2, %s15
      // Predicated region
      $region49: #{inception_forward.13} parent=5 // pred_check
        %p1095 = pneg %p1094
      $region50: #{inception_forward.13} parent=5 // pred_check_branch
        %1097 = sbr.rel (%p1095) target = $region52
      $region51: #{inception_forward.13} parent=5 // pred_region
        %s1098 = ssub.s32 %s15, 2
        // Predicated region
        $region53: #{inception_forward.13} parent=51 // pred_check
          %p1099 = pneg %p190
        $region54: #{inception_forward.13} parent=51 // pred_check_branch
          %1101 = sbr.rel (%p1099) target = $region56
        $region55: #{inception_forward.13} parent=51 // pred_region
          %s1102 = sand.u32 %s175, 1
          %s1103 = scalar_lea.sflag [#allocation3], %s1102
          %s1104 = sand.u32 %s175, 1
          %s1105 = smul.addr %s1104, 256
          %s1106 = scalar_lea.vmem [#allocation2], %s1105
          %1107 = dma.done %s1103, 4096
        $region56: #{inception_forward.13} parent=51 // pred_fallthru
          _
      $region52: #{inception_forward.13} parent=5 // pred_fallthru
        _
    $region6: #{inception_forward.13} parent=1 // loop_footer
      %s19 = sadd.s32 1, %s15
    $region7: #{inception_forward.13} parent=1 // loop_footer_branch
      %14 = sbr.rel target = $region3
    $region8: #{inception_forward.13} parent=1 // loop_exit
      _
    %1108 = vsyncpa [#allocation3], 1
    %s1109 = scalar_lea.sflag [#allocation3], 1
    %1110 = vsyncpa %s1109, 1

</llo_original>
